<compile_context>
chip_gen: v7x
topology: tpu7x:2x2x1
jax: 0.10.0
libtpu: 0.0.40
codegen_flags: <defaults>
</compile_context>

<pallas_src>
import functools
import math

import jax
import jax.numpy as jnp
from jax.experimental import pallas as pl
from jax.experimental.pallas import tpu as pltpu


# Optional explicit scoped-VMEM budget (bytes).  Leave None for the default at
# these toy shapes; for realistic model dims set e.g. ~48 MiB on v7x (64 MiB
# part) and ~96 MiB on v5e/v6e, and re-derive ff_tile/vocab_tile accordingly.
_VMEM_LIMIT_BYTES = None


def _compiler_params(dims):
    kwargs = {"dimension_semantics": dims}
    if _VMEM_LIMIT_BYTES is not None:
        kwargs["vmem_limit_bytes"] = _VMEM_LIMIT_BYTES
    return pltpu.CompilerParams(**kwargs)


# ----------------------------- in-kernel helpers -----------------------------

def _layernorm(x, gamma, beta, eps=1e-5):
    # x: (..., C), gamma/beta: (1, C)  -- matches torch.nn.LayerNorm (biased var)
    mu = jnp.mean(x, axis=-1, keepdims=True)
    var = jnp.mean((x - mu) ** 2, axis=-1, keepdims=True)
    return (x - mu) * jax.lax.rsqrt(var + eps) * gamma + beta


def _softmax(x):
    m = jnp.max(x, axis=-1, keepdims=True)
    e = jnp.exp(x - m)
    # exact normalization (approx=True would trade ~1e-4 rel. error for an EUP op)
    return e * pl.reciprocal(jnp.sum(e, axis=-1, keepdims=True), approx=False)


def _pick_tile(dim, target, align):
    """Largest multiple of `align` that divides `dim` and is <= target, else dim."""
    if dim <= target:
        return dim
    t = (target // align) * align
    while t >= align:
        if dim % t == 0:
            return t
        t -= align
    return dim


def _pick_batch_block(b, target=8):
    for d in range(min(b, target), 0, -1):
        if b % d == 0:
            return d
    return 1


# ------------------------------ Pallas kernels --------------------------------

def attn_block_kernel(x_ref, g1_ref, b1_ref, wqkv_ref, wproj_ref, bp_ref,
                      out_ref, xn_ref, *, compute_dtype):
    """y = x + MultiHeadAttention(LN1(x)); grid=(B//bblk, n_head).

    The head axis is a reduction: each step runs one head's fused [Q|K|V]
    projection, softmax attention batched over the bblk batch elements (so the
    per-head weights are DMA'd once per batch block), then accumulates that
    head's slice of the output projection into the resident output block.
    LN1(x) is computed once (h==0) into VMEM scratch and reused for all heads.
    """
    h = pl.program_id(1)
    bblk, T, C = x_ref.shape

    @pl.when(h == 0)
    def _init():
        x = x_ref[...]                                   # (bblk, T, C) f32
        out_ref[...] = x + bp_ref[...]                   # residual + proj bias, once
        xn_ref[...] = _layernorm(x, g1_ref[...], b1_ref[...]).astype(compute_dtype)

    xn2 = xn_ref[...].reshape(bblk * T, C)               # flat rows -> MXU M = bblk*T
    # fused [Q | K | V] projection for this head: (bblk*T, C) @ (C, 3C)
    qkv = jnp.dot(xn2, wqkv_ref[0], preferred_element_type=jnp.float32)
    scale = 1.0 / math.sqrt(C)                           # 1/sqrt(n_embd), per spec
    q = (qkv[:, :C] * scale).astype(compute_dtype).reshape(bblk, T, C)
    k = qkv[:, C:2 * C].astype(compute_dtype).reshape(bblk, T, C)
    v = qkv[:, 2 * C:].astype(compute_dtype).reshape(bblk, T, C)

    # batched scores; contraction on both operands' LAST dim -> no k transpose.
    # NOTE: no causal mask, matching the reference PyTorch module.
    # TODO(synk): flash-style query/KV tiling (online softmax) for long T so the
    # (bblk, T, T) score block stays bounded within v7x's 64 MiB VMEM.
    att = _softmax(jnp.einsum("bqd,bkd->bqk", q, k,
                              preferred_element_type=jnp.float32))
    head = jnp.einsum("bqk,bkd->bqd", att.astype(compute_dtype), v,
                      preferred_element_type=jnp.float32)

    # accumulate this head's slice of the output projection (replaces concat)
    proj = jnp.dot(head.reshape(bblk * T, C).astype(compute_dtype), wproj_ref[0],
                   preferred_element_type=jnp.float32)
    out_ref[...] += proj.reshape(bblk, T, C)


def ffn_block_kernel(x_ref, g2_ref, b2_ref, wf1_ref, bf1_ref, wf2_ref, bf2_ref,
                     out_ref, xn_ref, *, compute_dtype):
    """y = x + FFN(LN2(x)); x flattened to (M, C); grid=(M//tm, 4C//th).

    The 4C hidden dim is the reduction axis: relu(xn @ Wf1[:, tile]) @ Wf2[tile, :]
    partials accumulate into the resident output block.  LN2 is computed once
    per row tile (j==0) into VMEM scratch and reused for all hidden tiles.
    """
    j = pl.program_id(1)

    @pl.when(j == 0)
    def _init():
        x = x_ref[...]                                   # (tm, C) f32
        out_ref[...] = x + bf2_ref[...]                  # residual + 2nd bias, once
        xn_ref[...] = _layernorm(x, g2_ref[...], b2_ref[...]).astype(compute_dtype)

    h1 = (jnp.dot(xn_ref[...], wf1_ref[...], preferred_element_type=jnp.float32)
          + bf1_ref[...])
    h1 = jnp.maximum(h1, 0.0).astype(compute_dtype)
    out_ref[...] += jnp.dot(h1, wf2_ref[...], preferred_element_type=jnp.float32)


def lm_head_kernel(x_ref, gf_ref, bf_ref, wlm_ref, blm_ref, out_ref, xn_ref, *,
                   compute_dtype):
    """logits tile = LN_f(x tile) @ Wlm[:, vocab tile] + b; grid=(M//tm, V//tv).

    LN_f is computed once per row tile (first vocab tile) into VMEM scratch and
    reused for the remaining V/tv - 1 vocab tiles (biggest LN-redundancy fix).
    """
    j = pl.program_id(1)

    @pl.when(j == 0)
    def _init():
        xn_ref[...] = _layernorm(x_ref[...], gf_ref[...],
                                 bf_ref[...]).astype(compute_dtype)

    out_ref[...] = (jnp.dot(xn_ref[...], wlm_ref[...],
                            preferred_element_type=jnp.float32)
                    + blm_ref[...]).astype(out_ref.dtype)


# ------------------------------ wrappers --------------------------------------

def apply_attn_block(x, p, compute_dtype, *, batch_block=8):
    B, T, C = x.shape
    H = p["wqkv"].shape[0]
    bblk = _pick_batch_block(B, batch_block)
    kernel = functools.partial(attn_block_kernel, compute_dtype=compute_dtype)
    return pl.pallas_call(
        kernel,
        out_shape=jax.ShapeDtypeStruct((B, T, C), jnp.float32),
        grid=(B // bblk, H),
        in_specs=[
            pl.BlockSpec((bblk, T, C), lambda b, h: (b, 0, 0)),     # x
            pl.BlockSpec((1, C), lambda b, h: (0, 0)),              # ln1 gamma
            pl.BlockSpec((1, C), lambda b, h: (0, 0)),              # ln1 beta
            pl.BlockSpec((1, C, 3 * C), lambda b, h: (h, 0, 0)),    # wqkv (per head)
            pl.BlockSpec((1, C, C), lambda b, h: (h, 0, 0)),        # wproj (per head)
            pl.BlockSpec((1, C), lambda b, h: (0, 0)),              # proj bias
        ],
        out_specs=pl.BlockSpec((bblk, T, C), lambda b, h: (b, 0, 0)),
        scratch_shapes=[pltpu.VMEM((bblk, T, C), compute_dtype)],   # hoisted LN1(x)
        compiler_params=_compiler_params(("parallel", "arbitrary")),
    )(x, p["g1"], p["b1"], p["wqkv"], p["wproj"], p["bp"])


def apply_ffn_block(x, p, compute_dtype, *, t_tile=512, ff_tile=1024):
    B, T, C = x.shape
    M = B * T
    H4 = p["wf1"].shape[-1]
    tm = _pick_tile(M, t_tile, 8)
    th = _pick_tile(H4, ff_tile, 128)
    x2 = x.reshape(M, C)                                  # flatten (B,T) -> M rows
    kernel = functools.partial(ffn_block_kernel, compute_dtype=compute_dtype)
    out = pl.pallas_call(
        kernel,
        out_shape=jax.ShapeDtypeStruct((M, C), jnp.float32),
        grid=(M // tm, H4 // th),
        in_specs=[
            pl.BlockSpec((tm, C), lambda i, j: (i, 0)),            # x rows
            pl.BlockSpec((1, C), lambda i, j: (0, 0)),             # ln2 gamma
            pl.BlockSpec((1, C), lambda i, j: (0, 0)),             # ln2 beta
            pl.BlockSpec((C, th), lambda i, j: (0, j)),            # wf1 tile
            pl.BlockSpec((1, th), lambda i, j: (0, j)),            # bf1 tile
            pl.BlockSpec((th, C), lambda i, j: (j, 0)),            # wf2 tile
            pl.BlockSpec((1, C), lambda i, j: (0, 0)),             # bf2
        ],
        out_specs=pl.BlockSpec((tm, C), lambda i, j: (i, 0)),
        scratch_shapes=[pltpu.VMEM((tm, C), compute_dtype)],       # hoisted LN2(x)
        compiler_params=_compiler_params(("parallel", "arbitrary")),
    )(x2, p["g2"], p["b2"], p["wf1"], p["bf1"], p["wf2"], p["bf2"])
    return out.reshape(B, T, C)


def apply_lm_head(x, params, compute_dtype, *, t_tile=512, vocab_tile=1024,
                  logits_dtype=jnp.float32):
    B, T, C = x.shape
    M = B * T
    V = params["wlm"].shape[-1]
    tm = _pick_tile(M, t_tile, 8)
    tv = _pick_tile(V, vocab_tile, 128)
    x2 = x.reshape(M, C)
    kernel = functools.partial(lm_head_kernel, compute_dtype=compute_dtype)
    out = pl.pallas_call(
        kernel,
        out_shape=jax.ShapeDtypeStruct((M, V), logits_dtype),
        grid=(M // tm, V // tv),
        in_specs=[
            pl.BlockSpec((tm, C), lambda i, j: (i, 0)),            # x rows
            pl.BlockSpec((1, C), lambda i, j: (0, 0)),             # ln_f gamma
            pl.BlockSpec((1, C), lambda i, j: (0, 0)),             # ln_f beta
            pl.BlockSpec((C, tv), lambda i, j: (0, j)),            # wlm vocab tile
            pl.BlockSpec((1, tv), lambda i, j: (0, j)),            # blm vocab tile
        ],
        out_specs=pl.BlockSpec((tm, tv), lambda i, j: (i, j)),
        scratch_shapes=[pltpu.VMEM((tm, C), compute_dtype)],       # hoisted LN_f(x)
        compiler_params=_compiler_params(("parallel", "arbitrary")),
    )(x2, params["gf"], params["bf"], params["wlm"], params["blm"])
    return out.reshape(B, T, V)


def prepare_weights(params, compute_dtype):
    """Cast matmul weights to the MXU compute dtype ONCE (persistent copies).

    LN params, biases and embedding tables stay f32 (LN/softmax/accum are f32).
    Avoids a per-forward astype (= extra HBM pass over all weights per call).
    """
    out = dict(params)
    out["wlm"] = params["wlm"].astype(compute_dtype)
    out["blocks"] = [
        {**p,
         "wqkv": p["wqkv"].astype(compute_dtype),
         "wproj": p["wproj"].astype(compute_dtype),
         "wf1": p["wf1"].astype(compute_dtype),
         "wf2": p["wf2"].astype(compute_dtype)}
        for p in params["blocks"]
    ]
    return out


def transformer_decoder_forward(idx, params, *, t_tile=512, ff_tile=1024,
                                vocab_tile=1024, batch_block=8,
                                logits_dtype=jnp.float32):
    """idx: (B, T) int32 token ids. Returns (logits, None) (targets=None path)."""
    B, T = idx.shape
    compute_dtype = params["wlm"].dtype            # fixed once by prepare_weights()
    tok_emb = jnp.take(params["tok_table"], idx, axis=0)        # (B, T, C) [glue]
    pos_emb = params["pos_table"][:T]                           # (T, C)    [glue]
    x = (tok_emb + pos_emb[None, :, :]).astype(jnp.float32)
    for lp in params["blocks"]:
        x = apply_attn_block(x, lp, compute_dtype, batch_block=batch_block)
        x = apply_ffn_block(x, lp, compute_dtype, t_tile=t_tile, ff_tile=ff_tile)
    logits = apply_lm_head(x, params, compute_dtype, t_tile=t_tile,
                           vocab_tile=vocab_tile, logits_dtype=logits_dtype)
    return logits, None


# ------------------------------ parameter init --------------------------------

def init_params(key, vocab_size, n_embd, n_head, n_layer, block_size):
    C = n_embd
    keys = jax.random.split(key, 3 + n_layer)
    std = 0.02

    def nrm(k, shape):
        return (std * jax.random.normal(k, shape)).astype(jnp.float32)

    params = {
        "tok_table": nrm(keys[0], (vocab_size, C)),
        "pos_table": nrm(keys[1], (block_size, C)),
        "gf": jnp.ones((1, C), jnp.float32),
        "bf": jnp.zeros((1, C), jnp.float32),
        "wlm": nrm(keys[2], (C, vocab_size)),
        "blm": jnp.zeros((1, vocab_size), jnp.float32),
        "blocks": [],
    }
    for l in range(n_layer):
        lk = jax.random.split(keys[3 + l], 4)
        params["blocks"].append({
            # fused per-head [Q | K | V] weights: (H, C, 3C)
            "wqkv": nrm(lk[0], (n_head, C, 3 * C)),
            # output projection split per head: (H, C, C) == reshape of (H*C, C)
            "wproj": nrm(lk[1], (n_head, C, C)),
            "bp": jnp.zeros((1, C), jnp.float32),
            "g1": jnp.ones((1, C), jnp.float32),
            "b1": jnp.zeros((1, C), jnp.float32),
            "g2": jnp.ones((1, C), jnp.float32),
            "b2": jnp.zeros((1, C), jnp.float32),
            "wf1": nrm(lk[2], (C, 4 * C)),
            "bf1": jnp.zeros((1, 4 * C), jnp.float32),
            "wf2": nrm(lk[3], (4 * C, C)),
            "bf2": jnp.zeros((1, C), jnp.float32),
        })
    return params


# ------------------------------ pure-JAX reference -----------------------------

def _ref_ln(x, g, b, eps=1e-5):
    mu = x.mean(-1, keepdims=True)
    var = ((x - mu) ** 2).mean(-1, keepdims=True)
    return (x - mu) / jnp.sqrt(var + eps) * g + b


def reference_forward(idx, params):
    B, T = idx.shape
    x = jnp.take(params["tok_table"], idx, axis=0) + params["pos_table"][:T][None]
    C = x.shape[-1]
    for p in params["blocks"]:
        H = p["wqkv"].shape[0]
        xn = _ref_ln(x, p["g1"], p["b1"])
        heads = []
        for h in range(H):
            w = p["wqkv"][h]
            q = xn @ w[:, :C]
            k = xn @ w[:, C:2 * C]
            v = xn @ w[:, 2 * C:]
            att = jax.nn.softmax(q @ jnp.swapaxes(k, -1, -2) / math.sqrt(C), axis=-1)
            heads.append(att @ v)
        cat = jnp.concatenate(heads, -1)
        wp = p["wproj"].reshape(H * C, C)
        x = x + cat @ wp + p["bp"]
        xn2 = _ref_ln(x, p["g2"], p["b2"])
        x = x + jnp.maximum(xn2 @ p["wf1"] + p["bf1"], 0.0) @ p["wf2"] + p["bf2"]
    x = _ref_ln(x, params["gf"], params["bf"])
    return x @ params["wlm"] + params["blm"]


# ----------------------------------- main --------------------------------------

if __name__ == "__main__":
    # Small but lane-aligned config: C, 3C, 4C, vocab are multiples of 128 where
    # it matters for TPU store efficiency; T is a multiple of 8.
    vocab_size, n_embd, n_head, n_layer, block_size = 256, 128, 2, 2, 32
    B, T = 2, 16

    key = jax.random.PRNGKey(0)
    pkey, ikey = jax.random.split(key)
    params = init_params(pkey, vocab_size, n_embd, n_head, n_layer, block_size)
    idx = jax.random.randint(ikey, (B, T), 0, vocab_size, dtype=jnp.int32)

    ref = reference_forward(idx, params)

    # Small tile targets so the reduction / vocab / row grid axes actually take
    # multiple steps at this toy size (exercising the LN-scratch reuse path).
    fwd = jax.jit(functools.partial(
        transformer_decoder_forward, t_tile=8, ff_tile=256, vocab_tile=128,
        batch_block=2))

    # f32 MXU path (weight "cast" is a no-op copy, done once).
    params_f32 = prepare_weights(params, jnp.float32)
    logits, loss = fwd(idx, params_f32)
    logits = jax.block_until_ready(logits)
    assert logits.shape == (B, T, vocab_size)
    assert loss is None
    err = float(jnp.max(jnp.abs(logits - ref)))
    assert err < 2e-3, f"f32 path mismatch: {err}"

    # bf16 MXU-feed path (v5e/v6e/v7x): weights cast ONCE up front; LN/softmax
    # and all accumulation stay f32 inside the kernels.
    params_bf16 = prepare_weights(params, jnp.bfloat16)
    logits_bf16, _ = fwd(idx, params_bf16)
    logits_bf16 = jax.block_until_ready(logits_bf16)
    err_bf16 = float(jnp.max(jnp.abs(logits_bf16 - ref)))
    assert err_bf16 < 5e-2, f"bf16 path mismatch: {err_bf16}"

    print("KERNEL_OK")
</pallas_src>

<mosaic_0001>
module attributes {stable_mosaic.version = 11 : i64} {
  func.func @attn_block_kernel(%arg0: i32, %arg1: i32, %arg2: memref<2x16x128xf32, #tpu.memory_space<vmem>>, %arg3: memref<1x128xf32, #tpu.memory_space<vmem>>, %arg4: memref<1x128xf32, #tpu.memory_space<vmem>>, %arg5: memref<1x128x384xf32, #tpu.memory_space<vmem>>, %arg6: memref<1x128x128xf32, #tpu.memory_space<vmem>>, %arg7: memref<1x128xf32, #tpu.memory_space<vmem>>, %arg8: memref<2x16x128xf32, #tpu.memory_space<vmem>>, %arg9: memref<2x16x128xf32, #tpu.memory_space<vmem>>) attributes {dimension_semantics = [#tpu.dimension_semantics<parallel>, #tpu.dimension_semantics<arbitrary>], iteration_bounds = array<i64: 1, 2>, scalar_prefetch = 0 : i64, scratch_operands = 1 : i64, tpu.core_type = #tpu.core_type<tc>, window_params = [{transform_indices = @transform_0, window_bounds = array<i64: 2, 16, 128>}, {pipeline_mode = #tpu.pipeline_mode<synchronous>, transform_indices = @transform_1, window_bounds = array<i64: 1, 128>}, {pipeline_mode = #tpu.pipeline_mode<synchronous>, transform_indices = @transform_2, window_bounds = array<i64: 1, 128>}, {transform_indices = @transform_3, window_bounds = array<i64: 1, 128, 384>}, {transform_indices = @transform_4, window_bounds = array<i64: 1, 128, 128>}, {pipeline_mode = #tpu.pipeline_mode<synchronous>, transform_indices = @transform_5, window_bounds = array<i64: 1, 128>}, {transform_indices = @transform_6, window_bounds = array<i64: 2, 16, 128>}]} {
    %c0_i32 = arith.constant 0 : i32
    %0 = arith.cmpi eq, %arg1, %c0_i32 : i32
    %1 = arith.extui %0 : i1 to i32
    %c0_i32_0 = arith.constant 0 : i32
    %2 = arith.cmpi ne, %1, %c0_i32_0 : i32
    scf.if %2 {
      %c0_21 = arith.constant 0 : index
      %c0_22 = arith.constant 0 : index
      %c0_23 = arith.constant 0 : index
      %36 = vector.load %arg2[%c0_21, %c0_22, %c0_23] : memref<2x16x128xf32, #tpu.memory_space<vmem>>, vector<2x16x128xf32>
      %c0_24 = arith.constant 0 : index
      %c0_25 = arith.constant 0 : index
      %37 = vector.load %arg7[%c0_24, %c0_25] : memref<1x128xf32, #tpu.memory_space<vmem>>, vector<1x128xf32>
      %38 = vector.shape_cast %37 : vector<1x128xf32> to vector<1x1x128xf32>
      %39 = vector.broadcast %38 : vector<1x1x128xf32> to vector<2x16x128xf32>
      %40 = arith.addf %36, %39 : vector<2x16x128xf32>
      %c0_26 = arith.constant 0 : index
      %c0_27 = arith.constant 0 : index
      %c0_28 = arith.constant 0 : index
      %41 = vector.load %arg8[%c0_26, %c0_27, %c0_28] : memref<2x16x128xf32, #tpu.memory_space<vmem>>, vector<2x16x128xf32>
      tpu.vector_store %arg8[%c0_26, %c0_27, %c0_28], %40 {strides = array<i32>} : memref<2x16x128xf32, #tpu.memory_space<vmem>>, vector<2x16x128xf32>,
      %c0_29 = arith.constant 0 : index
      %c0_30 = arith.constant 0 : index
      %42 = vector.load %arg3[%c0_29, %c0_30] : memref<1x128xf32, #tpu.memory_space<vmem>>, vector<1x128xf32>
      %c0_31 = arith.constant 0 : index
      %c0_32 = arith.constant 0 : index
      %43 = vector.load %arg4[%c0_31, %c0_32] : memref<1x128xf32, #tpu.memory_space<vmem>>, vector<1x128xf32>
      %cst_33 = arith.constant dense<0.000000e+00> : vector<2x16xf32>
      %44 = vector.multi_reduction <add>, %36, %cst_33 [2] : vector<2x16x128xf32> to vector<2x16xf32>
      %45 = vector.shape_cast %44 : vector<2x16xf32> to vector<2x16x1xf32>
      %cst_34 = arith.constant 1.280000e+02 : f32
      %46 = vector.broadcast %cst_34 : f32 to vector<2x16x1xf32>
      %47 = arith.divf %45, %46 : vector<2x16x1xf32>
      %48 = vector.broadcast %47 : vector<2x16x1xf32> to vector<2x16x128xf32>
      %49 = arith.subf %36, %48 : vector<2x16x128xf32>
      %50 = arith.mulf %49, %49 : vector<2x16x128xf32>
      %cst_35 = arith.constant dense<0.000000e+00> : vector<2x16xf32>
      %51 = vector.multi_reduction <add>, %50, %cst_35 [2] : vector<2x16x128xf32> to vector<2x16xf32>
      %52 = vector.shape_cast %51 : vector<2x16xf32> to vector<2x16x1xf32>
      %cst_36 = arith.constant 1.280000e+02 : f32
      %53 = vector.broadcast %cst_36 : f32 to vector<2x16x1xf32>
      %54 = arith.divf %52, %53 : vector<2x16x1xf32>
      %55 = vector.broadcast %47 : vector<2x16x1xf32> to vector<2x16x128xf32>
      %56 = arith.subf %36, %55 : vector<2x16x128xf32>
      %cst_37 = arith.constant 9.99999974E-6 : f32
      %57 = vector.broadcast %cst_37 : f32 to vector<2x16x1xf32>
      %58 = arith.addf %54, %57 : vector<2x16x1xf32>
      %59 = math.rsqrt %58 : vector<2x16x1xf32>
      %60 = vector.broadcast %59 : vector<2x16x1xf32> to vector<2x16x128xf32>
      %61 = arith.mulf %56, %60 : vector<2x16x128xf32>
      %62 = vector.shape_cast %42 : vector<1x128xf32> to vector<1x1x128xf32>
      %63 = vector.broadcast %62 : vector<1x1x128xf32> to vector<2x16x128xf32>
      %64 = arith.mulf %61, %63 : vector<2x16x128xf32>
      %65 = vector.shape_cast %43 : vector<1x128xf32> to vector<1x1x128xf32>
      %66 = vector.broadcast %65 : vector<1x1x128xf32> to vector<2x16x128xf32>
      %67 = arith.addf %64, %66 : vector<2x16x128xf32>
      %c0_38 = arith.constant 0 : index
      %c0_39 = arith.constant 0 : index
      %c0_40 = arith.constant 0 : index
      %68 = vector.load %arg9[%c0_38, %c0_39, %c0_40] : memref<2x16x128xf32, #tpu.memory_space<vmem>>, vector<2x16x128xf32>
      tpu.vector_store %arg9[%c0_38, %c0_39, %c0_40], %67 {strides = array<i32>} : memref<2x16x128xf32, #tpu.memory_space<vmem>>, vector<2x16x128xf32>,
    } else {
    }
    %c0 = arith.constant 0 : index
    %c0_1 = arith.constant 0 : index
    %c0_2 = arith.constant 0 : index
    %3 = vector.load %arg9[%c0, %c0_1, %c0_2] : memref<2x16x128xf32, #tpu.memory_space<vmem>>, vector<2x16x128xf32>
    %4 = vector.shape_cast %3 : vector<2x16x128xf32> to vector<32x128xf32>
    %c0_3 = arith.constant 0 : index
    %c0_4 = arith.constant 0 : index
    %c0_5 = arith.constant 0 : index
    %5 = vector.load %arg5[%c0_3, %c0_4, %c0_5] : memref<1x128x384xf32, #tpu.memory_space<vmem>>, vector<1x128x384xf32>
    %6 = vector.shape_cast %5 : vector<1x128x384xf32> to vector<128x384xf32>
    %cst = arith.constant dense<0.000000e+00> : vector<32x384xf32>
    %7 = tpu.matmul %4, %6, %cst {dimension_numbers = #tpu.dot_dimension_numbers<[1], [0], [0], [1], [0, 0, 1, 1], [], []>} : vector<32x128xf32>, vector<128x384xf32>, vector<32x384xf32> -> vector<32x384xf32>
    %8 = vector.extract_strided_slice %7 {offsets = [0, 0], sizes = [32, 128], strides = [1, 1]} : vector<32x384xf32> to vector<32x128xf32>
    %cst_6 = arith.constant 0.0883883461 : f32
    %9 = vector.broadcast %cst_6 : f32 to vector<32x128xf32>
    %10 = arith.mulf %8, %9 : vector<32x128xf32>
    %11 = vector.shape_cast %10 : vector<32x128xf32> to vector<2x16x128xf32>
    %12 = vector.extract_strided_slice %7 {offsets = [0, 128], sizes = [32, 128], strides = [1, 1]} : vector<32x384xf32> to vector<32x128xf32>
    %13 = vector.shape_cast %12 : vector<32x128xf32> to vector<2x16x128xf32>
    %14 = vector.extract_strided_slice %7 {offsets = [0, 256], sizes = [32, 128], strides = [1, 1]} : vector<32x384xf32> to vector<32x128xf32>
    %15 = vector.shape_cast %14 : vector<32x128xf32> to vector<2x16x128xf32>
    "tpu.trace_start"() <{level = 10 : i32, message = "bqd,bkd->bqk"}> : () -> ()
    %cst_7 = arith.constant dense<0.000000e+00> : vector<2x16x16xf32>
    %16 = tpu.matmul %11, %13, %cst_7 {dimension_numbers = #tpu.dot_dimension_numbers<[2], [2], [1], [1], [0, 0, 0, 1, 1, 1], [0], [0]>} : vector<2x16x128xf32>, vector<2x16x128xf32>, vector<2x16x16xf32> -> vector<2x16x16xf32>
    "tpu.trace_stop"() : () -> ()
    %cst_8 = arith.constant dense<0xFF800000> : vector<2x16xf32>
    %17 = vector.multi_reduction <maximumf>, %16, %cst_8 [2] : vector<2x16x16xf32> to vector<2x16xf32>
    %18 = vector.shape_cast %17 : vector<2x16xf32> to vector<2x16x1xf32>
    %19 = vector.broadcast %18 : vector<2x16x1xf32> to vector<2x16x16xf32>
    %20 = arith.subf %16, %19 : vector<2x16x16xf32>
    %21 = math.exp %20 : vector<2x16x16xf32>
    %cst_9 = arith.constant dense<0.000000e+00> : vector<2x16xf32>
    %22 = vector.multi_reduction <add>, %21, %cst_9 [2] : vector<2x16x16xf32> to vector<2x16xf32>
    %23 = vector.shape_cast %22 : vector<2x16xf32> to vector<2x16x1xf32>
    %24 = tpu.reciprocal %23 : vector<2x16x1xf32> -> vector<2x16x1xf32>
    %25 = vector.broadcast %24 : vector<2x16x1xf32> to vector<2x16x16xf32>
    %26 = arith.mulf %21, %25 : vector<2x16x16xf32>
    "tpu.trace_start"() <{level = 10 : i32, message = "bqk,bkd->bqd"}> : () -> ()
    %cst_10 = arith.constant dense<0.000000e+00> : vector<2x16x128xf32>
    %27 = tpu.matmul %26, %15, %cst_10 {dimension_numbers = #tpu.dot_dimension_numbers<[2], [1], [1], [2], [0, 0, 0, 1, 1, 2], [0], [0]>} : vector<2x16x16xf32>, vector<2x16x128xf32>, vector<2x16x128xf32> -> vector<2x16x128xf32>
    "tpu.trace_stop"() : () -> ()
    %28 = vector.shape_cast %27 : vector<2x16x128xf32> to vector<32x128xf32>
    %c0_11 = arith.constant 0 : index
    %c0_12 = arith.constant 0 : index
    %c0_13 = arith.constant 0 : index
    %29 = vector.load %arg6[%c0_11, %c0_12, %c0_13] : memref<1x128x128xf32, #tpu.memory_space<vmem>>, vector<1x128x128xf32>
    %30 = vector.shape_cast %29 : vector<1x128x128xf32> to vector<128x128xf32>
    %cst_14 = arith.constant dense<0.000000e+00> : vector<32x128xf32>
    %31 = tpu.matmul %28, %30, %cst_14 {dimension_numbers = #tpu.dot_dimension_numbers<[1], [0], [0], [1], [0, 0, 1, 1], [], []>} : vector<32x128xf32>, vector<128x128xf32>, vector<32x128xf32> -> vector<32x128xf32>
    %c0_15 = arith.constant 0 : index
    %c0_16 = arith.constant 0 : index
    %c0_17 = arith.constant 0 : index
    %32 = vector.load %arg8[%c0_15, %c0_16, %c0_17] : memref<2x16x128xf32, #tpu.memory_space<vmem>>, vector<2x16x128xf32>
    %33 = vector.shape_cast %31 : vector<32x128xf32> to vector<2x16x128xf32>
    %34 = arith.addf %32, %33 : vector<2x16x128xf32>
    %c0_18 = arith.constant 0 : index
    %c0_19 = arith.constant 0 : index
    %c0_20 = arith.constant 0 : index
    %35 = vector.load %arg8[%c0_18, %c0_19, %c0_20] : memref<2x16x128xf32, #tpu.memory_space<vmem>>, vector<2x16x128xf32>
    tpu.vector_store %arg8[%c0_18, %c0_19, %c0_20], %34 {strides = array<i32>} : memref<2x16x128xf32, #tpu.memory_space<vmem>>, vector<2x16x128xf32>,
    return
  }
  func.func @transform_0(%arg0: i32, %arg1: i32) -> (i32, i32, i32) {
    %c0_i32 = arith.constant 0 : i32
    %c0_i32_0 = arith.constant 0 : i32
    %c0_i32_1 = arith.constant 0 : i32
    return %arg0, %c0_i32, %c0_i32_0 : i32, i32, i32
  }
  func.func @transform_1(%arg0: i32, %arg1: i32) -> (i32, i32) {
    %c0_i32 = arith.constant 0 : i32
    %c0_i32_0 = arith.constant 0 : i32
    %c0_i32_1 = arith.constant 0 : i32
    return %c0_i32, %c0_i32_0 : i32, i32
  }
  func.func @transform_2(%arg0: i32, %arg1: i32) -> (i32, i32) {
    %c0_i32 = arith.constant 0 : i32
    %c0_i32_0 = arith.constant 0 : i32
    %c0_i32_1 = arith.constant 0 : i32
    return %c0_i32, %c0_i32_0 : i32, i32
  }
  func.func @transform_3(%arg0: i32, %arg1: i32) -> (i32, i32, i32) {
    %c0_i32 = arith.constant 0 : i32
    %c0_i32_0 = arith.constant 0 : i32
    %c0_i32_1 = arith.constant 0 : i32
    return %arg1, %c0_i32, %c0_i32_0 : i32, i32, i32
  }
  func.func @transform_4(%arg0: i32, %arg1: i32) -> (i32, i32, i32) {
    %c0_i32 = arith.constant 0 : i32
    %c0_i32_0 = arith.constant 0 : i32
    %c0_i32_1 = arith.constant 0 : i32
    return %arg1, %c0_i32, %c0_i32_0 : i32, i32, i32
  }
  func.func @transform_5(%arg0: i32, %arg1: i32) -> (i32, i32) {
    %c0_i32 = arith.constant 0 : i32
    %c0_i32_0 = arith.constant 0 : i32
    %c0_i32_1 = arith.constant 0 : i32
    return %c0_i32, %c0_i32_0 : i32, i32
  }
  func.func @transform_6(%arg0: i32, %arg1: i32) -> (i32, i32, i32) {
    %c0_i32 = arith.constant 0 : i32
    %c0_i32_0 = arith.constant 0 : i32
    %c0_i32_1 = arith.constant 0 : i32
    return %arg0, %c0_i32, %c0_i32_0 : i32, i32, i32
  }
}

module attributes {stable_mosaic.version = 11 : i64} {
  func.func @attn_block_kernel(%arg0: i32, %arg1: i32, %arg2: memref<2x16x128xf32, #tpu.memory_space<vmem>>, %arg3: memref<1x128xf32, #tpu.memory_space<vmem>>, %arg4: memref<1x128xf32, #tpu.memory_space<vmem>>, %arg5: memref<1x128x384xf32, #tpu.memory_space<vmem>>, %arg6: memref<1x128x128xf32, #tpu.memory_space<vmem>>, %arg7: memref<1x128xf32, #tpu.memory_space<vmem>>, %arg8: memref<2x16x128xf32, #tpu.memory_space<vmem>>, %arg9: memref<2x16x128xf32, #tpu.memory_space<vmem>>) attributes {dimension_semantics = [#tpu.dimension_semantics<parallel>, #tpu.dimension_semantics<arbitrary>], iteration_bounds = array<i64: 1, 2>, scalar_prefetch = 0 : i64, scratch_operands = 1 : i64, tpu.core_type = #tpu.core_type<tc>, window_params = [{transform_indices = @transform_0, window_bounds = array<i64: 2, 16, 128>}, {pipeline_mode = #tpu.pipeline_mode<synchronous>, transform_indices = @transform_1, window_bounds = array<i64: 1, 128>}, {pipeline_mode = #tpu.pipeline_mode<synchronous>, transform_indices = @transform_2, window_bounds = array<i64: 1, 128>}, {transform_indices = @transform_3, window_bounds = array<i64: 1, 128, 384>}, {transform_indices = @transform_4, window_bounds = array<i64: 1, 128, 128>}, {pipeline_mode = #tpu.pipeline_mode<synchronous>, transform_indices = @transform_5, window_bounds = array<i64: 1, 128>}, {transform_indices = @transform_6, window_bounds = array<i64: 2, 16, 128>}]} {
    %c0_i32 = arith.constant 0 : i32
    %0 = arith.cmpi eq, %arg1, %c0_i32 : i32
    %1 = arith.extui %0 : i1 to i32
    %c0_i32_0 = arith.constant 0 : i32
    %2 = arith.cmpi ne, %1, %c0_i32_0 : i32
    scf.if %2 {
      %c0_21 = arith.constant 0 : index
      %c0_22 = arith.constant 0 : index
      %c0_23 = arith.constant 0 : index
      %36 = vector.load %arg2[%c0_21, %c0_22, %c0_23] : memref<2x16x128xf32, #tpu.memory_space<vmem>>, vector<2x16x128xf32>
      %c0_24 = arith.constant 0 : index
      %c0_25 = arith.constant 0 : index
      %37 = vector.load %arg7[%c0_24, %c0_25] : memref<1x128xf32, #tpu.memory_space<vmem>>, vector<1x128xf32>
      %38 = vector.shape_cast %37 : vector<1x128xf32> to vector<1x1x128xf32>
      %39 = vector.broadcast %38 : vector<1x1x128xf32> to vector<2x16x128xf32>
      %40 = arith.addf %36, %39 : vector<2x16x128xf32>
      %c0_26 = arith.constant 0 : index
      %c0_27 = arith.constant 0 : index
      %c0_28 = arith.constant 0 : index
      %41 = vector.load %arg8[%c0_26, %c0_27, %c0_28] : memref<2x16x128xf32, #tpu.memory_space<vmem>>, vector<2x16x128xf32>
      tpu.vector_store %arg8[%c0_26, %c0_27, %c0_28], %40 {strides = array<i32>} : memref<2x16x128xf32, #tpu.memory_space<vmem>>, vector<2x16x128xf32>,
      %c0_29 = arith.constant 0 : index
      %c0_30 = arith.constant 0 : index
      %42 = vector.load %arg3[%c0_29, %c0_30] : memref<1x128xf32, #tpu.memory_space<vmem>>, vector<1x128xf32>
      %c0_31 = arith.constant 0 : index
      %c0_32 = arith.constant 0 : index
      %43 = vector.load %arg4[%c0_31, %c0_32] : memref<1x128xf32, #tpu.memory_space<vmem>>, vector<1x128xf32>
      %cst_33 = arith.constant dense<0.000000e+00> : vector<2x16xf32>
      %44 = vector.multi_reduction <add>, %36, %cst_33 [2] : vector<2x16x128xf32> to vector<2x16xf32>
      %45 = vector.shape_cast %44 : vector<2x16xf32> to vector<2x16x1xf32>
      %cst_34 = arith.constant 1.280000e+02 : f32
      %46 = vector.broadcast %cst_34 : f32 to vector<2x16x1xf32>
      %47 = arith.divf %45, %46 : vector<2x16x1xf32>
      %48 = vector.broadcast %47 : vector<2x16x1xf32> to vector<2x16x128xf32>
      %49 = arith.subf %36, %48 : vector<2x16x128xf32>
      %50 = arith.mulf %49, %49 : vector<2x16x128xf32>
      %cst_35 = arith.constant dense<0.000000e+00> : vector<2x16xf32>
      %51 = vector.multi_reduction <add>, %50, %cst_35 [2] : vector<2x16x128xf32> to vector<2x16xf32>
      %52 = vector.shape_cast %51 : vector<2x16xf32> to vector<2x16x1xf32>
      %cst_36 = arith.constant 1.280000e+02 : f32
      %53 = vector.broadcast %cst_36 : f32 to vector<2x16x1xf32>
      %54 = arith.divf %52, %53 : vector<2x16x1xf32>
      %55 = vector.broadcast %47 : vector<2x16x1xf32> to vector<2x16x128xf32>
      %56 = arith.subf %36, %55 : vector<2x16x128xf32>
      %cst_37 = arith.constant 9.99999974E-6 : f32
      %57 = vector.broadcast %cst_37 : f32 to vector<2x16x1xf32>
      %58 = arith.addf %54, %57 : vector<2x16x1xf32>
      %59 = math.rsqrt %58 : vector<2x16x1xf32>
      %60 = vector.broadcast %59 : vector<2x16x1xf32> to vector<2x16x128xf32>
      %61 = arith.mulf %56, %60 : vector<2x16x128xf32>
      %62 = vector.shape_cast %42 : vector<1x128xf32> to vector<1x1x128xf32>
      %63 = vector.broadcast %62 : vector<1x1x128xf32> to vector<2x16x128xf32>
      %64 = arith.mulf %61, %63 : vector<2x16x128xf32>
      %65 = vector.shape_cast %43 : vector<1x128xf32> to vector<1x1x128xf32>
      %66 = vector.broadcast %65 : vector<1x1x128xf32> to vector<2x16x128xf32>
      %67 = arith.addf %64, %66 : vector<2x16x128xf32>
      %c0_38 = arith.constant 0 : index
      %c0_39 = arith.constant 0 : index
      %c0_40 = arith.constant 0 : index
      %68 = vector.load %arg9[%c0_38, %c0_39, %c0_40] : memref<2x16x128xf32, #tpu.memory_space<vmem>>, vector<2x16x128xf32>
      tpu.vector_store %arg9[%c0_38, %c0_39, %c0_40], %67 {strides = array<i32>} : memref<2x16x128xf32, #tpu.memory_space<vmem>>, vector<2x16x128xf32>,
    } else {
    }
    %c0 = arith.constant 0 : index
    %c0_1 = arith.constant 0 : index
    %c0_2 = arith.constant 0 : index
    %3 = vector.load %arg9[%c0, %c0_1, %c0_2] : memref<2x16x128xf32, #tpu.memory_space<vmem>>, vector<2x16x128xf32>
    %4 = vector.shape_cast %3 : vector<2x16x128xf32> to vector<32x128xf32>
    %c0_3 = arith.constant 0 : index
    %c0_4 = arith.constant 0 : index
    %c0_5 = arith.constant 0 : index
    %5 = vector.load %arg5[%c0_3, %c0_4, %c0_5] : memref<1x128x384xf32, #tpu.memory_space<vmem>>, vector<1x128x384xf32>
    %6 = vector.shape_cast %5 : vector<1x128x384xf32> to vector<128x384xf32>
    %cst = arith.constant dense<0.000000e+00> : vector<32x384xf32>
    %7 = tpu.matmul %4, %6, %cst {dimension_numbers = #tpu.dot_dimension_numbers<[1], [0], [0], [1], [0, 0, 1, 1], [], []>} : vector<32x128xf32>, vector<128x384xf32>, vector<32x384xf32> -> vector<32x384xf32>
    %8 = vector.extract_strided_slice %7 {offsets = [0, 0], sizes = [32, 128], strides = [1, 1]} : vector<32x384xf32> to vector<32x128xf32>
    %cst_6 = arith.constant 0.0883883461 : f32
    %9 = vector.broadcast %cst_6 : f32 to vector<32x128xf32>
    %10 = arith.mulf %8, %9 : vector<32x128xf32>
    %11 = vector.shape_cast %10 : vector<32x128xf32> to vector<2x16x128xf32>
    %12 = vector.extract_strided_slice %7 {offsets = [0, 128], sizes = [32, 128], strides = [1, 1]} : vector<32x384xf32> to vector<32x128xf32>
    %13 = vector.shape_cast %12 : vector<32x128xf32> to vector<2x16x128xf32>
    %14 = vector.extract_strided_slice %7 {offsets = [0, 256], sizes = [32, 128], strides = [1, 1]} : vector<32x384xf32> to vector<32x128xf32>
    %15 = vector.shape_cast %14 : vector<32x128xf32> to vector<2x16x128xf32>
    "tpu.trace_start"() <{level = 10 : i32, message = "bqd,bkd->bqk"}> : () -> ()
    %cst_7 = arith.constant dense<0.000000e+00> : vector<2x16x16xf32>
    %16 = tpu.matmul %11, %13, %cst_7 {dimension_numbers = #tpu.dot_dimension_numbers<[2], [2], [1], [1], [0, 0, 0, 1, 1, 1], [0], [0]>} : vector<2x16x128xf32>, vector<2x16x128xf32>, vector<2x16x16xf32> -> vector<2x16x16xf32>
    "tpu.trace_stop"() : () -> ()
    %cst_8 = arith.constant dense<0xFF800000> : vector<2x16xf32>
    %17 = vector.multi_reduction <maximumf>, %16, %cst_8 [2] : vector<2x16x16xf32> to vector<2x16xf32>
    %18 = vector.shape_cast %17 : vector<2x16xf32> to vector<2x16x1xf32>
    %19 = vector.broadcast %18 : vector<2x16x1xf32> to vector<2x16x16xf32>
    %20 = arith.subf %16, %19 : vector<2x16x16xf32>
    %21 = math.exp %20 : vector<2x16x16xf32>
    %cst_9 = arith.constant dense<0.000000e+00> : vector<2x16xf32>
    %22 = vector.multi_reduction <add>, %21, %cst_9 [2] : vector<2x16x16xf32> to vector<2x16xf32>
    %23 = vector.shape_cast %22 : vector<2x16xf32> to vector<2x16x1xf32>
    %24 = tpu.reciprocal %23 : vector<2x16x1xf32> -> vector<2x16x1xf32>
    %25 = vector.broadcast %24 : vector<2x16x1xf32> to vector<2x16x16xf32>
    %26 = arith.mulf %21, %25 : vector<2x16x16xf32>
    "tpu.trace_start"() <{level = 10 : i32, message = "bqk,bkd->bqd"}> : () -> ()
    %cst_10 = arith.constant dense<0.000000e+00> : vector<2x16x128xf32>
    %27 = tpu.matmul %26, %15, %cst_10 {dimension_numbers = #tpu.dot_dimension_numbers<[2], [1], [1], [2], [0, 0, 0, 1, 1, 2], [0], [0]>} : vector<2x16x16xf32>, vector<2x16x128xf32>, vector<2x16x128xf32> -> vector<2x16x128xf32>
    "tpu.trace_stop"() : () -> ()
    %28 = vector.shape_cast %27 : vector<2x16x128xf32> to vector<32x128xf32>
    %c0_11 = arith.constant 0 : index
    %c0_12 = arith.constant 0 : index
    %c0_13 = arith.constant 0 : index
    %29 = vector.load %arg6[%c0_11, %c0_12, %c0_13] : memref<1x128x128xf32, #tpu.memory_space<vmem>>, vector<1x128x128xf32>
    %30 = vector.shape_cast %29 : vector<1x128x128xf32> to vector<128x128xf32>
    %cst_14 = arith.constant dense<0.000000e+00> : vector<32x128xf32>
    %31 = tpu.matmul %28, %30, %cst_14 {dimension_numbers = #tpu.dot_dimension_numbers<[1], [0], [0], [1], [0, 0, 1, 1], [], []>} : vector<32x128xf32>, vector<128x128xf32>, vector<32x128xf32> -> vector<32x128xf32>
    %c0_15 = arith.constant 0 : index
    %c0_16 = arith.constant 0 : index
    %c0_17 = arith.constant 0 : index
    %32 = vector.load %arg8[%c0_15, %c0_16, %c0_17] : memref<2x16x128xf32, #tpu.memory_space<vmem>>, vector<2x16x128xf32>
    %33 = vector.shape_cast %31 : vector<32x128xf32> to vector<2x16x128xf32>
    %34 = arith.addf %32, %33 : vector<2x16x128xf32>
    %c0_18 = arith.constant 0 : index
    %c0_19 = arith.constant 0 : index
    %c0_20 = arith.constant 0 : index
    %35 = vector.load %arg8[%c0_18, %c0_19, %c0_20] : memref<2x16x128xf32, #tpu.memory_space<vmem>>, vector<2x16x128xf32>
    tpu.vector_store %arg8[%c0_18, %c0_19, %c0_20], %34 {strides = array<i32>} : memref<2x16x128xf32, #tpu.memory_space<vmem>>, vector<2x16x128xf32>,
    return
  }
  func.func @transform_0(%arg0: i32, %arg1: i32) -> (i32, i32, i32) {
    %c0_i32 = arith.constant 0 : i32
    %c0_i32_0 = arith.constant 0 : i32
    %c0_i32_1 = arith.constant 0 : i32
    return %arg0, %c0_i32, %c0_i32_0 : i32, i32, i32
  }
  func.func @transform_1(%arg0: i32, %arg1: i32) -> (i32, i32) {
    %c0_i32 = arith.constant 0 : i32
    %c0_i32_0 = arith.constant 0 : i32
    %c0_i32_1 = arith.constant 0 : i32
    return %c0_i32, %c0_i32_0 : i32, i32
  }
  func.func @transform_2(%arg0: i32, %arg1: i32) -> (i32, i32) {
    %c0_i32 = arith.constant 0 : i32
    %c0_i32_0 = arith.constant 0 : i32
    %c0_i32_1 = arith.constant 0 : i32
    return %c0_i32, %c0_i32_0 : i32, i32
  }
  func.func @transform_3(%arg0: i32, %arg1: i32) -> (i32, i32, i32) {
    %c0_i32 = arith.constant 0 : i32
    %c0_i32_0 = arith.constant 0 : i32
    %c0_i32_1 = arith.constant 0 : i32
    return %arg1, %c0_i32, %c0_i32_0 : i32, i32, i32
  }
  func.func @transform_4(%arg0: i32, %arg1: i32) -> (i32, i32, i32) {
    %c0_i32 = arith.constant 0 : i32
    %c0_i32_0 = arith.constant 0 : i32
    %c0_i32_1 = arith.constant 0 : i32
    return %arg1, %c0_i32, %c0_i32_0 : i32, i32, i32
  }
  func.func @transform_5(%arg0: i32, %arg1: i32) -> (i32, i32) {
    %c0_i32 = arith.constant 0 : i32
    %c0_i32_0 = arith.constant 0 : i32
    %c0_i32_1 = arith.constant 0 : i32
    return %c0_i32, %c0_i32_0 : i32, i32
  }
  func.func @transform_6(%arg0: i32, %arg1: i32) -> (i32, i32, i32) {
    %c0_i32 = arith.constant 0 : i32
    %c0_i32_0 = arith.constant 0 : i32
    %c0_i32_1 = arith.constant 0 : i32
    return %arg0, %c0_i32, %c0_i32_0 : i32, i32, i32
  }
}

module attributes {stable_mosaic.version = 11 : i64} {
  func.func @ffn_block_kernel(%arg0: i32, %arg1: i32, %arg2: memref<8x128xf32, #tpu.memory_space<vmem>>, %arg3: memref<1x128xf32, #tpu.memory_space<vmem>>, %arg4: memref<1x128xf32, #tpu.memory_space<vmem>>, %arg5: memref<128x256xf32, #tpu.memory_space<vmem>>, %arg6: memref<1x256xf32, #tpu.memory_space<vmem>>, %arg7: memref<256x128xf32, #tpu.memory_space<vmem>>, %arg8: memref<1x128xf32, #tpu.memory_space<vmem>>, %arg9: memref<8x128xf32, #tpu.memory_space<vmem>>, %arg10: memref<8x128xf32, #tpu.memory_space<vmem>>) attributes {dimension_semantics = [#tpu.dimension_semantics<parallel>, #tpu.dimension_semantics<arbitrary>], iteration_bounds = array<i64: 4, 2>, scalar_prefetch = 0 : i64, scratch_operands = 1 : i64, tpu.core_type = #tpu.core_type<tc>, window_params = [{transform_indices = @transform_0, window_bounds = array<i64: 8, 128>}, {pipeline_mode = #tpu.pipeline_mode<synchronous>, transform_indices = @transform_1, window_bounds = array<i64: 1, 128>}, {pipeline_mode = #tpu.pipeline_mode<synchronous>, transform_indices = @transform_2, window_bounds = array<i64: 1, 128>}, {transform_indices = @transform_3, window_bounds = array<i64: 128, 256>}, {transform_indices = @transform_4, window_bounds = array<i64: 1, 256>}, {transform_indices = @transform_5, window_bounds = array<i64: 256, 128>}, {pipeline_mode = #tpu.pipeline_mode<synchronous>, transform_indices = @transform_6, window_bounds = array<i64: 1, 128>}, {transform_indices = @transform_7, window_bounds = array<i64: 8, 128>}]} {
    %c0_i32 = arith.constant 0 : i32
    %0 = arith.cmpi eq, %arg1, %c0_i32 : i32
    %1 = arith.extui %0 : i1 to i32
    %c0_i32_0 = arith.constant 0 : i32
    %2 = arith.cmpi ne, %1, %c0_i32_0 : i32
    scf.if %2 {
      %c0_14 = arith.constant 0 : index
      %c0_15 = arith.constant 0 : index
      %16 = vector.load %arg2[%c0_14, %c0_15] : memref<8x128xf32, #tpu.memory_space<vmem>>, vector<8x128xf32>
      %c0_16 = arith.constant 0 : index
      %c0_17 = arith.constant 0 : index
      %17 = vector.load %arg8[%c0_16, %c0_17] : memref<1x128xf32, #tpu.memory_space<vmem>>, vector<1x128xf32>
      %18 = vector.broadcast %17 : vector<1x128xf32> to vector<8x128xf32>
      %19 = arith.addf %16, %18 : vector<8x128xf32>
      %c0_18 = arith.constant 0 : index
      %c0_19 = arith.constant 0 : index
      %20 = vector.load %arg9[%c0_18, %c0_19] : memref<8x128xf32, #tpu.memory_space<vmem>>, vector<8x128xf32>
      tpu.vector_store %arg9[%c0_18, %c0_19], %19 {strides = array<i32>} : memref<8x128xf32, #tpu.memory_space<vmem>>, vector<8x128xf32>,
      %c0_20 = arith.constant 0 : index
      %c0_21 = arith.constant 0 : index
      %21 = vector.load %arg3[%c0_20, %c0_21] : memref<1x128xf32, #tpu.memory_space<vmem>>, vector<1x128xf32>
      %c0_22 = arith.constant 0 : index
      %c0_23 = arith.constant 0 : index
      %22 = vector.load %arg4[%c0_22, %c0_23] : memref<1x128xf32, #tpu.memory_space<vmem>>, vector<1x128xf32>
      %cst_24 = arith.constant dense<0.000000e+00> : vector<8xf32>
      %23 = vector.multi_reduction <add>, %16, %cst_24 [1] : vector<8x128xf32> to vector<8xf32>
      %24 = vector.shape_cast %23 : vector<8xf32> to vector<8x1xf32>
      %cst_25 = arith.constant 1.280000e+02 : f32
      %25 = vector.broadcast %cst_25 : f32 to vector<8x1xf32>
      %26 = arith.divf %24, %25 : vector<8x1xf32>
      %27 = vector.broadcast %26 : vector<8x1xf32> to vector<8x128xf32>
      %28 = arith.subf %16, %27 : vector<8x128xf32>
      %29 = arith.mulf %28, %28 : vector<8x128xf32>
      %cst_26 = arith.constant dense<0.000000e+00> : vector<8xf32>
      %30 = vector.multi_reduction <add>, %29, %cst_26 [1] : vector<8x128xf32> to vector<8xf32>
      %31 = vector.shape_cast %30 : vector<8xf32> to vector<8x1xf32>
      %cst_27 = arith.constant 1.280000e+02 : f32
      %32 = vector.broadcast %cst_27 : f32 to vector<8x1xf32>
      %33 = arith.divf %31, %32 : vector<8x1xf32>
      %34 = vector.broadcast %26 : vector<8x1xf32> to vector<8x128xf32>
      %35 = arith.subf %16, %34 : vector<8x128xf32>
      %cst_28 = arith.constant 9.99999974E-6 : f32
      %36 = vector.broadcast %cst_28 : f32 to vector<8x1xf32>
      %37 = arith.addf %33, %36 : vector<8x1xf32>
      %38 = math.rsqrt %37 : vector<8x1xf32>
      %39 = vector.broadcast %38 : vector<8x1xf32> to vector<8x128xf32>
      %40 = arith.mulf %35, %39 : vector<8x128xf32>
      %41 = vector.broadcast %21 : vector<1x128xf32> to vector<8x128xf32>
      %42 = arith.mulf %40, %41 : vector<8x128xf32>
      %43 = vector.broadcast %22 : vector<1x128xf32> to vector<8x128xf32>
      %44 = arith.addf %42, %43 : vector<8x128xf32>
      %c0_29 = arith.constant 0 : index
      %c0_30 = arith.constant 0 : index
      %45 = vector.load %arg10[%c0_29, %c0_30] : memref<8x128xf32, #tpu.memory_space<vmem>>, vector<8x128xf32>
      tpu.vector_store %arg10[%c0_29, %c0_30], %44 {strides = array<i32>} : memref<8x128xf32, #tpu.memory_space<vmem>>, vector<8x128xf32>,
    } else {
    }
    %c0 = arith.constant 0 : index
    %c0_1 = arith.constant 0 : index
    %3 = vector.load %arg10[%c0, %c0_1] : memref<8x128xf32, #tpu.memory_space<vmem>>, vector<8x128xf32>
    %c0_2 = arith.constant 0 : index
    %c0_3 = arith.constant 0 : index
    %4 = vector.load %arg5[%c0_2, %c0_3] : memref<128x256xf32, #tpu.memory_space<vmem>>, vector<128x256xf32>
    %cst = arith.constant dense<0.000000e+00> : vector<8x256xf32>
    %5 = tpu.matmul %3, %4, %cst {dimension_numbers = #tpu.dot_dimension_numbers<[1], [0], [0], [1], [0, 0, 1, 1], [], []>} : vector<8x128xf32>, vector<128x256xf32>, vector<8x256xf32> -> vector<8x256xf32>
    %c0_4 = arith.constant 0 : index
    %c0_5 = arith.constant 0 : index
    %6 = vector.load %arg6[%c0_4, %c0_5] : memref<1x256xf32, #tpu.memory_space<vmem>>, vector<1x256xf32>
    %7 = vector.broadcast %6 : vector<1x256xf32> to vector<8x256xf32>
    %8 = arith.addf %5, %7 : vector<8x256xf32>
    %cst_6 = arith.constant 0.000000e+00 : f32
    %9 = vector.broadcast %cst_6 : f32 to vector<8x256xf32>
    %10 = arith.maximumf %8, %9 : vector<8x256xf32>
    %c0_7 = arith.constant 0 : index
    %c0_8 = arith.constant 0 : index
    %11 = vector.load %arg9[%c0_7, %c0_8] : memref<8x128xf32, #tpu.memory_space<vmem>>, vector<8x128xf32>
    %c0_9 = arith.constant 0 : index
    %c0_10 = arith.constant 0 : index
    %12 = vector.load %arg7[%c0_9, %c0_10] : memref<256x128xf32, #tpu.memory_space<vmem>>, vector<256x128xf32>
    %cst_11 = arith.constant dense<0.000000e+00> : vector<8x128xf32>
    %13 = tpu.matmul %10, %12, %cst_11 {dimension_numbers = #tpu.dot_dimension_numbers<[1], [0], [0], [1], [0, 0, 1, 1], [], []>} : vector<8x256xf32>, vector<256x128xf32>, vector<8x128xf32> -> vector<8x128xf32>
    %14 = arith.addf %11, %13 : vector<8x128xf32>
    %c0_12 = arith.constant 0 : index
    %c0_13 = arith.constant 0 : index
    %15 = vector.load %arg9[%c0_12, %c0_13] : memref<8x128xf32, #tpu.memory_space<vmem>>, vector<8x128xf32>
    tpu.vector_store %arg9[%c0_12, %c0_13], %14 {strides = array<i32>} : memref<8x128xf32, #tpu.memory_space<vmem>>, vector<8x128xf32>,
    return
  }
  func.func @transform_0(%arg0: i32, %arg1: i32) -> (i32, i32) {
    %c0_i32 = arith.constant 0 : i32
    %c0_i32_0 = arith.constant 0 : i32
    return %arg0, %c0_i32 : i32, i32
  }
  func.func @transform_1(%arg0: i32, %arg1: i32) -> (i32, i32) {
    %c0_i32 = arith.constant 0 : i32
    %c0_i32_0 = arith.constant 0 : i32
    %c0_i32_1 = arith.constant 0 : i32
    return %c0_i32, %c0_i32_0 : i32, i32
  }
  func.func @transform_2(%arg0: i32, %arg1: i32) -> (i32, i32) {
    %c0_i32 = arith.constant 0 : i32
    %c0_i32_0 = arith.constant 0 : i32
    %c0_i32_1 = arith.constant 0 : i32
    return %c0_i32, %c0_i32_0 : i32, i32
  }
  func.func @transform_3(%arg0: i32, %arg1: i32) -> (i32, i32) {
    %c0_i32 = arith.constant 0 : i32
    %c0_i32_0 = arith.constant 0 : i32
    return %c0_i32, %arg1 : i32, i32
  }
  func.func @transform_4(%arg0: i32, %arg1: i32) -> (i32, i32) {
    %c0_i32 = arith.constant 0 : i32
    %c0_i32_0 = arith.constant 0 : i32
    return %c0_i32, %arg1 : i32, i32
  }
  func.func @transform_5(%arg0: i32, %arg1: i32) -> (i32, i32) {
    %c0_i32 = arith.constant 0 : i32
    %c0_i32_0 = arith.constant 0 : i32
    return %arg1, %c0_i32 : i32, i32
  }
  func.func @transform_6(%arg0: i32, %arg1: i32) -> (i32, i32) {
    %c0_i32 = arith.constant 0 : i32
    %c0_i32_0 = arith.constant 0 : i32
    %c0_i32_1 = arith.constant 0 : i32
    return %c0_i32, %c0_i32_0 : i32, i32
  }
  func.func @transform_7(%arg0: i32, %arg1: i32) -> (i32, i32) {
    %c0_i32 = arith.constant 0 : i32
    %c0_i32_0 = arith.constant 0 : i32
    return %arg0, %c0_i32 : i32, i32
  }
}

module attributes {stable_mosaic.version = 11 : i64} {
  func.func @lm_head_kernel(%arg0: i32, %arg1: i32, %arg2: memref<8x128xf32, #tpu.memory_space<vmem>>, %arg3: memref<1x128xf32, #tpu.memory_space<vmem>>, %arg4: memref<1x128xf32, #tpu.memory_space<vmem>>, %arg5: memref<128x128xf32, #tpu.memory_space<vmem>>, %arg6: memref<1x128xf32, #tpu.memory_space<vmem>>, %arg7: memref<8x128xf32, #tpu.memory_space<vmem>>, %arg8: memref<8x128xf32, #tpu.memory_space<vmem>>) attributes {dimension_semantics = [#tpu.dimension_semantics<parallel>, #tpu.dimension_semantics<arbitrary>], iteration_bounds = array<i64: 4, 2>, scalar_prefetch = 0 : i64, scratch_operands = 1 : i64, tpu.core_type = #tpu.core_type<tc>, window_params = [{transform_indices = @transform_0, window_bounds = array<i64: 8, 128>}, {pipeline_mode = #tpu.pipeline_mode<synchronous>, transform_indices = @transform_1, window_bounds = array<i64: 1, 128>}, {pipeline_mode = #tpu.pipeline_mode<synchronous>, transform_indices = @transform_2, window_bounds = array<i64: 1, 128>}, {transform_indices = @transform_3, window_bounds = array<i64: 128, 128>}, {transform_indices = @transform_4, window_bounds = array<i64: 1, 128>}, {transform_indices = @transform_5, window_bounds = array<i64: 8, 128>}]} {
    %c0_i32 = arith.constant 0 : i32
    %0 = arith.cmpi eq, %arg1, %c0_i32 : i32
    %1 = arith.extui %0 : i1 to i32
    %c0_i32_0 = arith.constant 0 : i32
    %2 = arith.cmpi ne, %1, %c0_i32_0 : i32
    scf.if %2 {
      %c0_8 = arith.constant 0 : index
      %c0_9 = arith.constant 0 : index
      %10 = vector.load %arg2[%c0_8, %c0_9] : memref<8x128xf32, #tpu.memory_space<vmem>>, vector<8x128xf32>
      %c0_10 = arith.constant 0 : index
      %c0_11 = arith.constant 0 : index
      %11 = vector.load %arg3[%c0_10, %c0_11] : memref<1x128xf32, #tpu.memory_space<vmem>>, vector<1x128xf32>
      %c0_12 = arith.constant 0 : index
      %c0_13 = arith.constant 0 : index
      %12 = vector.load %arg4[%c0_12, %c0_13] : memref<1x128xf32, #tpu.memory_space<vmem>>, vector<1x128xf32>
      %cst_14 = arith.constant dense<0.000000e+00> : vector<8xf32>
      %13 = vector.multi_reduction <add>, %10, %cst_14 [1] : vector<8x128xf32> to vector<8xf32>
      %14 = vector.shape_cast %13 : vector<8xf32> to vector<8x1xf32>
      %cst_15 = arith.constant 1.280000e+02 : f32
      %15 = vector.broadcast %cst_15 : f32 to vector<8x1xf32>
      %16 = arith.divf %14, %15 : vector<8x1xf32>
      %17 = vector.broadcast %16 : vector<8x1xf32> to vector<8x128xf32>
      %18 = arith.subf %10, %17 : vector<8x128xf32>
      %19 = arith.mulf %18, %18 : vector<8x128xf32>
      %cst_16 = arith.constant dense<0.000000e+00> : vector<8xf32>
      %20 = vector.multi_reduction <add>, %19, %cst_16 [1] : vector<8x128xf32> to vector<8xf32>
      %21 = vector.shape_cast %20 : vector<8xf32> to vector<8x1xf32>
      %cst_17 = arith.constant 1.280000e+02 : f32
      %22 = vector.broadcast %cst_17 : f32 to vector<8x1xf32>
      %23 = arith.divf %21, %22 : vector<8x1xf32>
      %24 = vector.broadcast %16 : vector<8x1xf32> to vector<8x128xf32>
      %25 = arith.subf %10, %24 : vector<8x128xf32>
      %cst_18 = arith.constant 9.99999974E-6 : f32
      %26 = vector.broadcast %cst_18 : f32 to vector<8x1xf32>
      %27 = arith.addf %23, %26 : vector<8x1xf32>
      %28 = math.rsqrt %27 : vector<8x1xf32>
      %29 = vector.broadcast %28 : vector<8x1xf32> to vector<8x128xf32>
      %30 = arith.mulf %25, %29 : vector<8x128xf32>
      %31 = vector.broadcast %11 : vector<1x128xf32> to vector<8x128xf32>
      %32 = arith.mulf %30, %31 : vector<8x128xf32>
      %33 = vector.broadcast %12 : vector<1x128xf32> to vector<8x128xf32>
      %34 = arith.addf %32, %33 : vector<8x128xf32>
      %c0_19 = arith.constant 0 : index
      %c0_20 = arith.constant 0 : index
      %35 = vector.load %arg8[%c0_19, %c0_20] : memref<8x128xf32, #tpu.memory_space<vmem>>, vector<8x128xf32>
      tpu.vector_store %arg8[%c0_19, %c0_20], %34 {strides = array<i32>} : memref<8x128xf32, #tpu.memory_space<vmem>>, vector<8x128xf32>,
    } else {
    }
    %c0 = arith.constant 0 : index
    %c0_1 = arith.constant 0 : index
    %3 = vector.load %arg8[%c0, %c0_1] : memref<8x128xf32, #tpu.memory_space<vmem>>, vector<8x128xf32>
    %c0_2 = arith.constant 0 : index
    %c0_3 = arith.constant 0 : index
    %4 = vector.load %arg5[%c0_2, %c0_3] : memref<128x128xf32, #tpu.memory_space<vmem>>, vector<128x128xf32>
    %cst = arith.constant dense<0.000000e+00> : vector<8x128xf32>
    %5 = tpu.matmul %3, %4, %cst {dimension_numbers = #tpu.dot_dimension_numbers<[1], [0], [0], [1], [0, 0, 1, 1], [], []>} : vector<8x128xf32>, vector<128x128xf32>, vector<8x128xf32> -> vector<8x128xf32>
    %c0_4 = arith.constant 0 : index
    %c0_5 = arith.constant 0 : index
    %6 = vector.load %arg6[%c0_4, %c0_5] : memref<1x128xf32, #tpu.memory_space<vmem>>, vector<1x128xf32>
    %7 = vector.broadcast %6 : vector<1x128xf32> to vector<8x128xf32>
    %8 = arith.addf %5, %7 : vector<8x128xf32>
    %c0_6 = arith.constant 0 : index
    %c0_7 = arith.constant 0 : index
    %9 = vector.load %arg7[%c0_6, %c0_7] : memref<8x128xf32, #tpu.memory_space<vmem>>, vector<8x128xf32>
    tpu.vector_store %arg7[%c0_6, %c0_7], %8 {strides = array<i32>} : memref<8x128xf32, #tpu.memory_space<vmem>>, vector<8x128xf32>,
    return
  }
  func.func @transform_0(%arg0: i32, %arg1: i32) -> (i32, i32) {
    %c0_i32 = arith.constant 0 : i32
    %c0_i32_0 = arith.constant 0 : i32
    return %arg0, %c0_i32 : i32, i32
  }
  func.func @transform_1(%arg0: i32, %arg1: i32) -> (i32, i32) {
    %c0_i32 = arith.constant 0 : i32
    %c0_i32_0 = arith.constant 0 : i32
    %c0_i32_1 = arith.constant 0 : i32
    return %c0_i32, %c0_i32_0 : i32, i32
  }
  func.func @transform_2(%arg0: i32, %arg1: i32) -> (i32, i32) {
    %c0_i32 = arith.constant 0 : i32
    %c0_i32_0 = arith.constant 0 : i32
    %c0_i32_1 = arith.constant 0 : i32
    return %c0_i32, %c0_i32_0 : i32, i32
  }
  func.func @transform_3(%arg0: i32, %arg1: i32) -> (i32, i32) {
    %c0_i32 = arith.constant 0 : i32
    %c0_i32_0 = arith.constant 0 : i32
    return %c0_i32, %arg1 : i32, i32
  }
  func.func @transform_4(%arg0: i32, %arg1: i32) -> (i32, i32) {
    %c0_i32 = arith.constant 0 : i32
    %c0_i32_0 = arith.constant 0 : i32
    return %c0_i32, %arg1 : i32, i32
  }
  func.func @transform_5(%arg0: i32, %arg1: i32) -> (i32, i32) {
    %c0_i32 = arith.constant 0 : i32
    return %arg0, %arg1 : i32, i32
  }
}

</mosaic_0001>

<llo_original>
// kernel: transformer_decoder_forward.9
$region0: #{transformer_decoder_forward.9}
  #allocation0 [shape = 'u32[]', space=smem, size = 0x4, offset = 0x4, fixed_abs, tag = 'smem constant byte address 0x4 - core index']
  #allocation1 [shape = 'u32[144,128]{1,0:T(1,128)}', space=vmem, size = 0x12000, scoped, tag = 'internal scratch']
  #allocation2 [shape = 'f32[8,128]{1,0:T(8,128)}', space=vmem, size = 0x1000, scoped, tag = 'scratch operand']
  %s0 = inlined_call_operand.vmem [shape: f32[32,128], index: 0, kind: input, shape index: {}]
  %s1 = inlined_call_operand.vmem [shape: f32[1,128], index: 1, kind: input, shape index: {}]
  %s2 = inlined_call_operand.vmem [shape: f32[1,128], index: 2, kind: input, shape index: {}]
  %s3 = inlined_call_operand.vmem [shape: f32[128,256], index: 3, kind: input, shape index: {}]
  %s4 = inlined_call_operand.vmem [shape: f32[1,256], index: 4, kind: input, shape index: {}]
  %s5 = inlined_call_operand.hbm [shape: f32[32,256], index: 5, kind: output, shape index: {}]
  %s6 = sld [smem:[#allocation0]]
  $region95: #{transformer_decoder_forward.9} parent=0
    _
  %s8 = ssub.s32 1, %s6
  %s9 = scalar_select 0, %s8, %s6
  $region1: #{transformer_decoder_forward.9} parent=0
    #allocation3 [shape = 'u8[131072]{0}', space=vmem, size = 0x20000, scoped, tag = 'input window, operand 3']
    #allocation4 [shape = 'u8[8192]{0}', space=vmem, size = 0x2000, scoped, tag = 'output window, operand 0']
    #allocation5 [shape = 's32[2]{0}', space=sflag, size = 0x8, scoped, tag = 'scoped memory for transformer_decoder_forward.9']
    %10 = vsyncpa [#allocation5], 0
    %s11 = scalar_lea.sflag [#allocation5], 1
    %12 = vsyncpa %s11, 0
    loop: start=0, step=1, limit=10
    $region2: #{transformer_decoder_forward.9} parent=1 // loop_pre_header
      _
    $region3: #{transformer_decoder_forward.9} parent=1 // loop_header
      %s14 = sphi 0, %s18
      %p15 = scmp.ge.s32.totalorder %s14, 10
      %s21 = sphi 0, %s33
      %s22 = sphi 0, %s29
      %s23 = sphi 0, %s21
      %s24 = sphi 0, %s22
      %s25 = sphi 0, %s23
      %s26 = sphi 0, %s24
      %s36 = sphi 0, %s38
      %s39 = sphi 0, %s36
      %s40 = sphi 0, %s39
      %s56 = sphi 0, %s40
      %s60 = sphi 0, %s60
      %s62 = sphi 0, %s60
      %s63 = sphi 0, %s62
      %s77 = sphi 0, %s63
      %s81 = sphi 0, %s81
      %s83 = sphi 0, %s81
      %s84 = sphi 0, %s83
      %s98 = sphi 0, %s84
      %s104 = sphi 0, %s106
      %s107 = sphi 0, %s104
      %s108 = sphi 0, %s107
      %s124 = sphi 0, %s108
      %s130 = sphi 0, %s132
      %s133 = sphi 0, %s130
      %s134 = sphi 0, %s133
      %s150 = sphi 0, %s134
      %s158 = sphi 0, %s160
      %s161 = sphi 0, %s158
      %s162 = sphi 0, %s161
      %s178 = sphi 0, %s162
    $region4: #{transformer_decoder_forward.9} parent=1 // loop_header_branch
      %17 = sbr.rel (%p15) target = $region8
    $region5: #{transformer_decoder_forward.9} parent=1 // loop_body
      %s19 = ssub.s32 %s14, 1
      %s20 = ssub.s32 %s14, 2
      %s27 = sadd.s32 1, %s22
      %p28 = scmp.ge.s32.totalorder %s27, 2
      %s29 = scalar_select %p28, 0, %s27
      %s30 = sadd.s32 1, %s21
      %s31 = scalar_select %p28, %s30, %s21
      %p32 = scmp.ge.s32.totalorder %s31, 4
      %s33 = scalar_select %p32, 0, %s31
      %s34 = ssub.s32 %s21, %s33
      %p35 = scmp.eq.s32.totalorder %s34, 0
      %s37 = sadd.s32 %s36, 1
      %s38 = scalar_select %p35, %s36, %s37
      %p41 = pneg %p35
      %p42 = scmp.eq.s32.totalorder %s14, 7
      %p43 = por %p41, %p42
      %p44 = scmp.ne.s32.totalorder %s36, %s39
      %p45 = scmp.eq.s32.totalorder %s14, 0
      %p46 = por %p44, %p45
      %p47 = scmp.ne.s32.totalorder %s36, %s39
      %p48 = scmp.eq.s32.totalorder %s19, 7
      %p49 = por %p47, %p48
      %p50 = scmp.ne.s32.totalorder %s39, %s40
      %p51 = scmp.eq.s32.totalorder %s19, 0
      %p52 = por %p50, %p51
      %p53 = scmp.ne.s32.totalorder %s39, %s40
      %p54 = scmp.eq.s32.totalorder %s20, 7
      %p55 = por %p53, %p54
      %p57 = scmp.ne.s32.totalorder %s40, %s56
      %p58 = scmp.eq.s32.totalorder %s20, 0
      %p59 = por %p57, %p58
      %s61 = sadd.s32 %s60, 1
      %p64 = scmp.eq.s32.totalorder %s14, 7
      %p65 = scmp.ne.s32.totalorder %s60, %s62
      %p66 = scmp.eq.s32.totalorder %s14, 0
      %p67 = por %p65, %p66
      %p68 = scmp.ne.s32.totalorder %s60, %s62
      %p69 = scmp.eq.s32.totalorder %s19, 7
      %p70 = por %p68, %p69
      %p71 = scmp.ne.s32.totalorder %s62, %s63
      %p72 = scmp.eq.s32.totalorder %s19, 0
      %p73 = por %p71, %p72
      %p74 = scmp.ne.s32.totalorder %s62, %s63
      %p75 = scmp.eq.s32.totalorder %s20, 7
      %p76 = por %p74, %p75
      %p78 = scmp.ne.s32.totalorder %s63, %s77
      %p79 = scmp.eq.s32.totalorder %s20, 0
      %p80 = por %p78, %p79
      %s82 = sadd.s32 %s81, 1
      %p85 = scmp.eq.s32.totalorder %s14, 7
      %p86 = scmp.ne.s32.totalorder %s81, %s83
      %p87 = scmp.eq.s32.totalorder %s14, 0
      %p88 = por %p86, %p87
      %p89 = scmp.ne.s32.totalorder %s81, %s83
      %p90 = scmp.eq.s32.totalorder %s19, 7
      %p91 = por %p89, %p90
      %p92 = scmp.ne.s32.totalorder %s83, %s84
      %p93 = scmp.eq.s32.totalorder %s19, 0
      %p94 = por %p92, %p93
      %p95 = scmp.ne.s32.totalorder %s83, %s84
      %p96 = scmp.eq.s32.totalorder %s20, 7
      %p97 = por %p95, %p96
      %p99 = scmp.ne.s32.totalorder %s84, %s98
      %p100 = scmp.eq.s32.totalorder %s20, 0
      %p101 = por %p99, %p100
      %s102 = ssub.s32 %s22, %s29
      %p103 = scmp.eq.s32.totalorder %s102, 0
      %s105 = sadd.s32 %s104, 1
      %s106 = scalar_select %p103, %s104, %s105
      %p109 = pneg %p103
      %p110 = scmp.eq.s32.totalorder %s14, 7
      %p111 = por %p109, %p110
      %p112 = scmp.ne.s32.totalorder %s104, %s107
      %p113 = scmp.eq.s32.totalorder %s14, 0
      %p114 = por %p112, %p113
      %p115 = scmp.ne.s32.totalorder %s104, %s107
      %p116 = scmp.eq.s32.totalorder %s19, 7
      %p117 = por %p115, %p116
      %p118 = scmp.ne.s32.totalorder %s107, %s108
      %p119 = scmp.eq.s32.totalorder %s19, 0
      %p120 = por %p118, %p119
      %p121 = scmp.ne.s32.totalorder %s107, %s108
      %p122 = scmp.eq.s32.totalorder %s20, 7
      %p123 = por %p121, %p122
      %p125 = scmp.ne.s32.totalorder %s108, %s124
      %p126 = scmp.eq.s32.totalorder %s20, 0
      %p127 = por %p125, %p126
      %s128 = ssub.s32 %s22, %s29
      %p129 = scmp.eq.s32.totalorder %s128, 0
      %s131 = sadd.s32 %s130, 1
      %s132 = scalar_select %p129, %s130, %s131
      %p135 = pneg %p129
      %p136 = scmp.eq.s32.totalorder %s14, 7
      %p137 = por %p135, %p136
      %p138 = scmp.ne.s32.totalorder %s130, %s133
      %p139 = scmp.eq.s32.totalorder %s14, 0
      %p140 = por %p138, %p139
      %p141 = scmp.ne.s32.totalorder %s130, %s133
      %p142 = scmp.eq.s32.totalorder %s19, 7
      %p143 = por %p141, %p142
      %p144 = scmp.ne.s32.totalorder %s133, %s134
      %p145 = scmp.eq.s32.totalorder %s19, 0
      %p146 = por %p144, %p145
      %p147 = scmp.ne.s32.totalorder %s133, %s134
      %p148 = scmp.eq.s32.totalorder %s20, 7
      %p149 = por %p147, %p148
      %p151 = scmp.ne.s32.totalorder %s134, %s150
      %p152 = scmp.eq.s32.totalorder %s20, 0
      %p153 = por %p151, %p152
      %s154 = ssub.s32 %s21, %s33
      %s155 = ssub.s32 %s22, %s29
      %s156 = sor.u32 %s154, %s155
      %p157 = scmp.eq.s32.totalorder %s156, 0
      %s159 = sadd.s32 %s158, 1
      %s160 = scalar_select %p157, %s158, %s159
      %p163 = pneg %p157
      %p164 = scmp.eq.s32.totalorder %s14, 7
      %p165 = por %p163, %p164
      %p166 = scmp.ne.s32.totalorder %s158, %s161
      %p167 = scmp.eq.s32.totalorder %s14, 0
      %p168 = por %p166, %p167
      %p169 = scmp.ne.s32.totalorder %s158, %s161
      %p170 = scmp.eq.s32.totalorder %s19, 7
      %p171 = por %p169, %p170
      %p172 = scmp.ne.s32.totalorder %s161, %s162
      %p173 = scmp.eq.s32.totalorder %s19, 0
      %p174 = por %p172, %p173
      %p175 = scmp.ne.s32.totalorder %s161, %s162
      %p176 = scmp.eq.s32.totalorder %s20, 7
      %p177 = por %p175, %p176
      %p179 = scmp.ne.s32.totalorder %s162, %s178
      %p180 = scmp.eq.s32.totalorder %s20, 0
      %p181 = por %p179, %p180
      %p182 = scmp.le.s32.totalorder 1, %s14
      %p183 = scmp.lt.s32.totalorder %s14, 9
      %p184 = pnand %p182, %p183
      %p185 = pneg %p184
      // Predicated region
      $region9: #{transformer_decoder_forward.9} parent=5 // pred_check
        _
      $region10: #{transformer_decoder_forward.9} parent=5 // pred_check_branch
        %187 = sbr.rel (%p184) target = $region12
      $region11: #{transformer_decoder_forward.9} parent=5 // pred_region
        %s188 = ssub.s32 %s14, 1
        // Predicated region
        $region13: #{transformer_decoder_forward.9} parent=11 // pred_check
          %p189 = pneg %p73
        $region14: #{transformer_decoder_forward.9} parent=11 // pred_check_branch
          %191 = sbr.rel (%p189) target = $region16
        $region15: #{transformer_decoder_forward.9} parent=11 // pred_region
          _
        $region16: #{transformer_decoder_forward.9} parent=11 // pred_fallthru
          _
        // Predicated region
        $region17: #{transformer_decoder_forward.9} parent=11 // pred_check
          %p192 = pneg %p94
        $region18: #{transformer_decoder_forward.9} parent=11 // pred_check_branch
          %194 = sbr.rel (%p192) target = $region20
        $region19: #{transformer_decoder_forward.9} parent=11 // pred_region
          _
        $region20: #{transformer_decoder_forward.9} parent=11 // pred_fallthru
          _
      $region12: #{transformer_decoder_forward.9} parent=5 // pred_fallthru
        _
      %p195 = scmp.lt.s32.totalorder %s14, 8
      // Predicated region
      $region21: #{transformer_decoder_forward.9} parent=5 // pred_check
        %p196 = pneg %p195
      $region22: #{transformer_decoder_forward.9} parent=5 // pred_check_branch
        %198 = sbr.rel (%p196) target = $region24
      $region23: #{transformer_decoder_forward.9} parent=5 // pred_region
        // Predicated region
        $region25: #{transformer_decoder_forward.9} parent=23 // pred_check
          %p199 = pneg %p46
        $region26: #{transformer_decoder_forward.9} parent=23 // pred_check_branch
          %201 = sbr.rel (%p199) target = $region28
        $region27: #{transformer_decoder_forward.9} parent=23 // pred_region
          %p202 = scmp.lt.s32.totalorder %s21, 3
          %s203 = scalar_select %p202, %s21, 3
          %s204 = smul.addr %s203, 8
          %s205 = scalar_lea.vmem %s0, %s204
        $region28: #{transformer_decoder_forward.9} parent=23 // pred_fallthru
          _
        // Predicated region
        $region29: #{transformer_decoder_forward.9} parent=23 // pred_check
          %p206 = pneg %p114
        $region30: #{transformer_decoder_forward.9} parent=23 // pred_check_branch
          %208 = sbr.rel (%p206) target = $region32
        $region31: #{transformer_decoder_forward.9} parent=23 // pred_region
          %s209 = sand.u32 %s104, 1
          %s210 = sand.u32 %s104, 1
          %s211 = smul.addr %s210, 128
          %s212 = scalar_lea.vmem [#allocation3], %s211
          %s213 = smul.addr %s22, 8
          %s214 = scalar_lea.vmem %s3, %s213
          // Predicated region
          $region33: #{transformer_decoder_forward.9} parent=31 // pred_check
            _
          $region34: #{transformer_decoder_forward.9} parent=31 // pred_check_branch
            %216 = sbr.rel (0) target = $region36
          $region35: #{transformer_decoder_forward.9} parent=31 // pred_region
            // Predicated region
            $region37: #{transformer_decoder_forward.9} parent=35 // pred_check
              _
            $region38: #{transformer_decoder_forward.9} parent=35 // pred_check_branch
              %218 = sbr.rel (0) target = $region40
            $region39: #{transformer_decoder_forward.9} parent=35 // pred_region
              // Predicated region
              $region52: #{transformer_decoder_forward.9} parent=39 // pred_check
                _
              $region53: #{transformer_decoder_forward.9} parent=39 // pred_check_branch
                %263 = sbr.rel (0) target = $region55
              $region54: #{transformer_decoder_forward.9} parent=39 // pred_region
                loop: start=0, step=1, limit=1
                $region56: #{transformer_decoder_forward.9} parent=54 // loop_pre_header
                  _
                $region57: #{transformer_decoder_forward.9} parent=54 // loop_header
                  %s265 = sphi 0, %s269
                  %p266 = scmp.ge.s32.totalorder %s265, 1
                  %s270 = sphi %s214, %s214
                  %s271 = sphi %s212, %s212
                $region58: #{transformer_decoder_forward.9} parent=54 // loop_header_branch
                  %268 = sbr.rel (%p266) target = $region62
                $region59: #{transformer_decoder_forward.9} parent=54 // loop_body
                  %v272 = vld [vmem:[%s270] sm:$0xff]
                  %273 = vst [vmem:[%s271] sm:$0xff] %v272
                  %v274 = vld [vmem:[%s270 + $0x10] sm:$0xff]
                  %275 = vst [vmem:[%s271 + $0x8] sm:$0xff] %v274
                  %v276 = vld [vmem:[%s270 + $0x20] sm:$0xff]
                  %277 = vst [vmem:[%s271 + $0x10] sm:$0xff] %v276
                  %v278 = vld [vmem:[%s270 + $0x30] sm:$0xff]
                  %279 = vst [vmem:[%s271 + $0x18] sm:$0xff] %v278
                  %v280 = vld [vmem:[%s270 + $0x40] sm:$0xff]
                  %281 = vst [vmem:[%s271 + $0x20] sm:$0xff] %v280
                  %v282 = vld [vmem:[%s270 + $0x50] sm:$0xff]
                  %283 = vst [vmem:[%s271 + $0x28] sm:$0xff] %v282
                  %v284 = vld [vmem:[%s270 + $0x60] sm:$0xff]
                  %285 = vst [vmem:[%s271 + $0x30] sm:$0xff] %v284
                  %v286 = vld [vmem:[%s270 + $0x70] sm:$0xff]
                  %287 = vst [vmem:[%s271 + $0x38] sm:$0xff] %v286
                  %v288 = vld [vmem:[%s270 + $0x80] sm:$0xff]
                  %289 = vst [vmem:[%s271 + $0x40] sm:$0xff] %v288
                  %v290 = vld [vmem:[%s270 + $0x90] sm:$0xff]
                  %291 = vst [vmem:[%s271 + $0x48] sm:$0xff] %v290
                  %v292 = vld [vmem:[%s270 + $0xa0] sm:$0xff]
                  %293 = vst [vmem:[%s271 + $0x50] sm:$0xff] %v292
                  %v294 = vld [vmem:[%s270 + $0xb0] sm:$0xff]
                  %295 = vst [vmem:[%s271 + $0x58] sm:$0xff] %v294
                  %v296 = vld [vmem:[%s270 + $0xc0] sm:$0xff]
                  %297 = vst [vmem:[%s271 + $0x60] sm:$0xff] %v296
                  %v298 = vld [vmem:[%s270 + $0xd0] sm:$0xff]
                  %299 = vst [vmem:[%s271 + $0x68] sm:$0xff] %v298
                  %v300 = vld [vmem:[%s270 + $0xe0] sm:$0xff]
                  %301 = vst [vmem:[%s271 + $0x70] sm:$0xff] %v300
                  %v302 = vld [vmem:[%s270 + $0xf0] sm:$0xff]
                  %303 = vst [vmem:[%s271 + $0x78] sm:$0xff] %v302
                $region60: #{transformer_decoder_forward.9} parent=54 // loop_footer
                  %s269 = sadd.s32 1, %s265
                $region61: #{transformer_decoder_forward.9} parent=54 // loop_footer_branch
                  %264 = sbr.rel target = $region57
                $region62: #{transformer_decoder_forward.9} parent=54 // loop_exit
                  _
              $region55: #{transformer_decoder_forward.9} parent=39 // pred_fallthru
                _
              // Predicated region
              $region63: #{transformer_decoder_forward.9} parent=39 // pred_check
                _
              $region64: #{transformer_decoder_forward.9} parent=39 // pred_check_branch
                %305 = sbr.rel target = $region66
              $region65: #{transformer_decoder_forward.9} parent=39 // pred_region
                _
              $region66: #{transformer_decoder_forward.9} parent=39 // pred_fallthru
                _
            $region40: #{transformer_decoder_forward.9} parent=35 // pred_fallthru
              _
            // Predicated region
            $region41: #{transformer_decoder_forward.9} parent=35 // pred_check
              _
            $region42: #{transformer_decoder_forward.9} parent=35 // pred_check_branch
              %220 = sbr.rel target = $region44
            $region43: #{transformer_decoder_forward.9} parent=35 // pred_region
              loop: start=0, step=1, limit=1
              $region45: #{transformer_decoder_forward.9} parent=43 // loop_pre_header
                _
              $region46: #{transformer_decoder_forward.9} parent=43 // loop_header
                %s223 = sphi 0, %s227
                %p224 = scmp.ge.s32.totalorder %s223, 1
                %s228 = sphi %s214, %s214
                %s229 = sphi %s212, %s212
              $region47: #{transformer_decoder_forward.9} parent=43 // loop_header_branch
                %226 = sbr.rel (%p224) target = $region51
              $region48: #{transformer_decoder_forward.9} parent=43 // loop_body
                %v230 = vld [vmem:[%s228] sm:$0xff]
                %231 = vst [vmem:[%s229] sm:$0xff] %v230
                %v232 = vld [vmem:[%s228 + $0x10] sm:$0xff]
                %233 = vst [vmem:[%s229 + $0x8] sm:$0xff] %v232
                %v234 = vld [vmem:[%s228 + $0x20] sm:$0xff]
                %235 = vst [vmem:[%s229 + $0x10] sm:$0xff] %v234
                %v236 = vld [vmem:[%s228 + $0x30] sm:$0xff]
                %237 = vst [vmem:[%s229 + $0x18] sm:$0xff] %v236
                %v238 = vld [vmem:[%s228 + $0x40] sm:$0xff]
                %239 = vst [vmem:[%s229 + $0x20] sm:$0xff] %v238
                %v240 = vld [vmem:[%s228 + $0x50] sm:$0xff]
                %241 = vst [vmem:[%s229 + $0x28] sm:$0xff] %v240
                %v242 = vld [vmem:[%s228 + $0x60] sm:$0xff]
                %243 = vst [vmem:[%s229 + $0x30] sm:$0xff] %v242
                %v244 = vld [vmem:[%s228 + $0x70] sm:$0xff]
                %245 = vst [vmem:[%s229 + $0x38] sm:$0xff] %v244
                %v246 = vld [vmem:[%s228 + $0x80] sm:$0xff]
                %247 = vst [vmem:[%s229 + $0x40] sm:$0xff] %v246
                %v248 = vld [vmem:[%s228 + $0x90] sm:$0xff]
                %249 = vst [vmem:[%s229 + $0x48] sm:$0xff] %v248
                %v250 = vld [vmem:[%s228 + $0xa0] sm:$0xff]
                %251 = vst [vmem:[%s229 + $0x50] sm:$0xff] %v250
                %v252 = vld [vmem:[%s228 + $0xb0] sm:$0xff]
                %253 = vst [vmem:[%s229 + $0x58] sm:$0xff] %v252
                %v254 = vld [vmem:[%s228 + $0xc0] sm:$0xff]
                %255 = vst [vmem:[%s229 + $0x60] sm:$0xff] %v254
                %v256 = vld [vmem:[%s228 + $0xd0] sm:$0xff]
                %257 = vst [vmem:[%s229 + $0x68] sm:$0xff] %v256
                %v258 = vld [vmem:[%s228 + $0xe0] sm:$0xff]
                %259 = vst [vmem:[%s229 + $0x70] sm:$0xff] %v258
                %v260 = vld [vmem:[%s228 + $0xf0] sm:$0xff]
                %261 = vst [vmem:[%s229 + $0x78] sm:$0xff] %v260
              $region49: #{transformer_decoder_forward.9} parent=43 // loop_footer
                %s227 = sadd.s32 1, %s223
              $region50: #{transformer_decoder_forward.9} parent=43 // loop_footer_branch
                %222 = sbr.rel target = $region46
              $region51: #{transformer_decoder_forward.9} parent=43 // loop_exit
                _
            $region44: #{transformer_decoder_forward.9} parent=35 // pred_fallthru
              _
          $region36: #{transformer_decoder_forward.9} parent=31 // pred_fallthru
            _
          %306 = vnop
        $region32: #{transformer_decoder_forward.9} parent=23 // pred_fallthru
          _
        // Predicated region
        $region67: #{transformer_decoder_forward.9} parent=23 // pred_check
          %p307 = pneg %p140
        $region68: #{transformer_decoder_forward.9} parent=23 // pred_check_branch
          %309 = sbr.rel (%p307) target = $region70
        $region69: #{transformer_decoder_forward.9} parent=23 // pred_region
          %p310 = scmp.lt.s32.totalorder %s22, 1
          %s311 = scalar_select %p310, %s22, 1
          %s312 = scalar_lea.vmem %s4, %s311
        $region70: #{transformer_decoder_forward.9} parent=23 // pred_fallthru
          _
      $region24: #{transformer_decoder_forward.9} parent=5 // pred_fallthru
        _
      %p313 = scmp.le.s32.totalorder 1, %s14
      %p314 = scmp.lt.s32.totalorder %s14, 9
      %p315 = pnand %p313, %p314
      %p316 = pneg %p315
      // Predicated region
      $region71: #{transformer_decoder_forward.9} parent=5 // pred_check
        _
      $region72: #{transformer_decoder_forward.9} parent=5 // pred_check_branch
        %318 = sbr.rel (%p315) target = $region74
      $region73: #{transformer_decoder_forward.9} parent=5 // pred_region
        %s319 = ssub.s32 %s14, 1
        %s320 = sand.u32 %s107, 1
        %s321 = sand.u32 %s107, 1
        %s322 = smul.addr %s321, 128
        %s323 = scalar_lea.vmem [#allocation3], %s322
        // Predicated region
        $region75: #{transformer_decoder_forward.9} parent=73 // pred_check
          %p324 = pneg %p120
        $region76: #{transformer_decoder_forward.9} parent=73 // pred_check_branch
          %326 = sbr.rel (%p324) target = $region78
        $region77: #{transformer_decoder_forward.9} parent=73 // pred_region
          _
        $region78: #{transformer_decoder_forward.9} parent=73 // pred_fallthru
          _
        %p327 = scmp.lt.s32.totalorder %s23, 3
        %s328 = scalar_select %p327, %s23, 3
        %s329 = smul.addr %s328, 8
        %s330 = scalar_lea.vmem %s0, %s329
        %p331 = pneg %p52
        %p332 = pneg %p49
        %p333 = pneg %p73
        %p334 = pneg %p70
        %p335 = pneg %p94
        %p336 = pneg %p91
        %s337 = sand.u32 %s107, 1
        %s338 = sand.u32 %s107, 1
        %s339 = smul.addr %s338, 128
        %s340 = scalar_lea.vmem [#allocation3], %s339
        %p341 = pneg %p120
        %p342 = pneg %p117
        %p343 = scmp.lt.s32.totalorder %s24, 1
        %s344 = scalar_select %p343, %s24, 1
        %s345 = scalar_lea.vmem %s4, %s344
        %p346 = pneg %p146
        %p347 = pneg %p143
        %p348 = pneg %p174
        %p349 = pneg %p171
        %s350 = sand.u32 %s161, 1
        %s351 = scalar_lea.sflag [#allocation5], %s350
        %s352 = sand.u32 %s161, 1
        %s353 = smul.addr %s352, 8
        %s354 = scalar_lea.vmem [#allocation4], %s353
        %p355 = scmp.lt.s32.totalorder %s23, 3
        %s356 = scalar_select %p355, %s23, 3
        %s357 = smul.addr %s356, 8
        %s358 = scalar_lea.vmem %s0, %s357
        %p359 = scmp.lt.s32.totalorder %s24, 1
        %s360 = scalar_select %p359, %s24, 1
        %s361 = scalar_lea.vmem %s4, %s360
        %p362 = scmp.eq.s32.totalorder %s24, 0
        // Predicated region
        $region79: #{transformer_decoder_forward.9} parent=73 // pred_check
          %p363 = pneg %p362
        $region80: #{transformer_decoder_forward.9} parent=73 // pred_check_branch
          %365 = sbr.rel (%p363) target = $region82
        $region81: #{transformer_decoder_forward.9} parent=73 // pred_region
          %v366 = vld [vmem:[%s358] sm:$0xff]
          %v367 = vld [vmem:[%s1] sm:$0x1]
          %v368 = vld [vmem:[%s2] sm:$0x1]
          %369 = vadd.xlane.f32.xlu0 %v366
          %v370 = vpop.xlane.xlu0 %369
          %v371 = vrcp.pop 128.0
          %v372 = vmul.f32 %v370, %v371
          %v373 = vsub.f32 %v366, %v372
          %v374 = vmul.f32 %v373, %v373
          %375 = vadd.xlane.f32.xlu0 %v374
          %v376 = vpop.xlane.xlu0 %375
          %v377 = vmul.f32 %v376, %v371
          %v378 = vadd.f32 %v377, 1e-05
          %v379 = vrsqrt.pop %v378
          %v380 = vmul.f32 %v373, %v379
          %v382 = vlaneseq
          %v383 = vshrl.u32 %v382, 7
          %v384 = vsub.s32 0, %v383
          %v385 = vrot.slane %v367, %v384
          %v387 = vmul.f32 %v380, %v385
          %v389 = vlaneseq
          %v390 = vshrl.u32 %v389, 7
          %v391 = vsub.s32 0, %v390
          %v392 = vrot.slane %v368, %v391
          %v394 = vadd.f32 %v387, %v392
          %395 = vst [vmem:[#allocation2] sm:$0xff] %v394
        $region82: #{transformer_decoder_forward.9} parent=73 // pred_fallthru
          _
        %v396 = vld [vmem:[#allocation2] sm:$0xff]
        %v397 = vld [vmem:[%s323] sm:$0xff]
        %v398 = vld [vmem:[%s323 + $0x8] sm:$0xff]
        %v399 = vld [vmem:[%s323 + $0x10] sm:$0xff]
        %v400 = vld [vmem:[%s323 + $0x18] sm:$0xff]
        %v401 = vld [vmem:[%s323 + $0x20] sm:$0xff]
        %v402 = vld [vmem:[%s323 + $0x28] sm:$0xff]
        %v403 = vld [vmem:[%s323 + $0x30] sm:$0xff]
        %v404 = vld [vmem:[%s323 + $0x38] sm:$0xff]
        %v405 = vld [vmem:[%s323 + $0x40] sm:$0xff]
        %v406 = vld [vmem:[%s323 + $0x48] sm:$0xff]
        %v407 = vld [vmem:[%s323 + $0x50] sm:$0xff]
        %v408 = vld [vmem:[%s323 + $0x58] sm:$0xff]
        %v409 = vld [vmem:[%s323 + $0x60] sm:$0xff]
        %v410 = vld [vmem:[%s323 + $0x68] sm:$0xff]
        %v411 = vld [vmem:[%s323 + $0x70] sm:$0xff]
        %v412 = vld [vmem:[%s323 + $0x78] sm:$0xff]
        %v413 = vld [vmem:[%s361] sm:$0x1]
        %v415 = vlaneseq
        %v416 = vshrl.u32 %v415, 7
        %v417 = vsub.s32 0, %v416
        %v418 = vrot.slane %v413, %v417
        %420 = vmatprep.subr.mxu0 0.0
        %421 = vmatpush1.msra.mxu0 %v397
        %422 = vmatprep.subr.mxu0 0.0
        %423 = vmatpush1.msra.mxu0 %v398
        %424 = vmatprep.subr.mxu0 0.0
        %425 = vmatpush1.msra.mxu0 %v399
        %426 = vmatprep.subr.mxu0 0.0
        %427 = vmatpush1.msra.mxu0 %v400
        %428 = vmatprep.subr.mxu0 0.0
        %429 = vmatpush1.msra.mxu0 %v401
        %430 = vmatprep.subr.mxu0 0.0
        %431 = vmatpush1.msra.mxu0 %v402
        %432 = vmatprep.subr.mxu0 0.0
        %433 = vmatpush1.msra.mxu0 %v403
        %434 = vmatprep.subr.mxu0 0.0
        %435 = vmatpush1.msra.mxu0 %v404
        %436 = vmatprep.subr.mxu0 0.0
        %437 = vmatpush1.msra.mxu0 %v405
        %438 = vmatprep.subr.mxu0 0.0
        %439 = vmatpush1.msra.mxu0 %v406
        %440 = vmatprep.subr.mxu0 0.0
        %441 = vmatpush1.msra.mxu0 %v407
        %442 = vmatprep.subr.mxu0 0.0
        %443 = vmatpush1.msra.mxu0 %v408
        %444 = vmatprep.subr.mxu0 0.0
        %445 = vmatpush1.msra.mxu0 %v409
        %446 = vmatprep.subr.mxu0 0.0
        %447 = vmatpush1.msra.mxu0 %v410
        %448 = vmatprep.subr.mxu0 0.0
        %449 = vmatpush1.msra.mxu0 %v411
        %450 = vmatprep.subr.mxu0 0.0
        %451 = vmatpush1.msra.mxu0 %v412
        %452 = vmatprep.subr.mxu0 0.0
        %453 = vmatpush1.msra.mxu0 0.0
        %454 = vmatprep.subr.mxu0 0.0
        %455 = vmatpush1.msra.mxu0 0.0
        %456 = vmatprep.subr.mxu0 0.0
        %457 = vmatpush1.msra.mxu0 0.0
        %458 = vmatprep.subr.mxu0 0.0
        %459 = vmatpush1.msra.mxu0 0.0
        %460 = vmatprep.subr.mxu0 0.0
        %461 = vmatpush1.msra.mxu0 0.0
        %462 = vmatprep.subr.mxu0 0.0
        %463 = vmatpush1.msra.mxu0 0.0
        %464 = vmatprep.subr.mxu0 0.0
        %465 = vmatpush1.msra.mxu0 0.0
        %466 = vmatprep.subr.mxu0 0.0
        %467 = vmatpush1.msra.mxu0 0.0
        %468 = vmatprep.subr.mxu0 0.0
        %469 = vmatpush1.msra.mxu0 0.0
        %470 = vmatprep.subr.mxu0 0.0
        %471 = vmatpush1.msra.mxu0 0.0
        %472 = vmatprep.subr.mxu0 0.0
        %473 = vmatpush1.msra.mxu0 0.0
        %474 = vmatprep.subr.mxu0 0.0
        %475 = vmatpush1.msra.mxu0 0.0
        %476 = vmatprep.subr.mxu0 0.0
        %477 = vmatpush1.msra.mxu0 0.0
        %478 = vmatprep.subr.mxu0 0.0
        %479 = vmatpush1.msra.mxu0 0.0
        %480 = vmatprep.subr.mxu0 0.0
        %481 = vmatpush1.msra.mxu0 0.0
        %482 = vmatprep.subr.mxu0 0.0
        %483 = vmatpush1.msra.mxu0 0.0
        %484 = vmatprep.mubr.f32.mxu0 0.0
        %485 = vmatmul.mubr.f32.gmra.mrb[0].mxu0 %v396
        %v486 = vpop.f32.mrb[0].mxu0
        %v487 = vadd.f32 %v418, %v486
        %v488 = vpop.f32.mrb[0].mxu0
        %489 = vdwg.mxu0
        %490 = vst [vmem:[%s354] sm:$0xff] %v487
        %s491 = sand.u32 %s161, 1
        %s492 = scalar_lea.sflag [#allocation5], %s491
        %s493 = sand.u32 %s161, 1
        %s494 = smul.addr %s493, 8
        %s495 = scalar_lea.vmem [#allocation4], %s494
        // Predicated region
        $region83: #{transformer_decoder_forward.9} parent=73 // pred_check
          %p496 = pneg %p171
        $region84: #{transformer_decoder_forward.9} parent=73 // pred_check_branch
          %498 = sbr.rel (%p496) target = $region86
        $region85: #{transformer_decoder_forward.9} parent=73 // pred_region
          %s500 = ssub.s32 128, 128
          %501 = vsyncadd %s492, %s500
          %s502 = smul.addr %s23, 2
          %s503 = sadd.s32 %s24, %s502
          %s504 = smul.addr %s503, 128
          %s505 = scalar_lea.hbm %s5, %s504
          %s507 = sshll.u32 %s495, 4
          %s508 = int_to_ptr.vmem [resolvable:$true] %s507
          %510 = dma.vmem_to_hbm [thread:$0]  %s508, 128, %s505, %s492
        $region86: #{transformer_decoder_forward.9} parent=73 // pred_fallthru
          _
      $region74: #{transformer_decoder_forward.9} parent=5 // pred_fallthru
        _
      %p511 = scmp.le.s32.totalorder 2, %s14
      // Predicated region
      $region87: #{transformer_decoder_forward.9} parent=5 // pred_check
        %p512 = pneg %p511
      $region88: #{transformer_decoder_forward.9} parent=5 // pred_check_branch
        %514 = sbr.rel (%p512) target = $region90
      $region89: #{transformer_decoder_forward.9} parent=5 // pred_region
        %s515 = ssub.s32 %s14, 2
        // Predicated region
        $region91: #{transformer_decoder_forward.9} parent=89 // pred_check
          %p516 = pneg %p177
        $region92: #{transformer_decoder_forward.9} parent=89 // pred_check_branch
          %518 = sbr.rel (%p516) target = $region94
        $region93: #{transformer_decoder_forward.9} parent=89 // pred_region
          %s519 = sand.u32 %s162, 1
          %s520 = scalar_lea.sflag [#allocation5], %s519
          %s521 = sand.u32 %s162, 1
          %s522 = smul.addr %s521, 8
          %s523 = scalar_lea.vmem [#allocation4], %s522
          %524 = dma.done %s520, 128
        $region94: #{transformer_decoder_forward.9} parent=89 // pred_fallthru
          _
      $region90: #{transformer_decoder_forward.9} parent=5 // pred_fallthru
        _
    $region6: #{transformer_decoder_forward.9} parent=1 // loop_footer
      %s18 = sadd.s32 1, %s14
    $region7: #{transformer_decoder_forward.9} parent=1 // loop_footer_branch
      %13 = sbr.rel target = $region3
    $region8: #{transformer_decoder_forward.9} parent=1 // loop_exit
      _
    %525 = vsyncpa [#allocation5], 1
    %s526 = scalar_lea.sflag [#allocation5], 1
    %527 = vsyncpa %s526, 1

// kernel: transformer_decoder_forward.6
$region0: #{transformer_decoder_forward.6}
  #allocation0 [shape = 'u32[]', space=smem, size = 0x4, offset = 0x4, fixed_abs, tag = 'smem constant byte address 0x4 - core index']
  #allocation1 [shape = 'u32[144,128]{1,0:T(1,128)}', space=vmem, size = 0x12000, scoped, tag = 'internal scratch']
  #allocation2 [shape = 'f32[8,128]{1,0:T(8,128)}', space=vmem, size = 0x1000, scoped, tag = 'scratch operand']
  %s0 = inlined_call_operand.vmem [shape: f32[32,128], index: 0, kind: input, shape index: {}]
  %s1 = inlined_call_operand.vmem [shape: f32[1,128], index: 1, kind: input, shape index: {}]
  %s2 = inlined_call_operand.vmem [shape: f32[1,128], index: 2, kind: input, shape index: {}]
  %s3 = inlined_call_operand.vmem [shape: f32[128,512], index: 3, kind: input, shape index: {}]
  %s4 = inlined_call_operand.vmem [shape: f32[1,512], index: 4, kind: input, shape index: {}]
  %s5 = inlined_call_operand.vmem [shape: f32[512,128], index: 5, kind: input, shape index: {}]
  %s6 = inlined_call_operand.vmem [shape: f32[1,128], index: 6, kind: input, shape index: {}]
  %s7 = inlined_call_operand.vmem [shape: f32[32,128], index: 7, kind: output, shape index: {}]
  %s8 = sld [smem:[#allocation0]]
  $region88: #{transformer_decoder_forward.6} parent=0
    _
  %s10 = ssub.s32 1, %s8
  %s11 = scalar_select 0, %s10, %s8
  $region1: #{transformer_decoder_forward.6} parent=0
    #allocation3 [shape = 'u8[262144]{0}', space=vmem, size = 0x40000, scoped, tag = 'input window, operand 3']
    loop: start=0, step=1, limit=10
    $region2: #{transformer_decoder_forward.6} parent=1 // loop_pre_header
      _
    $region3: #{transformer_decoder_forward.6} parent=1 // loop_header
      %s13 = sphi 0, %s17
      %p14 = scmp.ge.s32.totalorder %s13, 10
      %s20 = sphi 0, %s32
      %s21 = sphi 0, %s28
      %s22 = sphi 0, %s20
      %s23 = sphi 0, %s21
      %s24 = sphi 0, %s22
      %s25 = sphi 0, %s23
      %s35 = sphi 0, %s37
      %s38 = sphi 0, %s35
      %s39 = sphi 0, %s38
      %s55 = sphi 0, %s39
      %s59 = sphi 0, %s59
      %s61 = sphi 0, %s59
      %s62 = sphi 0, %s61
      %s76 = sphi 0, %s62
      %s80 = sphi 0, %s80
      %s82 = sphi 0, %s80
      %s83 = sphi 0, %s82
      %s97 = sphi 0, %s83
      %s103 = sphi 0, %s105
      %s106 = sphi 0, %s103
      %s107 = sphi 0, %s106
      %s123 = sphi 0, %s107
      %s129 = sphi 0, %s131
      %s132 = sphi 0, %s129
      %s133 = sphi 0, %s132
      %s149 = sphi 0, %s133
      %s155 = sphi 0, %s157
      %s158 = sphi 0, %s155
      %s159 = sphi 0, %s158
      %s175 = sphi 0, %s159
      %s179 = sphi 0, %s179
      %s181 = sphi 0, %s179
      %s182 = sphi 0, %s181
      %s196 = sphi 0, %s182
      %s202 = sphi 0, %s204
      %s205 = sphi 0, %s202
      %s206 = sphi 0, %s205
      %s222 = sphi 0, %s206
    $region4: #{transformer_decoder_forward.6} parent=1 // loop_header_branch
      %16 = sbr.rel (%p14) target = $region8
    $region5: #{transformer_decoder_forward.6} parent=1 // loop_body
      %s18 = ssub.s32 %s13, 1
      %s19 = ssub.s32 %s13, 2
      %s26 = sadd.s32 1, %s21
      %p27 = scmp.ge.s32.totalorder %s26, 2
      %s28 = scalar_select %p27, 0, %s26
      %s29 = sadd.s32 1, %s20
      %s30 = scalar_select %p27, %s29, %s20
      %p31 = scmp.ge.s32.totalorder %s30, 4
      %s32 = scalar_select %p31, 0, %s30
      %s33 = ssub.s32 %s20, %s32
      %p34 = scmp.eq.s32.totalorder %s33, 0
      %s36 = sadd.s32 %s35, 1
      %s37 = scalar_select %p34, %s35, %s36
      %p40 = pneg %p34
      %p41 = scmp.eq.s32.totalorder %s13, 7
      %p42 = por %p40, %p41
      %p43 = scmp.ne.s32.totalorder %s35, %s38
      %p44 = scmp.eq.s32.totalorder %s13, 0
      %p45 = por %p43, %p44
      %p46 = scmp.ne.s32.totalorder %s35, %s38
      %p47 = scmp.eq.s32.totalorder %s18, 7
      %p48 = por %p46, %p47
      %p49 = scmp.ne.s32.totalorder %s38, %s39
      %p50 = scmp.eq.s32.totalorder %s18, 0
      %p51 = por %p49, %p50
      %p52 = scmp.ne.s32.totalorder %s38, %s39
      %p53 = scmp.eq.s32.totalorder %s19, 7
      %p54 = por %p52, %p53
      %p56 = scmp.ne.s32.totalorder %s39, %s55
      %p57 = scmp.eq.s32.totalorder %s19, 0
      %p58 = por %p56, %p57
      %s60 = sadd.s32 %s59, 1
      %p63 = scmp.eq.s32.totalorder %s13, 7
      %p64 = scmp.ne.s32.totalorder %s59, %s61
      %p65 = scmp.eq.s32.totalorder %s13, 0
      %p66 = por %p64, %p65
      %p67 = scmp.ne.s32.totalorder %s59, %s61
      %p68 = scmp.eq.s32.totalorder %s18, 7
      %p69 = por %p67, %p68
      %p70 = scmp.ne.s32.totalorder %s61, %s62
      %p71 = scmp.eq.s32.totalorder %s18, 0
      %p72 = por %p70, %p71
      %p73 = scmp.ne.s32.totalorder %s61, %s62
      %p74 = scmp.eq.s32.totalorder %s19, 7
      %p75 = por %p73, %p74
      %p77 = scmp.ne.s32.totalorder %s62, %s76
      %p78 = scmp.eq.s32.totalorder %s19, 0
      %p79 = por %p77, %p78
      %s81 = sadd.s32 %s80, 1
      %p84 = scmp.eq.s32.totalorder %s13, 7
      %p85 = scmp.ne.s32.totalorder %s80, %s82
      %p86 = scmp.eq.s32.totalorder %s13, 0
      %p87 = por %p85, %p86
      %p88 = scmp.ne.s32.totalorder %s80, %s82
      %p89 = scmp.eq.s32.totalorder %s18, 7
      %p90 = por %p88, %p89
      %p91 = scmp.ne.s32.totalorder %s82, %s83
      %p92 = scmp.eq.s32.totalorder %s18, 0
      %p93 = por %p91, %p92
      %p94 = scmp.ne.s32.totalorder %s82, %s83
      %p95 = scmp.eq.s32.totalorder %s19, 7
      %p96 = por %p94, %p95
      %p98 = scmp.ne.s32.totalorder %s83, %s97
      %p99 = scmp.eq.s32.totalorder %s19, 0
      %p100 = por %p98, %p99
      %s101 = ssub.s32 %s21, %s28
      %p102 = scmp.eq.s32.totalorder %s101, 0
      %s104 = sadd.s32 %s103, 1
      %s105 = scalar_select %p102, %s103, %s104
      %p108 = pneg %p102
      %p109 = scmp.eq.s32.totalorder %s13, 7
      %p110 = por %p108, %p109
      %p111 = scmp.ne.s32.totalorder %s103, %s106
      %p112 = scmp.eq.s32.totalorder %s13, 0
      %p113 = por %p111, %p112
      %p114 = scmp.ne.s32.totalorder %s103, %s106
      %p115 = scmp.eq.s32.totalorder %s18, 7
      %p116 = por %p114, %p115
      %p117 = scmp.ne.s32.totalorder %s106, %s107
      %p118 = scmp.eq.s32.totalorder %s18, 0
      %p119 = por %p117, %p118
      %p120 = scmp.ne.s32.totalorder %s106, %s107
      %p121 = scmp.eq.s32.totalorder %s19, 7
      %p122 = por %p120, %p121
      %p124 = scmp.ne.s32.totalorder %s107, %s123
      %p125 = scmp.eq.s32.totalorder %s19, 0
      %p126 = por %p124, %p125
      %s127 = ssub.s32 %s21, %s28
      %p128 = scmp.eq.s32.totalorder %s127, 0
      %s130 = sadd.s32 %s129, 1
      %s131 = scalar_select %p128, %s129, %s130
      %p134 = pneg %p128
      %p135 = scmp.eq.s32.totalorder %s13, 7
      %p136 = por %p134, %p135
      %p137 = scmp.ne.s32.totalorder %s129, %s132
      %p138 = scmp.eq.s32.totalorder %s13, 0
      %p139 = por %p137, %p138
      %p140 = scmp.ne.s32.totalorder %s129, %s132
      %p141 = scmp.eq.s32.totalorder %s18, 7
      %p142 = por %p140, %p141
      %p143 = scmp.ne.s32.totalorder %s132, %s133
      %p144 = scmp.eq.s32.totalorder %s18, 0
      %p145 = por %p143, %p144
      %p146 = scmp.ne.s32.totalorder %s132, %s133
      %p147 = scmp.eq.s32.totalorder %s19, 7
      %p148 = por %p146, %p147
      %p150 = scmp.ne.s32.totalorder %s133, %s149
      %p151 = scmp.eq.s32.totalorder %s19, 0
      %p152 = por %p150, %p151
      %s153 = ssub.s32 %s21, %s28
      %p154 = scmp.eq.s32.totalorder %s153, 0
      %s156 = sadd.s32 %s155, 1
      %s157 = scalar_select %p154, %s155, %s156
      %p160 = pneg %p154
      %p161 = scmp.eq.s32.totalorder %s13, 7
      %p162 = por %p160, %p161
      %p163 = scmp.ne.s32.totalorder %s155, %s158
      %p164 = scmp.eq.s32.totalorder %s13, 0
      %p165 = por %p163, %p164
      %p166 = scmp.ne.s32.totalorder %s155, %s158
      %p167 = scmp.eq.s32.totalorder %s18, 7
      %p168 = por %p166, %p167
      %p169 = scmp.ne.s32.totalorder %s158, %s159
      %p170 = scmp.eq.s32.totalorder %s18, 0
      %p171 = por %p169, %p170
      %p172 = scmp.ne.s32.totalorder %s158, %s159
      %p173 = scmp.eq.s32.totalorder %s19, 7
      %p174 = por %p172, %p173
      %p176 = scmp.ne.s32.totalorder %s159, %s175
      %p177 = scmp.eq.s32.totalorder %s19, 0
      %p178 = por %p176, %p177
      %s180 = sadd.s32 %s179, 1
      %p183 = scmp.eq.s32.totalorder %s13, 7
      %p184 = scmp.ne.s32.totalorder %s179, %s181
      %p185 = scmp.eq.s32.totalorder %s13, 0
      %p186 = por %p184, %p185
      %p187 = scmp.ne.s32.totalorder %s179, %s181
      %p188 = scmp.eq.s32.totalorder %s18, 7
      %p189 = por %p187, %p188
      %p190 = scmp.ne.s32.totalorder %s181, %s182
      %p191 = scmp.eq.s32.totalorder %s18, 0
      %p192 = por %p190, %p191
      %p193 = scmp.ne.s32.totalorder %s181, %s182
      %p194 = scmp.eq.s32.totalorder %s19, 7
      %p195 = por %p193, %p194
      %p197 = scmp.ne.s32.totalorder %s182, %s196
      %p198 = scmp.eq.s32.totalorder %s19, 0
      %p199 = por %p197, %p198
      %s200 = ssub.s32 %s20, %s32
      %p201 = scmp.eq.s32.totalorder %s200, 0
      %s203 = sadd.s32 %s202, 1
      %s204 = scalar_select %p201, %s202, %s203
      %p207 = pneg %p201
      %p208 = scmp.eq.s32.totalorder %s13, 7
      %p209 = por %p207, %p208
      %p210 = scmp.ne.s32.totalorder %s202, %s205
      %p211 = scmp.eq.s32.totalorder %s13, 0
      %p212 = por %p210, %p211
      %p213 = scmp.ne.s32.totalorder %s202, %s205
      %p214 = scmp.eq.s32.totalorder %s18, 7
      %p215 = por %p213, %p214
      %p216 = scmp.ne.s32.totalorder %s205, %s206
      %p217 = scmp.eq.s32.totalorder %s18, 0
      %p218 = por %p216, %p217
      %p219 = scmp.ne.s32.totalorder %s205, %s206
      %p220 = scmp.eq.s32.totalorder %s19, 7
      %p221 = por %p219, %p220
      %p223 = scmp.ne.s32.totalorder %s206, %s222
      %p224 = scmp.eq.s32.totalorder %s19, 0
      %p225 = por %p223, %p224
      %p226 = scmp.le.s32.totalorder 1, %s13
      %p227 = scmp.lt.s32.totalorder %s13, 9
      %p228 = pnand %p226, %p227
      %p229 = pneg %p228
      // Predicated region
      $region9: #{transformer_decoder_forward.6} parent=5 // pred_check
        _
      $region10: #{transformer_decoder_forward.6} parent=5 // pred_check_branch
        %231 = sbr.rel (%p228) target = $region12
      $region11: #{transformer_decoder_forward.6} parent=5 // pred_region
        %s232 = ssub.s32 %s13, 1
        // Predicated region
        $region13: #{transformer_decoder_forward.6} parent=11 // pred_check
          %p233 = pneg %p72
        $region14: #{transformer_decoder_forward.6} parent=11 // pred_check_branch
          %235 = sbr.rel (%p233) target = $region16
        $region15: #{transformer_decoder_forward.6} parent=11 // pred_region
          _
        $region16: #{transformer_decoder_forward.6} parent=11 // pred_fallthru
          _
        // Predicated region
        $region17: #{transformer_decoder_forward.6} parent=11 // pred_check
          %p236 = pneg %p93
        $region18: #{transformer_decoder_forward.6} parent=11 // pred_check_branch
          %238 = sbr.rel (%p236) target = $region20
        $region19: #{transformer_decoder_forward.6} parent=11 // pred_region
          _
        $region20: #{transformer_decoder_forward.6} parent=11 // pred_fallthru
          _
        // Predicated region
        $region21: #{transformer_decoder_forward.6} parent=11 // pred_check
          %p239 = pneg %p192
        $region22: #{transformer_decoder_forward.6} parent=11 // pred_check_branch
          %241 = sbr.rel (%p239) target = $region24
        $region23: #{transformer_decoder_forward.6} parent=11 // pred_region
          _
        $region24: #{transformer_decoder_forward.6} parent=11 // pred_fallthru
          _
      $region12: #{transformer_decoder_forward.6} parent=5 // pred_fallthru
        _
      %p242 = scmp.lt.s32.totalorder %s13, 8
      // Predicated region
      $region25: #{transformer_decoder_forward.6} parent=5 // pred_check
        %p243 = pneg %p242
      $region26: #{transformer_decoder_forward.6} parent=5 // pred_check_branch
        %245 = sbr.rel (%p243) target = $region28
      $region27: #{transformer_decoder_forward.6} parent=5 // pred_region
        // Predicated region
        $region29: #{transformer_decoder_forward.6} parent=27 // pred_check
          %p246 = pneg %p45
        $region30: #{transformer_decoder_forward.6} parent=27 // pred_check_branch
          %248 = sbr.rel (%p246) target = $region32
        $region31: #{transformer_decoder_forward.6} parent=27 // pred_region
          %p249 = scmp.lt.s32.totalorder %s20, 3
          %s250 = scalar_select %p249, %s20, 3
          %s251 = smul.addr %s250, 8
          %s252 = scalar_lea.vmem %s0, %s251
        $region32: #{transformer_decoder_forward.6} parent=27 // pred_fallthru
          _
        // Predicated region
        $region33: #{transformer_decoder_forward.6} parent=27 // pred_check
          %p253 = pneg %p113
        $region34: #{transformer_decoder_forward.6} parent=27 // pred_check_branch
          %255 = sbr.rel (%p253) target = $region36
        $region35: #{transformer_decoder_forward.6} parent=27 // pred_region
          %s256 = sand.u32 %s103, 1
          %s257 = sand.u32 %s103, 1
          %s258 = smul.addr %s257, 256
          %s259 = scalar_lea.vmem [#allocation3], %s258
          %s260 = smul.u32 2, %s21
          %s261 = smul.addr %s260, 8
          %s262 = scalar_lea.vmem %s3, %s261
          // Predicated region
          $region37: #{transformer_decoder_forward.6} parent=35 // pred_check
            _
          $region38: #{transformer_decoder_forward.6} parent=35 // pred_check_branch
            %264 = sbr.rel (0) target = $region40
          $region39: #{transformer_decoder_forward.6} parent=35 // pred_region
            // Predicated region
            $region41: #{transformer_decoder_forward.6} parent=39 // pred_check
              _
            $region42: #{transformer_decoder_forward.6} parent=39 // pred_check_branch
              %266 = sbr.rel (0) target = $region44
            $region43: #{transformer_decoder_forward.6} parent=39 // pred_region
              loop: start=0, step=1, limit=1
              $region45: #{transformer_decoder_forward.6} parent=43 // loop_pre_header
                _
              $region46: #{transformer_decoder_forward.6} parent=43 // loop_header
                %s268 = sphi 0, %s272
                %p269 = scmp.ge.s32.totalorder %s268, 1
                %s273 = sphi %s262, %s262
                %s274 = sphi %s259, %s259
              $region47: #{transformer_decoder_forward.6} parent=43 // loop_header_branch
                %271 = sbr.rel (%p269) target = $region51
              $region48: #{transformer_decoder_forward.6} parent=43 // loop_body
                %v275 = vld [vmem:[%s273] sm:$0xff]
                %276 = vst [vmem:[%s274] sm:$0xff] %v275
                %v277 = vld [vmem:[%s273 + $0x8] sm:$0xff]
                %278 = vst [vmem:[%s274 + $0x8] sm:$0xff] %v277
                %v279 = vld [vmem:[%s273 + $0x20] sm:$0xff]
                %280 = vst [vmem:[%s274 + $0x10] sm:$0xff] %v279
                %v281 = vld [vmem:[%s273 + $0x28] sm:$0xff]
                %282 = vst [vmem:[%s274 + $0x18] sm:$0xff] %v281
                %v283 = vld [vmem:[%s273 + $0x40] sm:$0xff]
                %284 = vst [vmem:[%s274 + $0x20] sm:$0xff] %v283
                %v285 = vld [vmem:[%s273 + $0x48] sm:$0xff]
                %286 = vst [vmem:[%s274 + $0x28] sm:$0xff] %v285
                %v287 = vld [vmem:[%s273 + $0x60] sm:$0xff]
                %288 = vst [vmem:[%s274 + $0x30] sm:$0xff] %v287
                %v289 = vld [vmem:[%s273 + $0x68] sm:$0xff]
                %290 = vst [vmem:[%s274 + $0x38] sm:$0xff] %v289
                %v291 = vld [vmem:[%s273 + $0x80] sm:$0xff]
                %292 = vst [vmem:[%s274 + $0x40] sm:$0xff] %v291
                %v293 = vld [vmem:[%s273 + $0x88] sm:$0xff]
                %294 = vst [vmem:[%s274 + $0x48] sm:$0xff] %v293
                %v295 = vld [vmem:[%s273 + $0xa0] sm:$0xff]
                %296 = vst [vmem:[%s274 + $0x50] sm:$0xff] %v295
                %v297 = vld [vmem:[%s273 + $0xa8] sm:$0xff]
                %298 = vst [vmem:[%s274 + $0x58] sm:$0xff] %v297
                %v299 = vld [vmem:[%s273 + $0xc0] sm:$0xff]
                %300 = vst [vmem:[%s274 + $0x60] sm:$0xff] %v299
                %v301 = vld [vmem:[%s273 + $0xc8] sm:$0xff]
                %302 = vst [vmem:[%s274 + $0x68] sm:$0xff] %v301
                %v303 = vld [vmem:[%s273 + $0xe0] sm:$0xff]
                %304 = vst [vmem:[%s274 + $0x70] sm:$0xff] %v303
                %v305 = vld [vmem:[%s273 + $0xe8] sm:$0xff]
                %306 = vst [vmem:[%s274 + $0x78] sm:$0xff] %v305
                %v307 = vld [vmem:[%s273 + $0x100] sm:$0xff]
                %308 = vst [vmem:[%s274 + $0x80] sm:$0xff] %v307
                %v309 = vld [vmem:[%s273 + $0x108] sm:$0xff]
                %310 = vst [vmem:[%s274 + $0x88] sm:$0xff] %v309
                %v311 = vld [vmem:[%s273 + $0x120] sm:$0xff]
                %312 = vst [vmem:[%s274 + $0x90] sm:$0xff] %v311
                %v313 = vld [vmem:[%s273 + $0x128] sm:$0xff]
                %314 = vst [vmem:[%s274 + $0x98] sm:$0xff] %v313
                %v315 = vld [vmem:[%s273 + $0x140] sm:$0xff]
                %316 = vst [vmem:[%s274 + $0xa0] sm:$0xff] %v315
                %v317 = vld [vmem:[%s273 + $0x148] sm:$0xff]
                %318 = vst [vmem:[%s274 + $0xa8] sm:$0xff] %v317
                %v319 = vld [vmem:[%s273 + $0x160] sm:$0xff]
                %320 = vst [vmem:[%s274 + $0xb0] sm:$0xff] %v319
                %v321 = vld [vmem:[%s273 + $0x168] sm:$0xff]
                %322 = vst [vmem:[%s274 + $0xb8] sm:$0xff] %v321
                %v323 = vld [vmem:[%s273 + $0x180] sm:$0xff]
                %324 = vst [vmem:[%s274 + $0xc0] sm:$0xff] %v323
                %v325 = vld [vmem:[%s273 + $0x188] sm:$0xff]
                %326 = vst [vmem:[%s274 + $0xc8] sm:$0xff] %v325
                %v327 = vld [vmem:[%s273 + $0x1a0] sm:$0xff]
                %328 = vst [vmem:[%s274 + $0xd0] sm:$0xff] %v327
                %v329 = vld [vmem:[%s273 + $0x1a8] sm:$0xff]
                %330 = vst [vmem:[%s274 + $0xd8] sm:$0xff] %v329
                %v331 = vld [vmem:[%s273 + $0x1c0] sm:$0xff]
                %332 = vst [vmem:[%s274 + $0xe0] sm:$0xff] %v331
                %v333 = vld [vmem:[%s273 + $0x1c8] sm:$0xff]
                %334 = vst [vmem:[%s274 + $0xe8] sm:$0xff] %v333
                %v335 = vld [vmem:[%s273 + $0x1e0] sm:$0xff]
                %336 = vst [vmem:[%s274 + $0xf0] sm:$0xff] %v335
                %v337 = vld [vmem:[%s273 + $0x1e8] sm:$0xff]
                %338 = vst [vmem:[%s274 + $0xf8] sm:$0xff] %v337
              $region49: #{transformer_decoder_forward.6} parent=43 // loop_footer
                %s272 = sadd.s32 1, %s268
              $region50: #{transformer_decoder_forward.6} parent=43 // loop_footer_branch
                %267 = sbr.rel target = $region46
              $region51: #{transformer_decoder_forward.6} parent=43 // loop_exit
                _
            $region44: #{transformer_decoder_forward.6} parent=39 // pred_fallthru
              _
            // Predicated region
            $region52: #{transformer_decoder_forward.6} parent=39 // pred_check
              _
            $region53: #{transformer_decoder_forward.6} parent=39 // pred_check_branch
              %340 = sbr.rel target = $region55
            $region54: #{transformer_decoder_forward.6} parent=39 // pred_region
              _
            $region55: #{transformer_decoder_forward.6} parent=39 // pred_fallthru
              _
          $region40: #{transformer_decoder_forward.6} parent=35 // pred_fallthru
            _
          %341 = vnop
        $region36: #{transformer_decoder_forward.6} parent=27 // pred_fallthru
          _
        // Predicated region
        $region56: #{transformer_decoder_forward.6} parent=27 // pred_check
          %p342 = pneg %p139
        $region57: #{transformer_decoder_forward.6} parent=27 // pred_check_branch
          %344 = sbr.rel (%p342) target = $region59
        $region58: #{transformer_decoder_forward.6} parent=27 // pred_region
          %s345 = smul.u32 2, %s21
          %p346 = scmp.lt.s32.totalorder %s345, 3
          %s347 = scalar_select %p346, %s345, 3
          %s348 = scalar_lea.vmem %s4, %s347
          %s349 = smul.u32 2, %s21
        $region59: #{transformer_decoder_forward.6} parent=27 // pred_fallthru
          _
        // Predicated region
        $region60: #{transformer_decoder_forward.6} parent=27 // pred_check
          %p350 = pneg %p165
        $region61: #{transformer_decoder_forward.6} parent=27 // pred_check_branch
          %352 = sbr.rel (%p350) target = $region63
        $region62: #{transformer_decoder_forward.6} parent=27 // pred_region
          %s353 = smul.u32 32, %s21
          %p354 = scmp.lt.s32.totalorder %s353, 63
          %s355 = scalar_select %p354, %s353, 63
          %s356 = smul.addr %s355, 8
          %s357 = scalar_lea.vmem %s5, %s356
          %s358 = smul.u32 32, %s21
        $region63: #{transformer_decoder_forward.6} parent=27 // pred_fallthru
          _
      $region28: #{transformer_decoder_forward.6} parent=5 // pred_fallthru
        _
      %p359 = scmp.le.s32.totalorder 1, %s13
      %p360 = scmp.lt.s32.totalorder %s13, 9
      %p361 = pnand %p359, %p360
      %p362 = pneg %p361
      // Predicated region
      $region64: #{transformer_decoder_forward.6} parent=5 // pred_check
        _
      $region65: #{transformer_decoder_forward.6} parent=5 // pred_check_branch
        %364 = sbr.rel (%p361) target = $region67
      $region66: #{transformer_decoder_forward.6} parent=5 // pred_region
        %s365 = ssub.s32 %s13, 1
        %s366 = sand.u32 %s106, 1
        %s367 = sand.u32 %s106, 1
        %s368 = smul.addr %s367, 256
        %s369 = scalar_lea.vmem [#allocation3], %s368
        // Predicated region
        $region68: #{transformer_decoder_forward.6} parent=66 // pred_check
          %p370 = pneg %p119
        $region69: #{transformer_decoder_forward.6} parent=66 // pred_check_branch
          %372 = sbr.rel (%p370) target = $region71
        $region70: #{transformer_decoder_forward.6} parent=66 // pred_region
          _
        $region71: #{transformer_decoder_forward.6} parent=66 // pred_fallthru
          _
        %p373 = scmp.lt.s32.totalorder %s22, 3
        %s374 = scalar_select %p373, %s22, 3
        %s375 = smul.addr %s374, 8
        %s376 = scalar_lea.vmem %s0, %s375
        %p377 = pneg %p51
        %p378 = pneg %p48
        %p379 = pneg %p72
        %p380 = pneg %p69
        %p381 = pneg %p93
        %p382 = pneg %p90
        %s383 = sand.u32 %s106, 1
        %s384 = sand.u32 %s106, 1
        %s385 = smul.addr %s384, 256
        %s386 = scalar_lea.vmem [#allocation3], %s385
        %p387 = pneg %p119
        %p388 = pneg %p116
        %s389 = smul.u32 2, %s23
        %p390 = scmp.lt.s32.totalorder %s389, 3
        %s391 = scalar_select %p390, %s389, 3
        %s392 = scalar_lea.vmem %s4, %s391
        %p393 = pneg %p145
        %p394 = pneg %p142
        %s395 = smul.u32 32, %s23
        %p396 = scmp.lt.s32.totalorder %s395, 63
        %s397 = scalar_select %p396, %s395, 63
        %s398 = smul.addr %s397, 8
        %s399 = scalar_lea.vmem %s5, %s398
        %p400 = pneg %p171
        %p401 = pneg %p168
        %p402 = pneg %p192
        %p403 = pneg %p189
        %p404 = pneg %p218
        %p405 = pneg %p215
        %p406 = scmp.lt.s32.totalorder %s22, 3
        %s407 = scalar_select %p406, %s22, 3
        %s408 = smul.addr %s407, 8
        %s409 = scalar_lea.vmem %s7, %s408
        %p410 = scmp.lt.s32.totalorder %s22, 3
        %s411 = scalar_select %p410, %s22, 3
        %s412 = smul.addr %s411, 8
        %s413 = scalar_lea.vmem %s0, %s412
        %s414 = smul.u32 2, %s23
        %s415 = smul.u32 2, %s23
        %p416 = scmp.lt.s32.totalorder %s415, 3
        %s417 = scalar_select %p416, %s415, 3
        %s418 = scalar_lea.vmem %s4, %s417
        %s419 = smul.u32 2, %s23
        %s420 = smul.u32 32, %s23
        %p421 = scmp.lt.s32.totalorder %s420, 63
        %s422 = scalar_select %p421, %s420, 63
        %s423 = smul.addr %s422, 8
        %s424 = scalar_lea.vmem %s5, %s423
        %s425 = smul.u32 32, %s23
        %p426 = scmp.lt.s32.totalorder %s22, 3
        %s427 = scalar_select %p426, %s22, 3
        %s428 = smul.addr %s427, 8
        %s429 = scalar_lea.vmem %s7, %s428
        %p430 = scmp.eq.s32.totalorder %s23, 0
        // Predicated region
        $region72: #{transformer_decoder_forward.6} parent=66 // pred_check
          %p431 = pneg %p430
        $region73: #{transformer_decoder_forward.6} parent=66 // pred_check_branch
          %433 = sbr.rel (%p431) target = $region75
        $region74: #{transformer_decoder_forward.6} parent=66 // pred_region
          %v434 = vld [vmem:[%s413] sm:$0xff]
          %v435 = vld [vmem:[%s6] sm:$0x1]
          %v437 = vlaneseq
          %v438 = vshrl.u32 %v437, 7
          %v439 = vsub.s32 0, %v438
          %v440 = vrot.slane %v435, %v439
          %v442 = vadd.f32 %v434, %v440
          %443 = vst [vmem:[%s429] sm:$0xff] %v442
          %v444 = vld [vmem:[%s1] sm:$0x1]
          %v445 = vld [vmem:[%s2] sm:$0x1]
          %446 = vadd.xlane.f32.xlu0 %v434
          %v447 = vpop.xlane.xlu0 %446
          %v448 = vrcp.pop 128.0
          %v449 = vmul.f32 %v447, %v448
          %v450 = vsub.f32 %v434, %v449
          %v451 = vmul.f32 %v450, %v450
          %452 = vadd.xlane.f32.xlu0 %v451
          %v453 = vpop.xlane.xlu0 %452
          %v454 = vmul.f32 %v453, %v448
          %v455 = vadd.f32 %v454, 1e-05
          %v456 = vrsqrt.pop %v455
          %v457 = vmul.f32 %v450, %v456
          %v459 = vlaneseq
          %v460 = vshrl.u32 %v459, 7
          %v461 = vsub.s32 0, %v460
          %v462 = vrot.slane %v444, %v461
          %v464 = vmul.f32 %v457, %v462
          %v466 = vlaneseq
          %v467 = vshrl.u32 %v466, 7
          %v468 = vsub.s32 0, %v467
          %v469 = vrot.slane %v445, %v468
          %v471 = vadd.f32 %v464, %v469
          %472 = vst [vmem:[#allocation2] sm:$0xff] %v471
        $region75: #{transformer_decoder_forward.6} parent=66 // pred_fallthru
          _
        %v473 = vld [vmem:[#allocation2] sm:$0xff]
        %v474 = vld [vmem:[%s369] sm:$0xff]
        %v475 = vld [vmem:[%s369 + $0x8] sm:$0xff]
        %v476 = vld [vmem:[%s369 + $0x10] sm:$0xff]
        %v477 = vld [vmem:[%s369 + $0x18] sm:$0xff]
        %v478 = vld [vmem:[%s369 + $0x20] sm:$0xff]
        %v479 = vld [vmem:[%s369 + $0x28] sm:$0xff]
        %v480 = vld [vmem:[%s369 + $0x30] sm:$0xff]
        %v481 = vld [vmem:[%s369 + $0x38] sm:$0xff]
        %v482 = vld [vmem:[%s369 + $0x40] sm:$0xff]
        %v483 = vld [vmem:[%s369 + $0x48] sm:$0xff]
        %v484 = vld [vmem:[%s369 + $0x50] sm:$0xff]
        %v485 = vld [vmem:[%s369 + $0x58] sm:$0xff]
        %v486 = vld [vmem:[%s369 + $0x60] sm:$0xff]
        %v487 = vld [vmem:[%s369 + $0x68] sm:$0xff]
        %v488 = vld [vmem:[%s369 + $0x70] sm:$0xff]
        %v489 = vld [vmem:[%s369 + $0x78] sm:$0xff]
        %v490 = vld [vmem:[%s369 + $0x80] sm:$0xff]
        %v491 = vld [vmem:[%s369 + $0x88] sm:$0xff]
        %v492 = vld [vmem:[%s369 + $0x90] sm:$0xff]
        %v493 = vld [vmem:[%s369 + $0x98] sm:$0xff]
        %v494 = vld [vmem:[%s369 + $0xa0] sm:$0xff]
        %v495 = vld [vmem:[%s369 + $0xa8] sm:$0xff]
        %v496 = vld [vmem:[%s369 + $0xb0] sm:$0xff]
        %v497 = vld [vmem:[%s369 + $0xb8] sm:$0xff]
        %v498 = vld [vmem:[%s369 + $0xc0] sm:$0xff]
        %v499 = vld [vmem:[%s369 + $0xc8] sm:$0xff]
        %v500 = vld [vmem:[%s369 + $0xd0] sm:$0xff]
        %v501 = vld [vmem:[%s369 + $0xd8] sm:$0xff]
        %v502 = vld [vmem:[%s369 + $0xe0] sm:$0xff]
        %v503 = vld [vmem:[%s369 + $0xe8] sm:$0xff]
        %v504 = vld [vmem:[%s369 + $0xf0] sm:$0xff]
        %v505 = vld [vmem:[%s369 + $0xf8] sm:$0xff]
        %v506 = vld [vmem:[%s418] sm:$0x3]
        %v508 = vlaneseq
        %v509 = vshrl.u32 %v508, 7
        %v510 = vsub.s32 0, %v509
        %v511 = vrot.slane %v506, %v510
        %v512 = vlaneseq
        %v513 = vshrl.u32 %v512, 7
        %v514 = vsub.s32 1, %v513
        %v515 = vrot.slane %v506, %v514
        %518 = vmatprep.subr.mxu0 %v475
        %519 = vmatpush1.msra.mxu0 %v474
        %520 = vmatprep.subr.mxu0 %v477
        %521 = vmatpush1.msra.mxu0 %v476
        %522 = vmatprep.subr.mxu0 %v479
        %523 = vmatpush1.msra.mxu0 %v478
        %524 = vmatprep.subr.mxu0 %v481
        %525 = vmatpush1.msra.mxu0 %v480
        %526 = vmatprep.subr.mxu0 %v483
        %527 = vmatpush1.msra.mxu0 %v482
        %528 = vmatprep.subr.mxu0 %v485
        %529 = vmatpush1.msra.mxu0 %v484
        %530 = vmatprep.subr.mxu0 %v487
        %531 = vmatpush1.msra.mxu0 %v486
        %532 = vmatprep.subr.mxu0 %v489
        %533 = vmatpush1.msra.mxu0 %v488
        %534 = vmatprep.subr.mxu0 %v491
        %535 = vmatpush1.msra.mxu0 %v490
        %536 = vmatprep.subr.mxu0 %v493
        %537 = vmatpush1.msra.mxu0 %v492
        %538 = vmatprep.subr.mxu0 %v495
        %539 = vmatpush1.msra.mxu0 %v494
        %540 = vmatprep.subr.mxu0 %v497
        %541 = vmatpush1.msra.mxu0 %v496
        %542 = vmatprep.subr.mxu0 %v499
        %543 = vmatpush1.msra.mxu0 %v498
        %544 = vmatprep.subr.mxu0 %v501
        %545 = vmatpush1.msra.mxu0 %v500
        %546 = vmatprep.subr.mxu0 %v503
        %547 = vmatpush1.msra.mxu0 %v502
        %548 = vmatprep.subr.mxu0 %v505
        %549 = vmatpush1.msra.mxu0 %v504
        %550 = vmatprep.subr.mxu0 0.0
        %551 = vmatpush1.msra.mxu0 0.0
        %552 = vmatprep.subr.mxu0 0.0
        %553 = vmatpush1.msra.mxu0 0.0
        %554 = vmatprep.subr.mxu0 0.0
        %555 = vmatpush1.msra.mxu0 0.0
        %556 = vmatprep.subr.mxu0 0.0
        %557 = vmatpush1.msra.mxu0 0.0
        %558 = vmatprep.subr.mxu0 0.0
        %559 = vmatpush1.msra.mxu0 0.0
        %560 = vmatprep.subr.mxu0 0.0
        %561 = vmatpush1.msra.mxu0 0.0
        %562 = vmatprep.subr.mxu0 0.0
        %563 = vmatpush1.msra.mxu0 0.0
        %564 = vmatprep.subr.mxu0 0.0
        %565 = vmatpush1.msra.mxu0 0.0
        %566 = vmatprep.subr.mxu0 0.0
        %567 = vmatpush1.msra.mxu0 0.0
        %568 = vmatprep.subr.mxu0 0.0
        %569 = vmatpush1.msra.mxu0 0.0
        %570 = vmatprep.subr.mxu0 0.0
        %571 = vmatpush1.msra.mxu0 0.0
        %572 = vmatprep.subr.mxu0 0.0
        %573 = vmatpush1.msra.mxu0 0.0
        %574 = vmatprep.subr.mxu0 0.0
        %575 = vmatpush1.msra.mxu0 0.0
        %576 = vmatprep.subr.mxu0 0.0
        %577 = vmatpush1.msra.mxu0 0.0
        %578 = vmatprep.subr.mxu0 0.0
        %579 = vmatpush1.msra.mxu0 0.0
        %580 = vmatprep.subr.mxu0 0.0
        %581 = vmatpush1.msra.mxu0 0.0
        %582 = vmatprep.mubr.f32.mxu0 0.0
        %583 = vmatmul.mubr.f32.gmra.mrb[0].mxu0 %v473
        %v584 = vpop.f32.mrb[0].mxu0
        %v585 = vadd.f32 %v511, %v584
        %v586 = vpop.f32.mrb[0].mxu0
        %v587 = vadd.f32 %v515, %v586
        %588 = vdwg.mxu0
        %v589 = vmax.f32 %v585, 0.0
        %v590 = vmax.f32 %v587, 0.0
        %v591 = vld [vmem:[%s429] sm:$0xff]
        %v592 = vld [vmem:[%s424] sm:$0xff]
        %v593 = vld [vmem:[%s424 + $0x8] sm:$0xff]
        %v594 = vld [vmem:[%s424 + $0x10] sm:$0xff]
        %v595 = vld [vmem:[%s424 + $0x18] sm:$0xff]
        %v596 = vld [vmem:[%s424 + $0x20] sm:$0xff]
        %v597 = vld [vmem:[%s424 + $0x28] sm:$0xff]
        %v598 = vld [vmem:[%s424 + $0x30] sm:$0xff]
        %v599 = vld [vmem:[%s424 + $0x38] sm:$0xff]
        %v600 = vld [vmem:[%s424 + $0x40] sm:$0xff]
        %v601 = vld [vmem:[%s424 + $0x48] sm:$0xff]
        %v602 = vld [vmem:[%s424 + $0x50] sm:$0xff]
        %v603 = vld [vmem:[%s424 + $0x58] sm:$0xff]
        %v604 = vld [vmem:[%s424 + $0x60] sm:$0xff]
        %v605 = vld [vmem:[%s424 + $0x68] sm:$0xff]
        %v606 = vld [vmem:[%s424 + $0x70] sm:$0xff]
        %v607 = vld [vmem:[%s424 + $0x78] sm:$0xff]
        %v608 = vld [vmem:[%s424 + $0x80] sm:$0xff]
        %v609 = vld [vmem:[%s424 + $0x88] sm:$0xff]
        %v610 = vld [vmem:[%s424 + $0x90] sm:$0xff]
        %v611 = vld [vmem:[%s424 + $0x98] sm:$0xff]
        %v612 = vld [vmem:[%s424 + $0xa0] sm:$0xff]
        %v613 = vld [vmem:[%s424 + $0xa8] sm:$0xff]
        %v614 = vld [vmem:[%s424 + $0xb0] sm:$0xff]
        %v615 = vld [vmem:[%s424 + $0xb8] sm:$0xff]
        %v616 = vld [vmem:[%s424 + $0xc0] sm:$0xff]
        %v617 = vld [vmem:[%s424 + $0xc8] sm:$0xff]
        %v618 = vld [vmem:[%s424 + $0xd0] sm:$0xff]
        %v619 = vld [vmem:[%s424 + $0xd8] sm:$0xff]
        %v620 = vld [vmem:[%s424 + $0xe0] sm:$0xff]
        %v621 = vld [vmem:[%s424 + $0xe8] sm:$0xff]
        %v622 = vld [vmem:[%s424 + $0xf0] sm:$0xff]
        %v623 = vld [vmem:[%s424 + $0xf8] sm:$0xff]
        %624 = vmatprep.subr.mxu0 0.0
        %625 = vmatpush1.msra.mxu0 %v592
        %626 = vmatprep.subr.mxu0 0.0
        %627 = vmatpush1.msra.mxu0 %v593
        %628 = vmatprep.subr.mxu0 0.0
        %629 = vmatpush1.msra.mxu0 %v594
        %630 = vmatprep.subr.mxu0 0.0
        %631 = vmatpush1.msra.mxu0 %v595
        %632 = vmatprep.subr.mxu0 0.0
        %633 = vmatpush1.msra.mxu0 %v596
        %634 = vmatprep.subr.mxu0 0.0
        %635 = vmatpush1.msra.mxu0 %v597
        %636 = vmatprep.subr.mxu0 0.0
        %637 = vmatpush1.msra.mxu0 %v598
        %638 = vmatprep.subr.mxu0 0.0
        %639 = vmatpush1.msra.mxu0 %v599
        %640 = vmatprep.subr.mxu0 0.0
        %641 = vmatpush1.msra.mxu0 %v600
        %642 = vmatprep.subr.mxu0 0.0
        %643 = vmatpush1.msra.mxu0 %v601
        %644 = vmatprep.subr.mxu0 0.0
        %645 = vmatpush1.msra.mxu0 %v602
        %646 = vmatprep.subr.mxu0 0.0
        %647 = vmatpush1.msra.mxu0 %v603
        %648 = vmatprep.subr.mxu0 0.0
        %649 = vmatpush1.msra.mxu0 %v604
        %650 = vmatprep.subr.mxu0 0.0
        %651 = vmatpush1.msra.mxu0 %v605
        %652 = vmatprep.subr.mxu0 0.0
        %653 = vmatpush1.msra.mxu0 %v606
        %654 = vmatprep.subr.mxu0 0.0
        %655 = vmatpush1.msra.mxu0 %v607
        %656 = vmatprep.subr.mxu0 0.0
        %657 = vmatpush1.msra.mxu0 %v608
        %658 = vmatprep.subr.mxu0 0.0
        %659 = vmatpush1.msra.mxu0 %v609
        %660 = vmatprep.subr.mxu0 0.0
        %661 = vmatpush1.msra.mxu0 %v610
        %662 = vmatprep.subr.mxu0 0.0
        %663 = vmatpush1.msra.mxu0 %v611
        %664 = vmatprep.subr.mxu0 0.0
        %665 = vmatpush1.msra.mxu0 %v612
        %666 = vmatprep.subr.mxu0 0.0
        %667 = vmatpush1.msra.mxu0 %v613
        %668 = vmatprep.subr.mxu0 0.0
        %669 = vmatpush1.msra.mxu0 %v614
        %670 = vmatprep.subr.mxu0 0.0
        %671 = vmatpush1.msra.mxu0 %v615
        %672 = vmatprep.subr.mxu0 0.0
        %673 = vmatpush1.msra.mxu0 %v616
        %674 = vmatprep.subr.mxu0 0.0
        %675 = vmatpush1.msra.mxu0 %v617
        %676 = vmatprep.subr.mxu0 0.0
        %677 = vmatpush1.msra.mxu0 %v618
        %678 = vmatprep.subr.mxu0 0.0
        %679 = vmatpush1.msra.mxu0 %v619
        %680 = vmatprep.subr.mxu0 0.0
        %681 = vmatpush1.msra.mxu0 %v620
        %682 = vmatprep.subr.mxu0 0.0
        %683 = vmatpush1.msra.mxu0 %v621
        %684 = vmatprep.subr.mxu0 0.0
        %685 = vmatpush1.msra.mxu0 %v622
        %686 = vmatprep.subr.mxu0 0.0
        %687 = vmatpush1.msra.mxu0 %v623
        %688 = vmatprep.mubr.f32.mxu0 %v590
        %689 = vmatmul.mubr.f32.gmra.mrb[0].mxu0 %v589
        %v690 = vpop.f32.mrb[0].mxu0
        %v691 = vadd.f32 0.0, %v690
        %v692 = vpop.f32.mrb[0].mxu0
        %693 = vdwg.mxu0
        %v694 = vadd.f32 %v591, %v691
        %695 = vst [vmem:[%s429] sm:$0xff] %v694
        %p696 = scmp.lt.s32.totalorder %s22, 3
        %s697 = scalar_select %p696, %s22, 3
        %s698 = smul.addr %s697, 8
        %s699 = scalar_lea.vmem %s7, %s698
        // Predicated region
        $region76: #{transformer_decoder_forward.6} parent=66 // pred_check
          %p700 = pneg %p215
        $region77: #{transformer_decoder_forward.6} parent=66 // pred_check_branch
          %702 = sbr.rel (%p700) target = $region79
        $region78: #{transformer_decoder_forward.6} parent=66 // pred_region
          _
        $region79: #{transformer_decoder_forward.6} parent=66 // pred_fallthru
          _
      $region67: #{transformer_decoder_forward.6} parent=5 // pred_fallthru
        _
      %p703 = scmp.le.s32.totalorder 2, %s13
      // Predicated region
      $region80: #{transformer_decoder_forward.6} parent=5 // pred_check
        %p704 = pneg %p703
      $region81: #{transformer_decoder_forward.6} parent=5 // pred_check_branch
        %706 = sbr.rel (%p704) target = $region83
      $region82: #{transformer_decoder_forward.6} parent=5 // pred_region
        %s707 = ssub.s32 %s13, 2
        // Predicated region
        $region84: #{transformer_decoder_forward.6} parent=82 // pred_check
          %p708 = pneg %p221
        $region85: #{transformer_decoder_forward.6} parent=82 // pred_check_branch
          %710 = sbr.rel (%p708) target = $region87
        $region86: #{transformer_decoder_forward.6} parent=82 // pred_region
          %p711 = scmp.lt.s32.totalorder %s24, 3
          %s712 = scalar_select %p711, %s24, 3
          %s713 = smul.addr %s712, 8
          %s714 = scalar_lea.vmem %s7, %s713
        $region87: #{transformer_decoder_forward.6} parent=82 // pred_fallthru
          _
      $region83: #{transformer_decoder_forward.6} parent=5 // pred_fallthru
        _
    $region6: #{transformer_decoder_forward.6} parent=1 // loop_footer
      %s17 = sadd.s32 1, %s13
    $region7: #{transformer_decoder_forward.6} parent=1 // loop_footer_branch
      %12 = sbr.rel target = $region3
    $region8: #{transformer_decoder_forward.6} parent=1 // loop_exit
      _

// kernel: transformer_decoder_forward.5
$region0: #{transformer_decoder_forward.5}
  #allocation0 [shape = 'u32[]', space=smem, size = 0x4, offset = 0x4, fixed_abs, tag = 'smem constant byte address 0x4 - core index']
  #allocation1 [shape = 'u32[144,128]{1,0:T(1,128)}', space=vmem, size = 0x12000, scoped, tag = 'internal scratch']
  #allocation2 [shape = 'f32[2,16,128]{2,1,0:T(8,128)}', space=vmem, size = 0x4000, scoped, tag = 'scratch operand']
  %s0 = inlined_call_operand.vmem [shape: f32[2,16,128], index: 0, kind: input, shape index: {}]
  %s1 = inlined_call_operand.vmem [shape: f32[1,128], index: 1, kind: input, shape index: {}]
  %s2 = inlined_call_operand.vmem [shape: f32[1,128], index: 2, kind: input, shape index: {}]
  %s3 = inlined_call_operand.hbm [shape: f32[2,128,384], index: 3, kind: input, shape index: {}]
  %s4 = inlined_call_operand.vmem [shape: f32[2,128,128], index: 4, kind: input, shape index: {}]
  %s5 = inlined_call_operand.vmem [shape: f32[1,128], index: 5, kind: input, shape index: {}]
  %s6 = inlined_call_operand.vmem [shape: f32[2,16,128], index: 6, kind: output, shape index: {}]
  %s7 = sld [smem:[#allocation0]]
  $region65: #{transformer_decoder_forward.5} parent=0
    _
  %s9 = ssub.s32 1, %s7
  %s10 = scalar_select 0, %s9, %s7
  $region1: #{transformer_decoder_forward.5} parent=0
    #allocation3 [shape = 'u8[393216]{0}', space=vmem, size = 0x60000, scoped, tag = 'input window, operand 3']
    #allocation4 [shape = 's32[2]{0}', space=sflag, size = 0x8, scoped, tag = 'scoped memory for transformer_decoder_forward.5']
    %11 = vsyncpa [#allocation4], 0
    %s12 = scalar_lea.sflag [#allocation4], 1
    %13 = vsyncpa %s12, 0
    loop: start=0, step=1, limit=4
    $region2: #{transformer_decoder_forward.5} parent=1 // loop_pre_header
      _
    $region3: #{transformer_decoder_forward.5} parent=1 // loop_header
      %s15 = sphi 0, %s19
      %p16 = scmp.ge.s32.totalorder %s15, 4
      %s22 = sphi 0, %s34
      %s23 = sphi 0, %s30
      %s24 = sphi 0, %s22
      %s25 = sphi 0, %s23
      %s26 = sphi 0, %s24
      %s27 = sphi 0, %s25
      %s37 = sphi 0, %s39
      %s40 = sphi 0, %s37
      %s41 = sphi 0, %s40
      %s57 = sphi 0, %s41
      %s61 = sphi 0, %s61
      %s63 = sphi 0, %s61
      %s64 = sphi 0, %s63
      %s78 = sphi 0, %s64
      %s82 = sphi 0, %s82
      %s84 = sphi 0, %s82
      %s85 = sphi 0, %s84
      %s99 = sphi 0, %s85
      %s105 = sphi 0, %s107
      %s108 = sphi 0, %s105
      %s109 = sphi 0, %s108
      %s125 = sphi 0, %s109
      %s131 = sphi 0, %s133
      %s134 = sphi 0, %s131
      %s135 = sphi 0, %s134
      %s151 = sphi 0, %s135
      %s155 = sphi 0, %s155
      %s157 = sphi 0, %s155
      %s158 = sphi 0, %s157
      %s172 = sphi 0, %s158
      %s178 = sphi 0, %s180
      %s181 = sphi 0, %s178
      %s182 = sphi 0, %s181
      %s198 = sphi 0, %s182
    $region4: #{transformer_decoder_forward.5} parent=1 // loop_header_branch
      %18 = sbr.rel (%p16) target = $region8
    $region5: #{transformer_decoder_forward.5} parent=1 // loop_body
      %s20 = ssub.s32 %s15, 1
      %s21 = ssub.s32 %s15, 2
      %s28 = sadd.s32 1, %s23
      %p29 = scmp.ge.s32.totalorder %s28, 2
      %s30 = scalar_select %p29, 0, %s28
      %s31 = sadd.s32 1, %s22
      %s32 = scalar_select %p29, %s31, %s22
      %p33 = scmp.ge.s32.totalorder %s32, 1
      %s34 = scalar_select %p33, 0, %s32
      %s35 = ssub.s32 %s22, %s34
      %p36 = scmp.eq.s32.totalorder %s35, 0
      %s38 = sadd.s32 %s37, 1
      %s39 = scalar_select %p36, %s37, %s38
      %p42 = pneg %p36
      %p43 = scmp.eq.s32.totalorder %s15, 1
      %p44 = por %p42, %p43
      %p45 = scmp.ne.s32.totalorder %s37, %s40
      %p46 = scmp.eq.s32.totalorder %s15, 0
      %p47 = por %p45, %p46
      %p48 = scmp.ne.s32.totalorder %s37, %s40
      %p49 = scmp.eq.s32.totalorder %s20, 1
      %p50 = por %p48, %p49
      %p51 = scmp.ne.s32.totalorder %s40, %s41
      %p52 = scmp.eq.s32.totalorder %s20, 0
      %p53 = por %p51, %p52
      %p54 = scmp.ne.s32.totalorder %s40, %s41
      %p55 = scmp.eq.s32.totalorder %s21, 1
      %p56 = por %p54, %p55
      %p58 = scmp.ne.s32.totalorder %s41, %s57
      %p59 = scmp.eq.s32.totalorder %s21, 0
      %p60 = por %p58, %p59
      %s62 = sadd.s32 %s61, 1
      %p65 = scmp.eq.s32.totalorder %s15, 1
      %p66 = scmp.ne.s32.totalorder %s61, %s63
      %p67 = scmp.eq.s32.totalorder %s15, 0
      %p68 = por %p66, %p67
      %p69 = scmp.ne.s32.totalorder %s61, %s63
      %p70 = scmp.eq.s32.totalorder %s20, 1
      %p71 = por %p69, %p70
      %p72 = scmp.ne.s32.totalorder %s63, %s64
      %p73 = scmp.eq.s32.totalorder %s20, 0
      %p74 = por %p72, %p73
      %p75 = scmp.ne.s32.totalorder %s63, %s64
      %p76 = scmp.eq.s32.totalorder %s21, 1
      %p77 = por %p75, %p76
      %p79 = scmp.ne.s32.totalorder %s64, %s78
      %p80 = scmp.eq.s32.totalorder %s21, 0
      %p81 = por %p79, %p80
      %s83 = sadd.s32 %s82, 1
      %p86 = scmp.eq.s32.totalorder %s15, 1
      %p87 = scmp.ne.s32.totalorder %s82, %s84
      %p88 = scmp.eq.s32.totalorder %s15, 0
      %p89 = por %p87, %p88
      %p90 = scmp.ne.s32.totalorder %s82, %s84
      %p91 = scmp.eq.s32.totalorder %s20, 1
      %p92 = por %p90, %p91
      %p93 = scmp.ne.s32.totalorder %s84, %s85
      %p94 = scmp.eq.s32.totalorder %s20, 0
      %p95 = por %p93, %p94
      %p96 = scmp.ne.s32.totalorder %s84, %s85
      %p97 = scmp.eq.s32.totalorder %s21, 1
      %p98 = por %p96, %p97
      %p100 = scmp.ne.s32.totalorder %s85, %s99
      %p101 = scmp.eq.s32.totalorder %s21, 0
      %p102 = por %p100, %p101
      %s103 = ssub.s32 %s23, %s30
      %p104 = scmp.eq.s32.totalorder %s103, 0
      %s106 = sadd.s32 %s105, 1
      %s107 = scalar_select %p104, %s105, %s106
      %p110 = pneg %p104
      %p111 = scmp.eq.s32.totalorder %s15, 1
      %p112 = por %p110, %p111
      %p113 = scmp.ne.s32.totalorder %s105, %s108
      %p114 = scmp.eq.s32.totalorder %s15, 0
      %p115 = por %p113, %p114
      %p116 = scmp.ne.s32.totalorder %s105, %s108
      %p117 = scmp.eq.s32.totalorder %s20, 1
      %p118 = por %p116, %p117
      %p119 = scmp.ne.s32.totalorder %s108, %s109
      %p120 = scmp.eq.s32.totalorder %s20, 0
      %p121 = por %p119, %p120
      %p122 = scmp.ne.s32.totalorder %s108, %s109
      %p123 = scmp.eq.s32.totalorder %s21, 1
      %p124 = por %p122, %p123
      %p126 = scmp.ne.s32.totalorder %s109, %s125
      %p127 = scmp.eq.s32.totalorder %s21, 0
      %p128 = por %p126, %p127
      %s129 = ssub.s32 %s23, %s30
      %p130 = scmp.eq.s32.totalorder %s129, 0
      %s132 = sadd.s32 %s131, 1
      %s133 = scalar_select %p130, %s131, %s132
      %p136 = pneg %p130
      %p137 = scmp.eq.s32.totalorder %s15, 1
      %p138 = por %p136, %p137
      %p139 = scmp.ne.s32.totalorder %s131, %s134
      %p140 = scmp.eq.s32.totalorder %s15, 0
      %p141 = por %p139, %p140
      %p142 = scmp.ne.s32.totalorder %s131, %s134
      %p143 = scmp.eq.s32.totalorder %s20, 1
      %p144 = por %p142, %p143
      %p145 = scmp.ne.s32.totalorder %s134, %s135
      %p146 = scmp.eq.s32.totalorder %s20, 0
      %p147 = por %p145, %p146
      %p148 = scmp.ne.s32.totalorder %s134, %s135
      %p149 = scmp.eq.s32.totalorder %s21, 1
      %p150 = por %p148, %p149
      %p152 = scmp.ne.s32.totalorder %s135, %s151
      %p153 = scmp.eq.s32.totalorder %s21, 0
      %p154 = por %p152, %p153
      %s156 = sadd.s32 %s155, 1
      %p159 = scmp.eq.s32.totalorder %s15, 1
      %p160 = scmp.ne.s32.totalorder %s155, %s157
      %p161 = scmp.eq.s32.totalorder %s15, 0
      %p162 = por %p160, %p161
      %p163 = scmp.ne.s32.totalorder %s155, %s157
      %p164 = scmp.eq.s32.totalorder %s20, 1
      %p165 = por %p163, %p164
      %p166 = scmp.ne.s32.totalorder %s157, %s158
      %p167 = scmp.eq.s32.totalorder %s20, 0
      %p168 = por %p166, %p167
      %p169 = scmp.ne.s32.totalorder %s157, %s158
      %p170 = scmp.eq.s32.totalorder %s21, 1
      %p171 = por %p169, %p170
      %p173 = scmp.ne.s32.totalorder %s158, %s172
      %p174 = scmp.eq.s32.totalorder %s21, 0
      %p175 = por %p173, %p174
      %s176 = ssub.s32 %s22, %s34
      %p177 = scmp.eq.s32.totalorder %s176, 0
      %s179 = sadd.s32 %s178, 1
      %s180 = scalar_select %p177, %s178, %s179
      %p183 = pneg %p177
      %p184 = scmp.eq.s32.totalorder %s15, 1
      %p185 = por %p183, %p184
      %p186 = scmp.ne.s32.totalorder %s178, %s181
      %p187 = scmp.eq.s32.totalorder %s15, 0
      %p188 = por %p186, %p187
      %p189 = scmp.ne.s32.totalorder %s178, %s181
      %p190 = scmp.eq.s32.totalorder %s20, 1
      %p191 = por %p189, %p190
      %p192 = scmp.ne.s32.totalorder %s181, %s182
      %p193 = scmp.eq.s32.totalorder %s20, 0
      %p194 = por %p192, %p193
      %p195 = scmp.ne.s32.totalorder %s181, %s182
      %p196 = scmp.eq.s32.totalorder %s21, 1
      %p197 = por %p195, %p196
      %p199 = scmp.ne.s32.totalorder %s182, %s198
      %p200 = scmp.eq.s32.totalorder %s21, 0
      %p201 = por %p199, %p200
      %p202 = scmp.le.s32.totalorder 1, %s15
      %p203 = scmp.lt.s32.totalorder %s15, 3
      %p204 = pnand %p202, %p203
      %p205 = pneg %p204
      // Predicated region
      $region9: #{transformer_decoder_forward.5} parent=5 // pred_check
        _
      $region10: #{transformer_decoder_forward.5} parent=5 // pred_check_branch
        %207 = sbr.rel (%p204) target = $region12
      $region11: #{transformer_decoder_forward.5} parent=5 // pred_region
        %s208 = ssub.s32 %s15, 1
        // Predicated region
        $region13: #{transformer_decoder_forward.5} parent=11 // pred_check
          %p209 = pneg %p53
        $region14: #{transformer_decoder_forward.5} parent=11 // pred_check_branch
          %211 = sbr.rel (%p209) target = $region16
        $region15: #{transformer_decoder_forward.5} parent=11 // pred_region
          %s212 = smul.u32 2, %s24
          %p213 = scmp.lt.s32.totalorder %s212, 1
          %s214 = scalar_select %p213, %s212, 1
          %s215 = smul.addr %s214, 2
          %s216 = smul.addr %s215, 8
          %s217 = scalar_lea.vmem %s0, %s216
          %s218 = smul.u32 2, %s24
        $region16: #{transformer_decoder_forward.5} parent=11 // pred_fallthru
          _
        // Predicated region
        $region17: #{transformer_decoder_forward.5} parent=11 // pred_check
          %p219 = pneg %p74
        $region18: #{transformer_decoder_forward.5} parent=11 // pred_check_branch
          %221 = sbr.rel (%p219) target = $region20
        $region19: #{transformer_decoder_forward.5} parent=11 // pred_region
          _
        $region20: #{transformer_decoder_forward.5} parent=11 // pred_fallthru
          _
        // Predicated region
        $region21: #{transformer_decoder_forward.5} parent=11 // pred_check
          %p222 = pneg %p95
        $region22: #{transformer_decoder_forward.5} parent=11 // pred_check_branch
          %224 = sbr.rel (%p222) target = $region24
        $region23: #{transformer_decoder_forward.5} parent=11 // pred_region
          _
        $region24: #{transformer_decoder_forward.5} parent=11 // pred_fallthru
          _
        // Predicated region
        $region25: #{transformer_decoder_forward.5} parent=11 // pred_check
          %p225 = pneg %p168
        $region26: #{transformer_decoder_forward.5} parent=11 // pred_check_branch
          %227 = sbr.rel (%p225) target = $region28
        $region27: #{transformer_decoder_forward.5} parent=11 // pred_region
          _
        $region28: #{transformer_decoder_forward.5} parent=11 // pred_fallthru
          _
      $region12: #{transformer_decoder_forward.5} parent=5 // pred_fallthru
        _
      %p228 = scmp.lt.s32.totalorder %s15, 2
      // Predicated region
      $region29: #{transformer_decoder_forward.5} parent=5 // pred_check
        %p229 = pneg %p228
      $region30: #{transformer_decoder_forward.5} parent=5 // pred_check_branch
        %231 = sbr.rel (%p229) target = $region32
      $region31: #{transformer_decoder_forward.5} parent=5 // pred_region
        // Predicated region
        $region33: #{transformer_decoder_forward.5} parent=31 // pred_check
          %p232 = pneg %p115
        $region34: #{transformer_decoder_forward.5} parent=31 // pred_check_branch
          %234 = sbr.rel (%p232) target = $region36
        $region35: #{transformer_decoder_forward.5} parent=31 // pred_region
          %s235 = sand.u32 %s105, 1
          %s236 = scalar_lea.sflag [#allocation4], %s235
          %s237 = sand.u32 %s105, 1
          %s238 = smul.addr %s237, 384
          %s239 = scalar_lea.vmem [#allocation3], %s238
          %s241 = ssub.s32 6144, 6144
          %242 = vsyncadd %s236, %s241
          %s243 = smul.addr %s23, 48
          %s244 = smul.addr %s243, 128
          %s245 = scalar_lea.hbm %s3, %s244
          %s246 = sshll.u32 %s239, 4
          %s247 = int_to_ptr.vmem [resolvable:$true] %s246
          %252 = dma.hbm_to_vmem [thread:$0]  %s245, 6144, %s247, %s236, 384, 384, 24
        $region36: #{transformer_decoder_forward.5} parent=31 // pred_fallthru
          _
        // Predicated region
        $region37: #{transformer_decoder_forward.5} parent=31 // pred_check
          %p253 = pneg %p141
        $region38: #{transformer_decoder_forward.5} parent=31 // pred_check_branch
          %255 = sbr.rel (%p253) target = $region40
        $region39: #{transformer_decoder_forward.5} parent=31 // pred_region
          %p256 = scmp.lt.s32.totalorder %s23, 1
          %s257 = scalar_select %p256, %s23, 1
          %s258 = smul.addr %s257, 16
          %s259 = smul.addr %s258, 8
          %s260 = scalar_lea.vmem %s4, %s259
        $region40: #{transformer_decoder_forward.5} parent=31 // pred_fallthru
          _
      $region32: #{transformer_decoder_forward.5} parent=5 // pred_fallthru
        _
      %p261 = scmp.le.s32.totalorder 1, %s15
      %p262 = scmp.lt.s32.totalorder %s15, 3
      %p263 = pnand %p261, %p262
      %p264 = pneg %p263
      // Predicated region
      $region41: #{transformer_decoder_forward.5} parent=5 // pred_check
        _
      $region42: #{transformer_decoder_forward.5} parent=5 // pred_check_branch
        %266 = sbr.rel (%p263) target = $region44
      $region43: #{transformer_decoder_forward.5} parent=5 // pred_region
        %s267 = ssub.s32 %s15, 1
        %s268 = sand.u32 %s108, 1
        %s269 = scalar_lea.sflag [#allocation4], %s268
        %s270 = sand.u32 %s108, 1
        %s271 = smul.addr %s270, 384
        %s272 = scalar_lea.vmem [#allocation3], %s271
        // Predicated region
        $region45: #{transformer_decoder_forward.5} parent=43 // pred_check
          %p273 = pneg %p121
        $region46: #{transformer_decoder_forward.5} parent=43 // pred_check_branch
          %275 = sbr.rel (%p273) target = $region48
        $region47: #{transformer_decoder_forward.5} parent=43 // pred_region
          %276 = dma.done %s269, 6144
        $region48: #{transformer_decoder_forward.5} parent=43 // pred_fallthru
          _
        %s277 = smul.u32 2, %s24
        %p278 = scmp.lt.s32.totalorder %s277, 1
        %s279 = scalar_select %p278, %s277, 1
        %s280 = smul.addr %s279, 2
        %s281 = smul.addr %s280, 8
        %s282 = scalar_lea.vmem %s0, %s281
        %p283 = pneg %p53
        %p284 = pneg %p50
        %p285 = pneg %p74
        %p286 = pneg %p71
        %p287 = pneg %p95
        %p288 = pneg %p92
        %s289 = sand.u32 %s108, 1
        %s290 = scalar_lea.sflag [#allocation4], %s289
        %s291 = sand.u32 %s108, 1
        %s292 = smul.addr %s291, 384
        %s293 = scalar_lea.vmem [#allocation3], %s292
        %p294 = pneg %p121
        %p295 = pneg %p118
        %p296 = scmp.lt.s32.totalorder %s25, 1
        %s297 = scalar_select %p296, %s25, 1
        %s298 = smul.addr %s297, 16
        %s299 = smul.addr %s298, 8
        %s300 = scalar_lea.vmem %s4, %s299
        %p301 = pneg %p147
        %p302 = pneg %p144
        %p303 = pneg %p168
        %p304 = pneg %p165
        %p305 = pneg %p194
        %p306 = pneg %p191
        %s307 = smul.u32 2, %s24
        %p308 = scmp.lt.s32.totalorder %s307, 1
        %s309 = scalar_select %p308, %s307, 1
        %s310 = smul.addr %s309, 2
        %s311 = smul.addr %s310, 8
        %s312 = scalar_lea.vmem %s6, %s311
        %s313 = smul.u32 2, %s24
        %p314 = scmp.lt.s32.totalorder %s313, 1
        %s315 = scalar_select %p314, %s313, 1
        %s316 = smul.addr %s315, 2
        %s317 = smul.addr %s316, 8
        %s318 = scalar_lea.vmem %s0, %s317
        %s319 = smul.u32 2, %s24
        %p320 = scmp.lt.s32.totalorder %s25, 1
        %s321 = scalar_select %p320, %s25, 1
        %s322 = smul.addr %s321, 16
        %s323 = smul.addr %s322, 8
        %s324 = scalar_lea.vmem %s4, %s323
        %s325 = smul.u32 2, %s24
        %p326 = scmp.lt.s32.totalorder %s325, 1
        %s327 = scalar_select %p326, %s325, 1
        %s328 = smul.addr %s327, 2
        %s329 = smul.addr %s328, 8
        %s330 = scalar_lea.vmem %s6, %s329
        %s331 = smul.u32 2, %s24
        %p332 = scmp.eq.s32.totalorder %s25, 0
        // Predicated region
        $region49: #{transformer_decoder_forward.5} parent=43 // pred_check
          %p333 = pneg %p332
        $region50: #{transformer_decoder_forward.5} parent=43 // pred_check_branch
          %335 = sbr.rel (%p333) target = $region52
        $region51: #{transformer_decoder_forward.5} parent=43 // pred_region
          %v336 = vld [vmem:[%s318] sm:$0xff]
          %v337 = vld [vmem:[%s318 + $0x8] sm:$0xff]
          %v338 = vld [vmem:[%s318 + $0x10] sm:$0xff]
          %v339 = vld [vmem:[%s318 + $0x18] sm:$0xff]
          %v340 = vld [vmem:[%s5] sm:$0x1]
          %v342 = vlaneseq
          %v343 = vshrl.u32 %v342, 7
          %v344 = vsub.s32 0, %v343
          %v345 = vrot.slane %v340, %v344
          %v347 = vadd.f32 %v336, %v345
          %v348 = vadd.f32 %v337, %v345
          %v349 = vadd.f32 %v338, %v345
          %v350 = vadd.f32 %v339, %v345
          %351 = vst [vmem:[%s330] sm:$0xff] %v347
          %352 = vst [vmem:[%s330 + $0x8] sm:$0xff] %v348
          %353 = vst [vmem:[%s330 + $0x10] sm:$0xff] %v349
          %354 = vst [vmem:[%s330 + $0x18] sm:$0xff] %v350
          %v355 = vld [vmem:[%s1] sm:$0x1]
          %v356 = vld [vmem:[%s2] sm:$0x1]
          %357 = vadd.xlane.f32.xlu0 %v336
          %v358 = vpop.xlane.xlu0 %357
          %359 = vadd.xlane.f32.xlu0 %v337
          %v360 = vpop.xlane.xlu0 %359
          %361 = vadd.xlane.f32.xlu0 %v338
          %v362 = vpop.xlane.xlu0 %361
          %363 = vadd.xlane.f32.xlu0 %v339
          %v364 = vpop.xlane.xlu0 %363
          %v365 = vrcp.pop 128.0
          %v366 = vmul.f32 %v358, %v365
          %v367 = vmul.f32 %v360, %v365
          %v368 = vmul.f32 %v362, %v365
          %v369 = vmul.f32 %v364, %v365
          %v370 = vsub.f32 %v336, %v366
          %v371 = vsub.f32 %v337, %v367
          %v372 = vsub.f32 %v338, %v368
          %v373 = vsub.f32 %v339, %v369
          %v374 = vmul.f32 %v370, %v370
          %v375 = vmul.f32 %v371, %v371
          %v376 = vmul.f32 %v372, %v372
          %v377 = vmul.f32 %v373, %v373
          %378 = vadd.xlane.f32.xlu0 %v374
          %v379 = vpop.xlane.xlu0 %378
          %380 = vadd.xlane.f32.xlu0 %v375
          %v381 = vpop.xlane.xlu0 %380
          %382 = vadd.xlane.f32.xlu0 %v376
          %v383 = vpop.xlane.xlu0 %382
          %384 = vadd.xlane.f32.xlu0 %v377
          %v385 = vpop.xlane.xlu0 %384
          %v386 = vmul.f32 %v379, %v365
          %v387 = vmul.f32 %v381, %v365
          %v388 = vmul.f32 %v383, %v365
          %v389 = vmul.f32 %v385, %v365
          %v390 = vadd.f32 %v386, 1e-05
          %v391 = vadd.f32 %v387, 1e-05
          %v392 = vadd.f32 %v388, 1e-05
          %v393 = vadd.f32 %v389, 1e-05
          %v394 = vrsqrt.pop %v390
          %v395 = vrsqrt.pop %v391
          %v396 = vrsqrt.pop %v392
          %v397 = vrsqrt.pop %v393
          %v398 = vmul.f32 %v370, %v394
          %v399 = vmul.f32 %v371, %v395
          %v400 = vmul.f32 %v372, %v396
          %v401 = vmul.f32 %v373, %v397
          %v403 = vlaneseq
          %v404 = vshrl.u32 %v403, 7
          %v405 = vsub.s32 0, %v404
          %v406 = vrot.slane %v355, %v405
          %v408 = vmul.f32 %v398, %v406
          %v409 = vmul.f32 %v399, %v406
          %v410 = vmul.f32 %v400, %v406
          %v411 = vmul.f32 %v401, %v406
          %v413 = vlaneseq
          %v414 = vshrl.u32 %v413, 7
          %v415 = vsub.s32 0, %v414
          %v416 = vrot.slane %v356, %v415
          %v418 = vadd.f32 %v408, %v416
          %v419 = vadd.f32 %v409, %v416
          %v420 = vadd.f32 %v410, %v416
          %v421 = vadd.f32 %v411, %v416
          %422 = vst [vmem:[#allocation2] sm:$0xff] %v418
          %423 = vst [vmem:[#allocation2 + $0x8] sm:$0xff] %v419
          %424 = vst [vmem:[#allocation2 + $0x10] sm:$0xff] %v420
          %425 = vst [vmem:[#allocation2 + $0x18] sm:$0xff] %v421
        $region52: #{transformer_decoder_forward.5} parent=43 // pred_fallthru
          _
        %v426 = vld [vmem:[#allocation2] sm:$0xff]
        %v427 = vld [vmem:[#allocation2 + $0x8] sm:$0xff]
        %v428 = vld [vmem:[#allocation2 + $0x10] sm:$0xff]
        %v429 = vld [vmem:[#allocation2 + $0x18] sm:$0xff]
        %v430 = vld [vmem:[%s272] sm:$0xff]
        %v431 = vld [vmem:[%s272 + $0x8] sm:$0xff]
        %v432 = vld [vmem:[%s272 + $0x10] sm:$0xff]
        %v433 = vld [vmem:[%s272 + $0x18] sm:$0xff]
        %v434 = vld [vmem:[%s272 + $0x20] sm:$0xff]
        %v435 = vld [vmem:[%s272 + $0x28] sm:$0xff]
        %v436 = vld [vmem:[%s272 + $0x30] sm:$0xff]
        %v437 = vld [vmem:[%s272 + $0x38] sm:$0xff]
        %v438 = vld [vmem:[%s272 + $0x40] sm:$0xff]
        %v439 = vld [vmem:[%s272 + $0x48] sm:$0xff]
        %v440 = vld [vmem:[%s272 + $0x50] sm:$0xff]
        %v441 = vld [vmem:[%s272 + $0x58] sm:$0xff]
        %v442 = vld [vmem:[%s272 + $0x60] sm:$0xff]
        %v443 = vld [vmem:[%s272 + $0x68] sm:$0xff]
        %v444 = vld [vmem:[%s272 + $0x70] sm:$0xff]
        %v445 = vld [vmem:[%s272 + $0x78] sm:$0xff]
        %v446 = vld [vmem:[%s272 + $0x80] sm:$0xff]
        %v447 = vld [vmem:[%s272 + $0x88] sm:$0xff]
        %v448 = vld [vmem:[%s272 + $0x90] sm:$0xff]
        %v449 = vld [vmem:[%s272 + $0x98] sm:$0xff]
        %v450 = vld [vmem:[%s272 + $0xa0] sm:$0xff]
        %v451 = vld [vmem:[%s272 + $0xa8] sm:$0xff]
        %v452 = vld [vmem:[%s272 + $0xb0] sm:$0xff]
        %v453 = vld [vmem:[%s272 + $0xb8] sm:$0xff]
        %v454 = vld [vmem:[%s272 + $0xc0] sm:$0xff]
        %v455 = vld [vmem:[%s272 + $0xc8] sm:$0xff]
        %v456 = vld [vmem:[%s272 + $0xd0] sm:$0xff]
        %v457 = vld [vmem:[%s272 + $0xd8] sm:$0xff]
        %v458 = vld [vmem:[%s272 + $0xe0] sm:$0xff]
        %v459 = vld [vmem:[%s272 + $0xe8] sm:$0xff]
        %v460 = vld [vmem:[%s272 + $0xf0] sm:$0xff]
        %v461 = vld [vmem:[%s272 + $0xf8] sm:$0xff]
        %v462 = vld [vmem:[%s272 + $0x100] sm:$0xff]
        %v463 = vld [vmem:[%s272 + $0x108] sm:$0xff]
        %v464 = vld [vmem:[%s272 + $0x110] sm:$0xff]
        %v465 = vld [vmem:[%s272 + $0x118] sm:$0xff]
        %v466 = vld [vmem:[%s272 + $0x120] sm:$0xff]
        %v467 = vld [vmem:[%s272 + $0x128] sm:$0xff]
        %v468 = vld [vmem:[%s272 + $0x130] sm:$0xff]
        %v469 = vld [vmem:[%s272 + $0x138] sm:$0xff]
        %v470 = vld [vmem:[%s272 + $0x140] sm:$0xff]
        %v471 = vld [vmem:[%s272 + $0x148] sm:$0xff]
        %v472 = vld [vmem:[%s272 + $0x150] sm:$0xff]
        %v473 = vld [vmem:[%s272 + $0x158] sm:$0xff]
        %v474 = vld [vmem:[%s272 + $0x160] sm:$0xff]
        %v475 = vld [vmem:[%s272 + $0x168] sm:$0xff]
        %v476 = vld [vmem:[%s272 + $0x170] sm:$0xff]
        %v477 = vld [vmem:[%s272 + $0x178] sm:$0xff]
        %478 = vmatprep.subr.mxu0 %v431
        %479 = vmatpush1.msra.mxu0 %v430
        %480 = vmatprep.subr.mxu0 %v434
        %481 = vmatpush1.msra.mxu0 %v433
        %482 = vmatprep.subr.mxu0 %v437
        %483 = vmatpush1.msra.mxu0 %v436
        %484 = vmatprep.subr.mxu0 %v440
        %485 = vmatpush1.msra.mxu0 %v439
        %486 = vmatprep.subr.mxu0 %v443
        %487 = vmatpush1.msra.mxu0 %v442
        %488 = vmatprep.subr.mxu0 %v446
        %489 = vmatpush1.msra.mxu0 %v445
        %490 = vmatprep.subr.mxu0 %v449
        %491 = vmatpush1.msra.mxu0 %v448
        %492 = vmatprep.subr.mxu0 %v452
        %493 = vmatpush1.msra.mxu0 %v451
        %494 = vmatprep.subr.mxu0 %v455
        %495 = vmatpush1.msra.mxu0 %v454
        %496 = vmatprep.subr.mxu0 %v458
        %497 = vmatpush1.msra.mxu0 %v457
        %498 = vmatprep.subr.mxu0 %v461
        %499 = vmatpush1.msra.mxu0 %v460
        %500 = vmatprep.subr.mxu0 %v464
        %501 = vmatpush1.msra.mxu0 %v463
        %502 = vmatprep.subr.mxu0 %v467
        %503 = vmatpush1.msra.mxu0 %v466
        %504 = vmatprep.subr.mxu0 %v470
        %505 = vmatpush1.msra.mxu0 %v469
        %506 = vmatprep.subr.mxu0 %v473
        %507 = vmatpush1.msra.mxu0 %v472
        %508 = vmatprep.subr.mxu0 %v476
        %509 = vmatpush1.msra.mxu0 %v475
        %510 = vmatprep.subr.mxu0 0.0
        %511 = vmatpush1.msra.mxu0 0.0
        %512 = vmatprep.subr.mxu0 0.0
        %513 = vmatpush1.msra.mxu0 0.0
        %514 = vmatprep.subr.mxu0 0.0
        %515 = vmatpush1.msra.mxu0 0.0
        %516 = vmatprep.subr.mxu0 0.0
        %517 = vmatpush1.msra.mxu0 0.0
        %518 = vmatprep.subr.mxu0 0.0
        %519 = vmatpush1.msra.mxu0 0.0
        %520 = vmatprep.subr.mxu0 0.0
        %521 = vmatpush1.msra.mxu0 0.0
        %522 = vmatprep.subr.mxu0 0.0
        %523 = vmatpush1.msra.mxu0 0.0
        %524 = vmatprep.subr.mxu0 0.0
        %525 = vmatpush1.msra.mxu0 0.0
        %526 = vmatprep.subr.mxu0 0.0
        %527 = vmatpush1.msra.mxu0 0.0
        %528 = vmatprep.subr.mxu0 0.0
        %529 = vmatpush1.msra.mxu0 0.0
        %530 = vmatprep.subr.mxu0 0.0
        %531 = vmatpush1.msra.mxu0 0.0
        %532 = vmatprep.subr.mxu0 0.0
        %533 = vmatpush1.msra.mxu0 0.0
        %534 = vmatprep.subr.mxu0 0.0
        %535 = vmatpush1.msra.mxu0 0.0
        %536 = vmatprep.subr.mxu0 0.0
        %537 = vmatpush1.msra.mxu0 0.0
        %538 = vmatprep.subr.mxu0 0.0
        %539 = vmatpush1.msra.mxu0 0.0
        %540 = vmatprep.subr.mxu0 0.0
        %541 = vmatpush1.msra.mxu0 0.0
        %542 = vmatprep.mubr.f32.mxu0 0.0
        %543 = vmatmul.mubr.f32.gmra.mrb[0].mxu0 %v426
        %v544 = vpop.f32.mrb[0].mxu0
        %v545 = vadd.f32 0.0, %v544
        %v546 = vpop.f32.mrb[0].mxu0
        %v547 = vadd.f32 0.0, %v546
        %548 = vmatprep.mubr.f32.mxu0 0.0
        %549 = vmatmul.mubr.f32.gmra.mrb[0].mxu0 %v427
        %v550 = vpop.f32.mrb[0].mxu0
        %v551 = vadd.f32 0.0, %v550
        %v552 = vpop.f32.mrb[0].mxu0
        %v553 = vadd.f32 0.0, %v552
        %554 = vmatprep.mubr.f32.mxu0 0.0
        %555 = vmatmul.mubr.f32.gmra.mrb[0].mxu0 %v428
        %v556 = vpop.f32.mrb[0].mxu0
        %v557 = vadd.f32 0.0, %v556
        %v558 = vpop.f32.mrb[0].mxu0
        %v559 = vadd.f32 0.0, %v558
        %560 = vmatprep.mubr.f32.mxu0 0.0
        %561 = vmatmul.mubr.f32.gmra.mrb[0].mxu0 %v429
        %v562 = vpop.f32.mrb[0].mxu0
        %v563 = vadd.f32 0.0, %v562
        %v564 = vpop.f32.mrb[0].mxu0
        %v565 = vadd.f32 0.0, %v564
        %566 = vdwg.mxu0
        %567 = vmatprep.subr.mxu0 0.0
        %568 = vmatpush1.msra.mxu0 %v432
        %569 = vmatprep.subr.mxu0 0.0
        %570 = vmatpush1.msra.mxu0 %v435
        %571 = vmatprep.subr.mxu0 0.0
        %572 = vmatpush1.msra.mxu0 %v438
        %573 = vmatprep.subr.mxu0 0.0
        %574 = vmatpush1.msra.mxu0 %v441
        %575 = vmatprep.subr.mxu0 0.0
        %576 = vmatpush1.msra.mxu0 %v444
        %577 = vmatprep.subr.mxu0 0.0
        %578 = vmatpush1.msra.mxu0 %v447
        %579 = vmatprep.subr.mxu0 0.0
        %580 = vmatpush1.msra.mxu0 %v450
        %581 = vmatprep.subr.mxu0 0.0
        %582 = vmatpush1.msra.mxu0 %v453
        %583 = vmatprep.subr.mxu0 0.0
        %584 = vmatpush1.msra.mxu0 %v456
        %585 = vmatprep.subr.mxu0 0.0
        %586 = vmatpush1.msra.mxu0 %v459
        %587 = vmatprep.subr.mxu0 0.0
        %588 = vmatpush1.msra.mxu0 %v462
        %589 = vmatprep.subr.mxu0 0.0
        %590 = vmatpush1.msra.mxu0 %v465
        %591 = vmatprep.subr.mxu0 0.0
        %592 = vmatpush1.msra.mxu0 %v468
        %593 = vmatprep.subr.mxu0 0.0
        %594 = vmatpush1.msra.mxu0 %v471
        %595 = vmatprep.subr.mxu0 0.0
        %596 = vmatpush1.msra.mxu0 %v474
        %597 = vmatprep.subr.mxu0 0.0
        %598 = vmatpush1.msra.mxu0 %v477
        %599 = vmatprep.subr.mxu0 0.0
        %600 = vmatpush1.msra.mxu0 0.0
        %601 = vmatprep.subr.mxu0 0.0
        %602 = vmatpush1.msra.mxu0 0.0
        %603 = vmatprep.subr.mxu0 0.0
        %604 = vmatpush1.msra.mxu0 0.0
        %605 = vmatprep.subr.mxu0 0.0
        %606 = vmatpush1.msra.mxu0 0.0
        %607 = vmatprep.subr.mxu0 0.0
        %608 = vmatpush1.msra.mxu0 0.0
        %609 = vmatprep.subr.mxu0 0.0
        %610 = vmatpush1.msra.mxu0 0.0
        %611 = vmatprep.subr.mxu0 0.0
        %612 = vmatpush1.msra.mxu0 0.0
        %613 = vmatprep.subr.mxu0 0.0
        %614 = vmatpush1.msra.mxu0 0.0
        %615 = vmatprep.subr.mxu0 0.0
        %616 = vmatpush1.msra.mxu0 0.0
        %617 = vmatprep.subr.mxu0 0.0
        %618 = vmatpush1.msra.mxu0 0.0
        %619 = vmatprep.subr.mxu0 0.0
        %620 = vmatpush1.msra.mxu0 0.0
        %621 = vmatprep.subr.mxu0 0.0
        %622 = vmatpush1.msra.mxu0 0.0
        %623 = vmatprep.subr.mxu0 0.0
        %624 = vmatpush1.msra.mxu0 0.0
        %625 = vmatprep.subr.mxu0 0.0
        %626 = vmatpush1.msra.mxu0 0.0
        %627 = vmatprep.subr.mxu0 0.0
        %628 = vmatpush1.msra.mxu0 0.0
        %629 = vmatprep.subr.mxu0 0.0
        %630 = vmatpush1.msra.mxu0 0.0
        %631 = vmatprep.mubr.f32.mxu0 0.0
        %632 = vmatmul.mubr.f32.gmra.mrb[0].mxu0 %v426
        %v633 = vpop.f32.mrb[0].mxu0
        %v634 = vadd.f32 0.0, %v633
        %v635 = vpop.f32.mrb[0].mxu0
        %636 = vmatprep.mubr.f32.mxu0 0.0
        %637 = vmatmul.mubr.f32.gmra.mrb[0].mxu0 %v427
        %v638 = vpop.f32.mrb[0].mxu0
        %v639 = vadd.f32 0.0, %v638
        %v640 = vpop.f32.mrb[0].mxu0
        %641 = vmatprep.mubr.f32.mxu0 0.0
        %642 = vmatmul.mubr.f32.gmra.mrb[0].mxu0 %v428
        %v643 = vpop.f32.mrb[0].mxu0
        %v644 = vadd.f32 0.0, %v643
        %v645 = vpop.f32.mrb[0].mxu0
        %646 = vmatprep.mubr.f32.mxu0 0.0
        %647 = vmatmul.mubr.f32.gmra.mrb[0].mxu0 %v429
        %v648 = vpop.f32.mrb[0].mxu0
        %v649 = vadd.f32 0.0, %v648
        %v650 = vpop.f32.mrb[0].mxu0
        %651 = vdwg.mxu0
        %v652 = vmul.f32 %v545, 0.088388346
        %v653 = vmul.f32 %v551, 0.088388346
        %v654 = vmul.f32 %v557, 0.088388346
        %v655 = vmul.f32 %v563, 0.088388346
        %656 = vmatprep.subr.mxu0 0.0
        %657 = vmatpush1.xpose.msra.mxu0 %v547
        %658 = vmatprep.subr.mxu0 0.0
        %659 = vmatpush1.xpose.msra.mxu0 %v553
        %660 = vmatprep.subr.mxu0 0.0
        %661 = vmatpush1.xpose.msra.mxu0 0.0
        %662 = vmatprep.subr.mxu0 0.0
        %663 = vmatpush1.xpose.msra.mxu0 0.0
        %664 = vmatprep.subr.mxu0 0.0
        %665 = vmatpush1.xpose.msra.mxu0 0.0
        %666 = vmatprep.subr.mxu0 0.0
        %667 = vmatpush1.xpose.msra.mxu0 0.0
        %668 = vmatprep.subr.mxu0 0.0
        %669 = vmatpush1.xpose.msra.mxu0 0.0
        %670 = vmatprep.subr.mxu0 0.0
        %671 = vmatpush1.xpose.msra.mxu0 0.0
        %672 = vmatprep.subr.mxu0 0.0
        %673 = vmatpush1.xpose.msra.mxu0 0.0
        %674 = vmatprep.subr.mxu0 0.0
        %675 = vmatpush1.xpose.msra.mxu0 0.0
        %676 = vmatprep.subr.mxu0 0.0
        %677 = vmatpush1.xpose.msra.mxu0 0.0
        %678 = vmatprep.subr.mxu0 0.0
        %679 = vmatpush1.xpose.msra.mxu0 0.0
        %680 = vmatprep.subr.mxu0 0.0
        %681 = vmatpush1.xpose.msra.mxu0 0.0
        %682 = vmatprep.subr.mxu0 0.0
        %683 = vmatpush1.xpose.msra.mxu0 0.0
        %684 = vmatprep.subr.mxu0 0.0
        %685 = vmatpush1.xpose.msra.mxu0 0.0
        %686 = vmatprep.subr.mxu0 0.0
        %687 = vmatpush1.xpose.msra.mxu0 0.0
        %688 = vmatprep.subr.mxu0 0.0
        %689 = vmatpush1.xpose.msra.mxu0 0.0
        %690 = vmatprep.subr.mxu0 0.0
        %691 = vmatpush1.xpose.msra.mxu0 0.0
        %692 = vmatprep.subr.mxu0 0.0
        %693 = vmatpush1.xpose.msra.mxu0 0.0
        %694 = vmatprep.subr.mxu0 0.0
        %695 = vmatpush1.xpose.msra.mxu0 0.0
        %696 = vmatprep.subr.mxu0 0.0
        %697 = vmatpush1.xpose.msra.mxu0 0.0
        %698 = vmatprep.subr.mxu0 0.0
        %699 = vmatpush1.xpose.msra.mxu0 0.0
        %700 = vmatprep.subr.mxu0 0.0
        %701 = vmatpush1.xpose.msra.mxu0 0.0
        %702 = vmatprep.subr.mxu0 0.0
        %703 = vmatpush1.xpose.msra.mxu0 0.0
        %704 = vmatprep.subr.mxu0 0.0
        %705 = vmatpush1.xpose.msra.mxu0 0.0
        %706 = vmatprep.subr.mxu0 0.0
        %707 = vmatpush1.xpose.msra.mxu0 0.0
        %708 = vmatprep.subr.mxu0 0.0
        %709 = vmatpush1.xpose.msra.mxu0 0.0
        %710 = vmatprep.subr.mxu0 0.0
        %711 = vmatpush1.xpose.msra.mxu0 0.0
        %712 = vmatprep.subr.mxu0 0.0
        %713 = vmatpush1.xpose.msra.mxu0 0.0
        %714 = vmatprep.subr.mxu0 0.0
        %715 = vmatpush1.xpose.msra.mxu0 0.0
        %716 = vmatprep.subr.mxu0 0.0
        %717 = vmatpush1.xpose.msra.mxu0 0.0
        %718 = vmatprep.subr.mxu0 0.0
        %719 = vmatpush1.xpose.msra.mxu0 0.0
        %720 = vmatprep.mubr.f32.mxu0 0.0
        %721 = vmatmul.mubr.f32.gmra.mrb[0].mxu0 %v652
        %v722 = vpop.f32.mrb[0].mxu0
        %v723 = vadd.f32 0.0, %v722
        %v724 = vpop.f32.mrb[0].mxu0
        %725 = vmatprep.mubr.f32.mxu0 0.0
        %726 = vmatmul.mubr.f32.gmra.mrb[0].mxu0 %v653
        %v727 = vpop.f32.mrb[0].mxu0
        %v728 = vadd.f32 0.0, %v727
        %v729 = vpop.f32.mrb[0].mxu0
        %730 = vdwg.mxu0
        %731 = vmatprep.subr.mxu0 0.0
        %732 = vmatpush1.xpose.msra.mxu0 %v559
        %733 = vmatprep.subr.mxu0 0.0
        %734 = vmatpush1.xpose.msra.mxu0 %v565
        %735 = vmatprep.subr.mxu0 0.0
        %736 = vmatpush1.xpose.msra.mxu0 0.0
        %737 = vmatprep.subr.mxu0 0.0
        %738 = vmatpush1.xpose.msra.mxu0 0.0
        %739 = vmatprep.subr.mxu0 0.0
        %740 = vmatpush1.xpose.msra.mxu0 0.0
        %741 = vmatprep.subr.mxu0 0.0
        %742 = vmatpush1.xpose.msra.mxu0 0.0
        %743 = vmatprep.subr.mxu0 0.0
        %744 = vmatpush1.xpose.msra.mxu0 0.0
        %745 = vmatprep.subr.mxu0 0.0
        %746 = vmatpush1.xpose.msra.mxu0 0.0
        %747 = vmatprep.subr.mxu0 0.0
        %748 = vmatpush1.xpose.msra.mxu0 0.0
        %749 = vmatprep.subr.mxu0 0.0
        %750 = vmatpush1.xpose.msra.mxu0 0.0
        %751 = vmatprep.subr.mxu0 0.0
        %752 = vmatpush1.xpose.msra.mxu0 0.0
        %753 = vmatprep.subr.mxu0 0.0
        %754 = vmatpush1.xpose.msra.mxu0 0.0
        %755 = vmatprep.subr.mxu0 0.0
        %756 = vmatpush1.xpose.msra.mxu0 0.0
        %757 = vmatprep.subr.mxu0 0.0
        %758 = vmatpush1.xpose.msra.mxu0 0.0
        %759 = vmatprep.subr.mxu0 0.0
        %760 = vmatpush1.xpose.msra.mxu0 0.0
        %761 = vmatprep.subr.mxu0 0.0
        %762 = vmatpush1.xpose.msra.mxu0 0.0
        %763 = vmatprep.subr.mxu0 0.0
        %764 = vmatpush1.xpose.msra.mxu0 0.0
        %765 = vmatprep.subr.mxu0 0.0
        %766 = vmatpush1.xpose.msra.mxu0 0.0
        %767 = vmatprep.subr.mxu0 0.0
        %768 = vmatpush1.xpose.msra.mxu0 0.0
        %769 = vmatprep.subr.mxu0 0.0
        %770 = vmatpush1.xpose.msra.mxu0 0.0
        %771 = vmatprep.subr.mxu0 0.0
        %772 = vmatpush1.xpose.msra.mxu0 0.0
        %773 = vmatprep.subr.mxu0 0.0
        %774 = vmatpush1.xpose.msra.mxu0 0.0
        %775 = vmatprep.subr.mxu0 0.0
        %776 = vmatpush1.xpose.msra.mxu0 0.0
        %777 = vmatprep.subr.mxu0 0.0
        %778 = vmatpush1.xpose.msra.mxu0 0.0
        %779 = vmatprep.subr.mxu0 0.0
        %780 = vmatpush1.xpose.msra.mxu0 0.0
        %781 = vmatprep.subr.mxu0 0.0
        %782 = vmatpush1.xpose.msra.mxu0 0.0
        %783 = vmatprep.subr.mxu0 0.0
        %784 = vmatpush1.xpose.msra.mxu0 0.0
        %785 = vmatprep.subr.mxu0 0.0
        %786 = vmatpush1.xpose.msra.mxu0 0.0
        %787 = vmatprep.subr.mxu0 0.0
        %788 = vmatpush1.xpose.msra.mxu0 0.0
        %789 = vmatprep.subr.mxu0 0.0
        %790 = vmatpush1.xpose.msra.mxu0 0.0
        %791 = vmatprep.subr.mxu0 0.0
        %792 = vmatpush1.xpose.msra.mxu0 0.0
        %793 = vmatprep.subr.mxu0 0.0
        %794 = vmatpush1.xpose.msra.mxu0 0.0
        %795 = vmatprep.mubr.f32.mxu0 0.0
        %796 = vmatmul.mubr.f32.gmra.mrb[0].mxu0 %v654
        %v797 = vpop.f32.mrb[0].mxu0
        %v798 = vadd.f32 0.0, %v797
        %v799 = vpop.f32.mrb[0].mxu0
        %800 = vmatprep.mubr.f32.mxu0 0.0
        %801 = vmatmul.mubr.f32.gmra.mrb[0].mxu0 %v655
        %v802 = vpop.f32.mrb[0].mxu0
        %v803 = vadd.f32 0.0, %v802
        %v804 = vpop.f32.mrb[0].mxu0
        %805 = vdwg.mxu0
        %vm806 = vcmask 130048
        %v807 = vsel %vm806, %v723, -inf
        %808 = vmax.xlane.f32.xlu0 %v807
        %v809 = vpop.xlane.xlu0 %808
        %v810 = vsel %vm806, %v728, -inf
        %811 = vmax.xlane.f32.xlu0 %v810
        %v812 = vpop.xlane.xlu0 %811
        %v813 = vsel %vm806, %v798, -inf
        %814 = vmax.xlane.f32.xlu0 %v813
        %v815 = vpop.xlane.xlu0 %814
        %v816 = vsel %vm806, %v803, -inf
        %817 = vmax.xlane.f32.xlu0 %v816
        %v818 = vpop.xlane.xlu0 %817
        %v819 = vsub.f32 %v723, %v809
        %v820 = vsub.f32 %v728, %v812
        %v821 = vsub.f32 %v798, %v815
        %v822 = vsub.f32 %v803, %v818
        %v823 = vmul.f32 %v819, 1.442695
        %v824 = vpow.pop %v823
        %v825 = vmul.f32 %v820, 1.442695
        %v826 = vpow.pop %v825
        %v827 = vmul.f32 %v821, 1.442695
        %v828 = vpow.pop %v827
        %v829 = vmul.f32 %v822, 1.442695
        %v830 = vpow.pop %v829
        %v831 = vsel %vm806, %v824, 0.0
        %832 = vadd.xlane.f32.xlu0 %v831
        %v833 = vpop.xlane.xlu0 %832
        %v834 = vsel %vm806, %v826, 0.0
        %835 = vadd.xlane.f32.xlu0 %v834
        %v836 = vpop.xlane.xlu0 %835
        %v837 = vsel %vm806, %v828, 0.0
        %838 = vadd.xlane.f32.xlu0 %v837
        %v839 = vpop.xlane.xlu0 %838
        %v840 = vsel %vm806, %v830, 0.0
        %841 = vadd.xlane.f32.xlu0 %v840
        %v842 = vpop.xlane.xlu0 %841
        %v843 = vrcp.pop %v833
        %v844 = vrcp.pop %v836
        %v845 = vrcp.pop %v839
        %v846 = vrcp.pop %v842
        %v847 = vmul.f32 %v824, %v843
        %v848 = vmul.f32 %v826, %v844
        %v849 = vmul.f32 %v828, %v845
        %v850 = vmul.f32 %v830, %v846
        %v852 = vsel %vm806, %v847, 0
        %v855 = vsel %vm806, %v848, 0
        %857 = vmatprep.subr.mxu0 0.0
        %858 = vmatpush1.msra.mxu0 %v634
        %859 = vmatprep.subr.mxu0 0.0
        %860 = vmatpush1.msra.mxu0 %v639
        %861 = vmatprep.subr.mxu0 0.0
        %862 = vmatpush1.msra.mxu0 0.0
        %863 = vmatprep.subr.mxu0 0.0
        %864 = vmatpush1.msra.mxu0 0.0
        %865 = vmatprep.subr.mxu0 0.0
        %866 = vmatpush1.msra.mxu0 0.0
        %867 = vmatprep.subr.mxu0 0.0
        %868 = vmatpush1.msra.mxu0 0.0
        %869 = vmatprep.subr.mxu0 0.0
        %870 = vmatpush1.msra.mxu0 0.0
        %871 = vmatprep.subr.mxu0 0.0
        %872 = vmatpush1.msra.mxu0 0.0
        %873 = vmatprep.subr.mxu0 0.0
        %874 = vmatpush1.msra.mxu0 0.0
        %875 = vmatprep.subr.mxu0 0.0
        %876 = vmatpush1.msra.mxu0 0.0
        %877 = vmatprep.subr.mxu0 0.0
        %878 = vmatpush1.msra.mxu0 0.0
        %879 = vmatprep.subr.mxu0 0.0
        %880 = vmatpush1.msra.mxu0 0.0
        %881 = vmatprep.subr.mxu0 0.0
        %882 = vmatpush1.msra.mxu0 0.0
        %883 = vmatprep.subr.mxu0 0.0
        %884 = vmatpush1.msra.mxu0 0.0
        %885 = vmatprep.subr.mxu0 0.0
        %886 = vmatpush1.msra.mxu0 0.0
        %887 = vmatprep.subr.mxu0 0.0
        %888 = vmatpush1.msra.mxu0 0.0
        %889 = vmatprep.subr.mxu0 0.0
        %890 = vmatpush1.msra.mxu0 0.0
        %891 = vmatprep.subr.mxu0 0.0
        %892 = vmatpush1.msra.mxu0 0.0
        %893 = vmatprep.subr.mxu0 0.0
        %894 = vmatpush1.msra.mxu0 0.0
        %895 = vmatprep.subr.mxu0 0.0
        %896 = vmatpush1.msra.mxu0 0.0
        %897 = vmatprep.subr.mxu0 0.0
        %898 = vmatpush1.msra.mxu0 0.0
        %899 = vmatprep.subr.mxu0 0.0
        %900 = vmatpush1.msra.mxu0 0.0
        %901 = vmatprep.subr.mxu0 0.0
        %902 = vmatpush1.msra.mxu0 0.0
        %903 = vmatprep.subr.mxu0 0.0
        %904 = vmatpush1.msra.mxu0 0.0
        %905 = vmatprep.subr.mxu0 0.0
        %906 = vmatpush1.msra.mxu0 0.0
        %907 = vmatprep.subr.mxu0 0.0
        %908 = vmatpush1.msra.mxu0 0.0
        %909 = vmatprep.subr.mxu0 0.0
        %910 = vmatpush1.msra.mxu0 0.0
        %911 = vmatprep.subr.mxu0 0.0
        %912 = vmatpush1.msra.mxu0 0.0
        %913 = vmatprep.subr.mxu0 0.0
        %914 = vmatpush1.msra.mxu0 0.0
        %915 = vmatprep.subr.mxu0 0.0
        %916 = vmatpush1.msra.mxu0 0.0
        %917 = vmatprep.subr.mxu0 0.0
        %918 = vmatpush1.msra.mxu0 0.0
        %919 = vmatprep.subr.mxu0 0.0
        %920 = vmatpush1.msra.mxu0 0.0
        %921 = vmatprep.mubr.f32.mxu0 0.0
        %922 = vmatmul.mubr.f32.gmra.mrb[0].mxu0 %v852
        %v923 = vpop.f32.mrb[0].mxu0
        %v924 = vadd.f32 0.0, %v923
        %v925 = vpop.f32.mrb[0].mxu0
        %926 = vmatprep.mubr.f32.mxu0 0.0
        %927 = vmatmul.mubr.f32.gmra.mrb[0].mxu0 %v855
        %v928 = vpop.f32.mrb[0].mxu0
        %v929 = vadd.f32 0.0, %v928
        %v930 = vpop.f32.mrb[0].mxu0
        %931 = vdwg.mxu0
        %v933 = vsel %vm806, %v849, 0
        %v936 = vsel %vm806, %v850, 0
        %938 = vmatprep.subr.mxu0 0.0
        %939 = vmatpush1.msra.mxu0 %v644
        %940 = vmatprep.subr.mxu0 0.0
        %941 = vmatpush1.msra.mxu0 %v649
        %942 = vmatprep.subr.mxu0 0.0
        %943 = vmatpush1.msra.mxu0 0.0
        %944 = vmatprep.subr.mxu0 0.0
        %945 = vmatpush1.msra.mxu0 0.0
        %946 = vmatprep.subr.mxu0 0.0
        %947 = vmatpush1.msra.mxu0 0.0
        %948 = vmatprep.subr.mxu0 0.0
        %949 = vmatpush1.msra.mxu0 0.0
        %950 = vmatprep.subr.mxu0 0.0
        %951 = vmatpush1.msra.mxu0 0.0
        %952 = vmatprep.subr.mxu0 0.0
        %953 = vmatpush1.msra.mxu0 0.0
        %954 = vmatprep.subr.mxu0 0.0
        %955 = vmatpush1.msra.mxu0 0.0
        %956 = vmatprep.subr.mxu0 0.0
        %957 = vmatpush1.msra.mxu0 0.0
        %958 = vmatprep.subr.mxu0 0.0
        %959 = vmatpush1.msra.mxu0 0.0
        %960 = vmatprep.subr.mxu0 0.0
        %961 = vmatpush1.msra.mxu0 0.0
        %962 = vmatprep.subr.mxu0 0.0
        %963 = vmatpush1.msra.mxu0 0.0
        %964 = vmatprep.subr.mxu0 0.0
        %965 = vmatpush1.msra.mxu0 0.0
        %966 = vmatprep.subr.mxu0 0.0
        %967 = vmatpush1.msra.mxu0 0.0
        %968 = vmatprep.subr.mxu0 0.0
        %969 = vmatpush1.msra.mxu0 0.0
        %970 = vmatprep.subr.mxu0 0.0
        %971 = vmatpush1.msra.mxu0 0.0
        %972 = vmatprep.subr.mxu0 0.0
        %973 = vmatpush1.msra.mxu0 0.0
        %974 = vmatprep.subr.mxu0 0.0
        %975 = vmatpush1.msra.mxu0 0.0
        %976 = vmatprep.subr.mxu0 0.0
        %977 = vmatpush1.msra.mxu0 0.0
        %978 = vmatprep.subr.mxu0 0.0
        %979 = vmatpush1.msra.mxu0 0.0
        %980 = vmatprep.subr.mxu0 0.0
        %981 = vmatpush1.msra.mxu0 0.0
        %982 = vmatprep.subr.mxu0 0.0
        %983 = vmatpush1.msra.mxu0 0.0
        %984 = vmatprep.subr.mxu0 0.0
        %985 = vmatpush1.msra.mxu0 0.0
        %986 = vmatprep.subr.mxu0 0.0
        %987 = vmatpush1.msra.mxu0 0.0
        %988 = vmatprep.subr.mxu0 0.0
        %989 = vmatpush1.msra.mxu0 0.0
        %990 = vmatprep.subr.mxu0 0.0
        %991 = vmatpush1.msra.mxu0 0.0
        %992 = vmatprep.subr.mxu0 0.0
        %993 = vmatpush1.msra.mxu0 0.0
        %994 = vmatprep.subr.mxu0 0.0
        %995 = vmatpush1.msra.mxu0 0.0
        %996 = vmatprep.subr.mxu0 0.0
        %997 = vmatpush1.msra.mxu0 0.0
        %998 = vmatprep.subr.mxu0 0.0
        %999 = vmatpush1.msra.mxu0 0.0
        %1000 = vmatprep.subr.mxu0 0.0
        %1001 = vmatpush1.msra.mxu0 0.0
        %1002 = vmatprep.mubr.f32.mxu0 0.0
        %1003 = vmatmul.mubr.f32.gmra.mrb[0].mxu0 %v933
        %v1004 = vpop.f32.mrb[0].mxu0
        %v1005 = vadd.f32 0.0, %v1004
        %v1006 = vpop.f32.mrb[0].mxu0
        %1007 = vmatprep.mubr.f32.mxu0 0.0
        %1008 = vmatmul.mubr.f32.gmra.mrb[0].mxu0 %v936
        %v1009 = vpop.f32.mrb[0].mxu0
        %v1010 = vadd.f32 0.0, %v1009
        %v1011 = vpop.f32.mrb[0].mxu0
        %1012 = vdwg.mxu0
        %v1013 = vld [vmem:[%s324] sm:$0xff]
        %v1014 = vld [vmem:[%s324 + $0x8] sm:$0xff]
        %v1015 = vld [vmem:[%s324 + $0x10] sm:$0xff]
        %v1016 = vld [vmem:[%s324 + $0x18] sm:$0xff]
        %v1017 = vld [vmem:[%s324 + $0x20] sm:$0xff]
        %v1018 = vld [vmem:[%s324 + $0x28] sm:$0xff]
        %v1019 = vld [vmem:[%s324 + $0x30] sm:$0xff]
        %v1020 = vld [vmem:[%s324 + $0x38] sm:$0xff]
        %v1021 = vld [vmem:[%s324 + $0x40] sm:$0xff]
        %v1022 = vld [vmem:[%s324 + $0x48] sm:$0xff]
        %v1023 = vld [vmem:[%s324 + $0x50] sm:$0xff]
        %v1024 = vld [vmem:[%s324 + $0x58] sm:$0xff]
        %v1025 = vld [vmem:[%s324 + $0x60] sm:$0xff]
        %v1026 = vld [vmem:[%s324 + $0x68] sm:$0xff]
        %v1027 = vld [vmem:[%s324 + $0x70] sm:$0xff]
        %v1028 = vld [vmem:[%s324 + $0x78] sm:$0xff]
        %1029 = vmatprep.subr.mxu0 0.0
        %1030 = vmatpush1.msra.mxu0 %v1013
        %1031 = vmatprep.subr.mxu0 0.0
        %1032 = vmatpush1.msra.mxu0 %v1014
        %1033 = vmatprep.subr.mxu0 0.0
        %1034 = vmatpush1.msra.mxu0 %v1015
        %1035 = vmatprep.subr.mxu0 0.0
        %1036 = vmatpush1.msra.mxu0 %v1016
        %1037 = vmatprep.subr.mxu0 0.0
        %1038 = vmatpush1.msra.mxu0 %v1017
        %1039 = vmatprep.subr.mxu0 0.0
        %1040 = vmatpush1.msra.mxu0 %v1018
        %1041 = vmatprep.subr.mxu0 0.0
        %1042 = vmatpush1.msra.mxu0 %v1019
        %1043 = vmatprep.subr.mxu0 0.0
        %1044 = vmatpush1.msra.mxu0 %v1020
        %1045 = vmatprep.subr.mxu0 0.0
        %1046 = vmatpush1.msra.mxu0 %v1021
        %1047 = vmatprep.subr.mxu0 0.0
        %1048 = vmatpush1.msra.mxu0 %v1022
        %1049 = vmatprep.subr.mxu0 0.0
        %1050 = vmatpush1.msra.mxu0 %v1023
        %1051 = vmatprep.subr.mxu0 0.0
        %1052 = vmatpush1.msra.mxu0 %v1024
        %1053 = vmatprep.subr.mxu0 0.0
        %1054 = vmatpush1.msra.mxu0 %v1025
        %1055 = vmatprep.subr.mxu0 0.0
        %1056 = vmatpush1.msra.mxu0 %v1026
        %1057 = vmatprep.subr.mxu0 0.0
        %1058 = vmatpush1.msra.mxu0 %v1027
        %1059 = vmatprep.subr.mxu0 0.0
        %1060 = vmatpush1.msra.mxu0 %v1028
        %1061 = vmatprep.subr.mxu0 0.0
        %1062 = vmatpush1.msra.mxu0 0.0
        %1063 = vmatprep.subr.mxu0 0.0
        %1064 = vmatpush1.msra.mxu0 0.0
        %1065 = vmatprep.subr.mxu0 0.0
        %1066 = vmatpush1.msra.mxu0 0.0
        %1067 = vmatprep.subr.mxu0 0.0
        %1068 = vmatpush1.msra.mxu0 0.0
        %1069 = vmatprep.subr.mxu0 0.0
        %1070 = vmatpush1.msra.mxu0 0.0
        %1071 = vmatprep.subr.mxu0 0.0
        %1072 = vmatpush1.msra.mxu0 0.0
        %1073 = vmatprep.subr.mxu0 0.0
        %1074 = vmatpush1.msra.mxu0 0.0
        %1075 = vmatprep.subr.mxu0 0.0
        %1076 = vmatpush1.msra.mxu0 0.0
        %1077 = vmatprep.subr.mxu0 0.0
        %1078 = vmatpush1.msra.mxu0 0.0
        %1079 = vmatprep.subr.mxu0 0.0
        %1080 = vmatpush1.msra.mxu0 0.0
        %1081 = vmatprep.subr.mxu0 0.0
        %1082 = vmatpush1.msra.mxu0 0.0
        %1083 = vmatprep.subr.mxu0 0.0
        %1084 = vmatpush1.msra.mxu0 0.0
        %1085 = vmatprep.subr.mxu0 0.0
        %1086 = vmatpush1.msra.mxu0 0.0
        %1087 = vmatprep.subr.mxu0 0.0
        %1088 = vmatpush1.msra.mxu0 0.0
        %1089 = vmatprep.subr.mxu0 0.0
        %1090 = vmatpush1.msra.mxu0 0.0
        %1091 = vmatprep.subr.mxu0 0.0
        %1092 = vmatpush1.msra.mxu0 0.0
        %1093 = vmatprep.mubr.f32.mxu0 0.0
        %1094 = vmatmul.mubr.f32.gmra.mrb[0].mxu0 %v924
        %v1095 = vpop.f32.mrb[0].mxu0
        %v1096 = vadd.f32 0.0, %v1095
        %v1097 = vpop.f32.mrb[0].mxu0
        %1098 = vmatprep.mubr.f32.mxu0 0.0
        %1099 = vmatmul.mubr.f32.gmra.mrb[0].mxu0 %v929
        %v1100 = vpop.f32.mrb[0].mxu0
        %v1101 = vadd.f32 0.0, %v1100
        %v1102 = vpop.f32.mrb[0].mxu0
        %1103 = vmatprep.mubr.f32.mxu0 0.0
        %1104 = vmatmul.mubr.f32.gmra.mrb[0].mxu0 %v1005
        %v1105 = vpop.f32.mrb[0].mxu0
        %v1106 = vadd.f32 0.0, %v1105
        %v1107 = vpop.f32.mrb[0].mxu0
        %1108 = vmatprep.mubr.f32.mxu0 0.0
        %1109 = vmatmul.mubr.f32.gmra.mrb[0].mxu0 %v1010
        %v1110 = vpop.f32.mrb[0].mxu0
        %v1111 = vadd.f32 0.0, %v1110
        %v1112 = vpop.f32.mrb[0].mxu0
        %1113 = vdwg.mxu0
        %v1114 = vld [vmem:[%s330] sm:$0xff]
        %v1115 = vld [vmem:[%s330 + $0x8] sm:$0xff]
        %v1116 = vld [vmem:[%s330 + $0x10] sm:$0xff]
        %v1117 = vld [vmem:[%s330 + $0x18] sm:$0xff]
        %v1118 = vadd.f32 %v1114, %v1096
        %v1119 = vadd.f32 %v1115, %v1101
        %v1120 = vadd.f32 %v1116, %v1106
        %v1121 = vadd.f32 %v1117, %v1111
        %1122 = vst [vmem:[%s330] sm:$0xff] %v1118
        %1123 = vst [vmem:[%s330 + $0x8] sm:$0xff] %v1119
        %1124 = vst [vmem:[%s330 + $0x10] sm:$0xff] %v1120
        %1125 = vst [vmem:[%s330 + $0x18] sm:$0xff] %v1121
        %s1126 = smul.u32 2, %s24
        %p1127 = scmp.lt.s32.totalorder %s1126, 1
        %s1128 = scalar_select %p1127, %s1126, 1
        %s1129 = smul.addr %s1128, 2
        %s1130 = smul.addr %s1129, 8
        %s1131 = scalar_lea.vmem %s6, %s1130
        // Predicated region
        $region53: #{transformer_decoder_forward.5} parent=43 // pred_check
          %p1132 = pneg %p191
        $region54: #{transformer_decoder_forward.5} parent=43 // pred_check_branch
          %1134 = sbr.rel (%p1132) target = $region56
        $region55: #{transformer_decoder_forward.5} parent=43 // pred_region
          %s1135 = smul.u32 2, %s24
        $region56: #{transformer_decoder_forward.5} parent=43 // pred_fallthru
          _
        // Predicated region
        $region57: #{transformer_decoder_forward.5} parent=43 // pred_check
          %p1136 = pneg %p191
        $region58: #{transformer_decoder_forward.5} parent=43 // pred_check_branch
          %1138 = sbr.rel (%p1136) target = $region60
        $region59: #{transformer_decoder_forward.5} parent=43 // pred_region
          %s1139 = smul.u32 2, %s24
          %p1140 = scmp.lt.s32.totalorder %s1139, 1
          %s1141 = scalar_select %p1140, %s1139, 1
          %s1142 = smul.addr %s1141, 2
          %s1143 = smul.addr %s1142, 8
          %s1144 = scalar_lea.vmem %s6, %s1143
        $region60: #{transformer_decoder_forward.5} parent=43 // pred_fallthru
          _
      $region44: #{transformer_decoder_forward.5} parent=5 // pred_fallthru
        _
      %p1145 = scmp.le.s32.totalorder 2, %s15
      // Predicated region
      $region61: #{transformer_decoder_forward.5} parent=5 // pred_check
        %p1146 = pneg %p1145
      $region62: #{transformer_decoder_forward.5} parent=5 // pred_check_branch
        %1148 = sbr.rel (%p1146) target = $region64
      $region63: #{transformer_decoder_forward.5} parent=5 // pred_region
        %s1149 = ssub.s32 %s15, 2
      $region64: #{transformer_decoder_forward.5} parent=5 // pred_fallthru
        _
    $region6: #{transformer_decoder_forward.5} parent=1 // loop_footer
      %s19 = sadd.s32 1, %s15
    $region7: #{transformer_decoder_forward.5} parent=1 // loop_footer_branch
      %14 = sbr.rel target = $region3
    $region8: #{transformer_decoder_forward.5} parent=1 // loop_exit
      _
    %1150 = vsyncpa [#allocation4], 1
    %s1151 = scalar_lea.sflag [#allocation4], 1
    %1152 = vsyncpa %s1151, 1

// kernel: transformer_decoder_forward.7
$region0: #{transformer_decoder_forward.7}
  #allocation0 [shape = 'u32[]', space=smem, size = 0x4, offset = 0x4, fixed_abs, tag = 'smem constant byte address 0x4 - core index']
  #allocation1 [shape = 'u32[144,128]{1,0:T(1,128)}', space=vmem, size = 0x12000, scoped, tag = 'internal scratch']
  #allocation2 [shape = 'f32[2,16,128]{2,1,0:T(8,128)}', space=vmem, size = 0x4000, scoped, tag = 'scratch operand']
  %s0 = inlined_call_operand.vmem [shape: f32[2,16,128], index: 0, kind: input, shape index: {}]
  %s1 = inlined_call_operand.vmem [shape: f32[1,128], index: 1, kind: input, shape index: {}]
  %s2 = inlined_call_operand.vmem [shape: f32[1,128], index: 2, kind: input, shape index: {}]
  %s3 = inlined_call_operand.vmem [shape: f32[2,128,384], index: 3, kind: input, shape index: {}]
  %s4 = inlined_call_operand.vmem [shape: f32[2,128,128], index: 4, kind: input, shape index: {}]
  %s5 = inlined_call_operand.vmem [shape: f32[1,128], index: 5, kind: input, shape index: {}]
  %s6 = inlined_call_operand.vmem [shape: f32[2,16,128], index: 6, kind: output, shape index: {}]
  %s7 = sld [smem:[#allocation0]]
  $region61: #{transformer_decoder_forward.7} parent=0
    _
  %s9 = ssub.s32 1, %s7
  %s10 = scalar_select 0, %s9, %s7
  loop: start=0, step=1, limit=4
  $region2: #{transformer_decoder_forward.7} parent=0 // loop_pre_header
    _
  $region3: #{transformer_decoder_forward.7} parent=0 // loop_header
    %s12 = sphi 0, %s16
    %p13 = scmp.ge.s32.totalorder %s12, 4
    %s19 = sphi 0, %s31
    %s20 = sphi 0, %s27
    %s21 = sphi 0, %s19
    %s22 = sphi 0, %s20
    %s23 = sphi 0, %s21
    %s24 = sphi 0, %s22
    %s34 = sphi 0, %s36
    %s37 = sphi 0, %s34
    %s38 = sphi 0, %s37
    %s54 = sphi 0, %s38
    %s58 = sphi 0, %s58
    %s60 = sphi 0, %s58
    %s61 = sphi 0, %s60
    %s75 = sphi 0, %s61
    %s79 = sphi 0, %s79
    %s81 = sphi 0, %s79
    %s82 = sphi 0, %s81
    %s96 = sphi 0, %s82
    %s102 = sphi 0, %s104
    %s105 = sphi 0, %s102
    %s106 = sphi 0, %s105
    %s122 = sphi 0, %s106
    %s128 = sphi 0, %s130
    %s131 = sphi 0, %s128
    %s132 = sphi 0, %s131
    %s148 = sphi 0, %s132
    %s152 = sphi 0, %s152
    %s154 = sphi 0, %s152
    %s155 = sphi 0, %s154
    %s169 = sphi 0, %s155
    %s175 = sphi 0, %s177
    %s178 = sphi 0, %s175
    %s179 = sphi 0, %s178
    %s195 = sphi 0, %s179
  $region4: #{transformer_decoder_forward.7} parent=0 // loop_header_branch
    %15 = sbr.rel (%p13) target = $region8
  $region5: #{transformer_decoder_forward.7} parent=0 // loop_body
    %s17 = ssub.s32 %s12, 1
    %s18 = ssub.s32 %s12, 2
    %s25 = sadd.s32 1, %s20
    %p26 = scmp.ge.s32.totalorder %s25, 2
    %s27 = scalar_select %p26, 0, %s25
    %s28 = sadd.s32 1, %s19
    %s29 = scalar_select %p26, %s28, %s19
    %p30 = scmp.ge.s32.totalorder %s29, 1
    %s31 = scalar_select %p30, 0, %s29
    %s32 = ssub.s32 %s19, %s31
    %p33 = scmp.eq.s32.totalorder %s32, 0
    %s35 = sadd.s32 %s34, 1
    %s36 = scalar_select %p33, %s34, %s35
    %p39 = pneg %p33
    %p40 = scmp.eq.s32.totalorder %s12, 1
    %p41 = por %p39, %p40
    %p42 = scmp.ne.s32.totalorder %s34, %s37
    %p43 = scmp.eq.s32.totalorder %s12, 0
    %p44 = por %p42, %p43
    %p45 = scmp.ne.s32.totalorder %s34, %s37
    %p46 = scmp.eq.s32.totalorder %s17, 1
    %p47 = por %p45, %p46
    %p48 = scmp.ne.s32.totalorder %s37, %s38
    %p49 = scmp.eq.s32.totalorder %s17, 0
    %p50 = por %p48, %p49
    %p51 = scmp.ne.s32.totalorder %s37, %s38
    %p52 = scmp.eq.s32.totalorder %s18, 1
    %p53 = por %p51, %p52
    %p55 = scmp.ne.s32.totalorder %s38, %s54
    %p56 = scmp.eq.s32.totalorder %s18, 0
    %p57 = por %p55, %p56
    %s59 = sadd.s32 %s58, 1
    %p62 = scmp.eq.s32.totalorder %s12, 1
    %p63 = scmp.ne.s32.totalorder %s58, %s60
    %p64 = scmp.eq.s32.totalorder %s12, 0
    %p65 = por %p63, %p64
    %p66 = scmp.ne.s32.totalorder %s58, %s60
    %p67 = scmp.eq.s32.totalorder %s17, 1
    %p68 = por %p66, %p67
    %p69 = scmp.ne.s32.totalorder %s60, %s61
    %p70 = scmp.eq.s32.totalorder %s17, 0
    %p71 = por %p69, %p70
    %p72 = scmp.ne.s32.totalorder %s60, %s61
    %p73 = scmp.eq.s32.totalorder %s18, 1
    %p74 = por %p72, %p73
    %p76 = scmp.ne.s32.totalorder %s61, %s75
    %p77 = scmp.eq.s32.totalorder %s18, 0
    %p78 = por %p76, %p77
    %s80 = sadd.s32 %s79, 1
    %p83 = scmp.eq.s32.totalorder %s12, 1
    %p84 = scmp.ne.s32.totalorder %s79, %s81
    %p85 = scmp.eq.s32.totalorder %s12, 0
    %p86 = por %p84, %p85
    %p87 = scmp.ne.s32.totalorder %s79, %s81
    %p88 = scmp.eq.s32.totalorder %s17, 1
    %p89 = por %p87, %p88
    %p90 = scmp.ne.s32.totalorder %s81, %s82
    %p91 = scmp.eq.s32.totalorder %s17, 0
    %p92 = por %p90, %p91
    %p93 = scmp.ne.s32.totalorder %s81, %s82
    %p94 = scmp.eq.s32.totalorder %s18, 1
    %p95 = por %p93, %p94
    %p97 = scmp.ne.s32.totalorder %s82, %s96
    %p98 = scmp.eq.s32.totalorder %s18, 0
    %p99 = por %p97, %p98
    %s100 = ssub.s32 %s20, %s27
    %p101 = scmp.eq.s32.totalorder %s100, 0
    %s103 = sadd.s32 %s102, 1
    %s104 = scalar_select %p101, %s102, %s103
    %p107 = pneg %p101
    %p108 = scmp.eq.s32.totalorder %s12, 1
    %p109 = por %p107, %p108
    %p110 = scmp.ne.s32.totalorder %s102, %s105
    %p111 = scmp.eq.s32.totalorder %s12, 0
    %p112 = por %p110, %p111
    %p113 = scmp.ne.s32.totalorder %s102, %s105
    %p114 = scmp.eq.s32.totalorder %s17, 1
    %p115 = por %p113, %p114
    %p116 = scmp.ne.s32.totalorder %s105, %s106
    %p117 = scmp.eq.s32.totalorder %s17, 0
    %p118 = por %p116, %p117
    %p119 = scmp.ne.s32.totalorder %s105, %s106
    %p120 = scmp.eq.s32.totalorder %s18, 1
    %p121 = por %p119, %p120
    %p123 = scmp.ne.s32.totalorder %s106, %s122
    %p124 = scmp.eq.s32.totalorder %s18, 0
    %p125 = por %p123, %p124
    %s126 = ssub.s32 %s20, %s27
    %p127 = scmp.eq.s32.totalorder %s126, 0
    %s129 = sadd.s32 %s128, 1
    %s130 = scalar_select %p127, %s128, %s129
    %p133 = pneg %p127
    %p134 = scmp.eq.s32.totalorder %s12, 1
    %p135 = por %p133, %p134
    %p136 = scmp.ne.s32.totalorder %s128, %s131
    %p137 = scmp.eq.s32.totalorder %s12, 0
    %p138 = por %p136, %p137
    %p139 = scmp.ne.s32.totalorder %s128, %s131
    %p140 = scmp.eq.s32.totalorder %s17, 1
    %p141 = por %p139, %p140
    %p142 = scmp.ne.s32.totalorder %s131, %s132
    %p143 = scmp.eq.s32.totalorder %s17, 0
    %p144 = por %p142, %p143
    %p145 = scmp.ne.s32.totalorder %s131, %s132
    %p146 = scmp.eq.s32.totalorder %s18, 1
    %p147 = por %p145, %p146
    %p149 = scmp.ne.s32.totalorder %s132, %s148
    %p150 = scmp.eq.s32.totalorder %s18, 0
    %p151 = por %p149, %p150
    %s153 = sadd.s32 %s152, 1
    %p156 = scmp.eq.s32.totalorder %s12, 1
    %p157 = scmp.ne.s32.totalorder %s152, %s154
    %p158 = scmp.eq.s32.totalorder %s12, 0
    %p159 = por %p157, %p158
    %p160 = scmp.ne.s32.totalorder %s152, %s154
    %p161 = scmp.eq.s32.totalorder %s17, 1
    %p162 = por %p160, %p161
    %p163 = scmp.ne.s32.totalorder %s154, %s155
    %p164 = scmp.eq.s32.totalorder %s17, 0
    %p165 = por %p163, %p164
    %p166 = scmp.ne.s32.totalorder %s154, %s155
    %p167 = scmp.eq.s32.totalorder %s18, 1
    %p168 = por %p166, %p167
    %p170 = scmp.ne.s32.totalorder %s155, %s169
    %p171 = scmp.eq.s32.totalorder %s18, 0
    %p172 = por %p170, %p171
    %s173 = ssub.s32 %s19, %s31
    %p174 = scmp.eq.s32.totalorder %s173, 0
    %s176 = sadd.s32 %s175, 1
    %s177 = scalar_select %p174, %s175, %s176
    %p180 = pneg %p174
    %p181 = scmp.eq.s32.totalorder %s12, 1
    %p182 = por %p180, %p181
    %p183 = scmp.ne.s32.totalorder %s175, %s178
    %p184 = scmp.eq.s32.totalorder %s12, 0
    %p185 = por %p183, %p184
    %p186 = scmp.ne.s32.totalorder %s175, %s178
    %p187 = scmp.eq.s32.totalorder %s17, 1
    %p188 = por %p186, %p187
    %p189 = scmp.ne.s32.totalorder %s178, %s179
    %p190 = scmp.eq.s32.totalorder %s17, 0
    %p191 = por %p189, %p190
    %p192 = scmp.ne.s32.totalorder %s178, %s179
    %p193 = scmp.eq.s32.totalorder %s18, 1
    %p194 = por %p192, %p193
    %p196 = scmp.ne.s32.totalorder %s179, %s195
    %p197 = scmp.eq.s32.totalorder %s18, 0
    %p198 = por %p196, %p197
    %p199 = scmp.le.s32.totalorder 1, %s12
    %p200 = scmp.lt.s32.totalorder %s12, 3
    %p201 = pnand %p199, %p200
    %p202 = pneg %p201
    // Predicated region
    $region9: #{transformer_decoder_forward.7} parent=5 // pred_check
      _
    $region10: #{transformer_decoder_forward.7} parent=5 // pred_check_branch
      %204 = sbr.rel (%p201) target = $region12
    $region11: #{transformer_decoder_forward.7} parent=5 // pred_region
      %s205 = ssub.s32 %s12, 1
      // Predicated region
      $region13: #{transformer_decoder_forward.7} parent=11 // pred_check
        %p206 = pneg %p50
      $region14: #{transformer_decoder_forward.7} parent=11 // pred_check_branch
        %208 = sbr.rel (%p206) target = $region16
      $region15: #{transformer_decoder_forward.7} parent=11 // pred_region
        %s209 = smul.u32 2, %s21
        %p210 = scmp.lt.s32.totalorder %s209, 1
        %s211 = scalar_select %p210, %s209, 1
        %s212 = smul.addr %s211, 2
        %s213 = smul.addr %s212, 8
        %s214 = scalar_lea.vmem %s0, %s213
        %s215 = smul.u32 2, %s21
      $region16: #{transformer_decoder_forward.7} parent=11 // pred_fallthru
        _
      // Predicated region
      $region17: #{transformer_decoder_forward.7} parent=11 // pred_check
        %p216 = pneg %p71
      $region18: #{transformer_decoder_forward.7} parent=11 // pred_check_branch
        %218 = sbr.rel (%p216) target = $region20
      $region19: #{transformer_decoder_forward.7} parent=11 // pred_region
        _
      $region20: #{transformer_decoder_forward.7} parent=11 // pred_fallthru
        _
      // Predicated region
      $region21: #{transformer_decoder_forward.7} parent=11 // pred_check
        %p219 = pneg %p92
      $region22: #{transformer_decoder_forward.7} parent=11 // pred_check_branch
        %221 = sbr.rel (%p219) target = $region24
      $region23: #{transformer_decoder_forward.7} parent=11 // pred_region
        _
      $region24: #{transformer_decoder_forward.7} parent=11 // pred_fallthru
        _
      // Predicated region
      $region25: #{transformer_decoder_forward.7} parent=11 // pred_check
        %p222 = pneg %p165
      $region26: #{transformer_decoder_forward.7} parent=11 // pred_check_branch
        %224 = sbr.rel (%p222) target = $region28
      $region27: #{transformer_decoder_forward.7} parent=11 // pred_region
        _
      $region28: #{transformer_decoder_forward.7} parent=11 // pred_fallthru
        _
    $region12: #{transformer_decoder_forward.7} parent=5 // pred_fallthru
      _
    %p225 = scmp.lt.s32.totalorder %s12, 2
    // Predicated region
    $region29: #{transformer_decoder_forward.7} parent=5 // pred_check
      %p226 = pneg %p225
    $region30: #{transformer_decoder_forward.7} parent=5 // pred_check_branch
      %228 = sbr.rel (%p226) target = $region32
    $region31: #{transformer_decoder_forward.7} parent=5 // pred_region
      // Predicated region
      $region33: #{transformer_decoder_forward.7} parent=31 // pred_check
        %p229 = pneg %p112
      $region34: #{transformer_decoder_forward.7} parent=31 // pred_check_branch
        %231 = sbr.rel (%p229) target = $region36
      $region35: #{transformer_decoder_forward.7} parent=31 // pred_region
        %p232 = scmp.lt.s32.totalorder %s20, 1
        %s233 = scalar_select %p232, %s20, 1
        %s234 = smul.addr %s233, 48
        %s235 = smul.addr %s234, 8
        %s236 = scalar_lea.vmem %s3, %s235
      $region36: #{transformer_decoder_forward.7} parent=31 // pred_fallthru
        _
      // Predicated region
      $region37: #{transformer_decoder_forward.7} parent=31 // pred_check
        %p237 = pneg %p138
      $region38: #{transformer_decoder_forward.7} parent=31 // pred_check_branch
        %239 = sbr.rel (%p237) target = $region40
      $region39: #{transformer_decoder_forward.7} parent=31 // pred_region
        %p240 = scmp.lt.s32.totalorder %s20, 1
        %s241 = scalar_select %p240, %s20, 1
        %s242 = smul.addr %s241, 16
        %s243 = smul.addr %s242, 8
        %s244 = scalar_lea.vmem %s4, %s243
      $region40: #{transformer_decoder_forward.7} parent=31 // pred_fallthru
        _
    $region32: #{transformer_decoder_forward.7} parent=5 // pred_fallthru
      _
    %p245 = scmp.le.s32.totalorder 1, %s12
    %p246 = scmp.lt.s32.totalorder %s12, 3
    %p247 = pnand %p245, %p246
    %p248 = pneg %p247
    // Predicated region
    $region41: #{transformer_decoder_forward.7} parent=5 // pred_check
      _
    $region42: #{transformer_decoder_forward.7} parent=5 // pred_check_branch
      %250 = sbr.rel (%p247) target = $region44
    $region43: #{transformer_decoder_forward.7} parent=5 // pred_region
      %s251 = ssub.s32 %s12, 1
      %s252 = smul.u32 2, %s21
      %p253 = scmp.lt.s32.totalorder %s252, 1
      %s254 = scalar_select %p253, %s252, 1
      %s255 = smul.addr %s254, 2
      %s256 = smul.addr %s255, 8
      %s257 = scalar_lea.vmem %s0, %s256
      %p258 = pneg %p50
      %p259 = pneg %p47
      %p260 = pneg %p71
      %p261 = pneg %p68
      %p262 = pneg %p92
      %p263 = pneg %p89
      %p264 = scmp.lt.s32.totalorder %s22, 1
      %s265 = scalar_select %p264, %s22, 1
      %s266 = smul.addr %s265, 48
      %s267 = smul.addr %s266, 8
      %s268 = scalar_lea.vmem %s3, %s267
      %p269 = pneg %p118
      %p270 = pneg %p115
      %p271 = scmp.lt.s32.totalorder %s22, 1
      %s272 = scalar_select %p271, %s22, 1
      %s273 = smul.addr %s272, 16
      %s274 = smul.addr %s273, 8
      %s275 = scalar_lea.vmem %s4, %s274
      %p276 = pneg %p144
      %p277 = pneg %p141
      %p278 = pneg %p165
      %p279 = pneg %p162
      %p280 = pneg %p191
      %p281 = pneg %p188
      %s282 = smul.u32 2, %s21
      %p283 = scmp.lt.s32.totalorder %s282, 1
      %s284 = scalar_select %p283, %s282, 1
      %s285 = smul.addr %s284, 2
      %s286 = smul.addr %s285, 8
      %s287 = scalar_lea.vmem %s6, %s286
      %s288 = smul.u32 2, %s21
      %p289 = scmp.lt.s32.totalorder %s288, 1
      %s290 = scalar_select %p289, %s288, 1
      %s291 = smul.addr %s290, 2
      %s292 = smul.addr %s291, 8
      %s293 = scalar_lea.vmem %s0, %s292
      %s294 = smul.u32 2, %s21
      %p295 = scmp.lt.s32.totalorder %s22, 1
      %s296 = scalar_select %p295, %s22, 1
      %s297 = smul.addr %s296, 48
      %s298 = smul.addr %s297, 8
      %s299 = scalar_lea.vmem %s3, %s298
      %p300 = scmp.lt.s32.totalorder %s22, 1
      %s301 = scalar_select %p300, %s22, 1
      %s302 = smul.addr %s301, 16
      %s303 = smul.addr %s302, 8
      %s304 = scalar_lea.vmem %s4, %s303
      %s305 = smul.u32 2, %s21
      %p306 = scmp.lt.s32.totalorder %s305, 1
      %s307 = scalar_select %p306, %s305, 1
      %s308 = smul.addr %s307, 2
      %s309 = smul.addr %s308, 8
      %s310 = scalar_lea.vmem %s6, %s309
      %s311 = smul.u32 2, %s21
      %p312 = scmp.eq.s32.totalorder %s22, 0
      // Predicated region
      $region45: #{transformer_decoder_forward.7} parent=43 // pred_check
        %p313 = pneg %p312
      $region46: #{transformer_decoder_forward.7} parent=43 // pred_check_branch
        %315 = sbr.rel (%p313) target = $region48
      $region47: #{transformer_decoder_forward.7} parent=43 // pred_region
        %v316 = vld [vmem:[%s293] sm:$0xff]
        %v317 = vld [vmem:[%s293 + $0x8] sm:$0xff]
        %v318 = vld [vmem:[%s293 + $0x10] sm:$0xff]
        %v319 = vld [vmem:[%s293 + $0x18] sm:$0xff]
        %v320 = vld [vmem:[%s5] sm:$0x1]
        %v322 = vlaneseq
        %v323 = vshrl.u32 %v322, 7
        %v324 = vsub.s32 0, %v323
        %v325 = vrot.slane %v320, %v324
        %v327 = vadd.f32 %v316, %v325
        %v328 = vadd.f32 %v317, %v325
        %v329 = vadd.f32 %v318, %v325
        %v330 = vadd.f32 %v319, %v325
        %331 = vst [vmem:[%s310] sm:$0xff] %v327
        %332 = vst [vmem:[%s310 + $0x8] sm:$0xff] %v328
        %333 = vst [vmem:[%s310 + $0x10] sm:$0xff] %v329
        %334 = vst [vmem:[%s310 + $0x18] sm:$0xff] %v330
        %v335 = vld [vmem:[%s1] sm:$0x1]
        %v336 = vld [vmem:[%s2] sm:$0x1]
        %337 = vadd.xlane.f32.xlu0 %v316
        %v338 = vpop.xlane.xlu0 %337
        %339 = vadd.xlane.f32.xlu0 %v317
        %v340 = vpop.xlane.xlu0 %339
        %341 = vadd.xlane.f32.xlu0 %v318
        %v342 = vpop.xlane.xlu0 %341
        %343 = vadd.xlane.f32.xlu0 %v319
        %v344 = vpop.xlane.xlu0 %343
        %v345 = vrcp.pop 128.0
        %v346 = vmul.f32 %v338, %v345
        %v347 = vmul.f32 %v340, %v345
        %v348 = vmul.f32 %v342, %v345
        %v349 = vmul.f32 %v344, %v345
        %v350 = vsub.f32 %v316, %v346
        %v351 = vsub.f32 %v317, %v347
        %v352 = vsub.f32 %v318, %v348
        %v353 = vsub.f32 %v319, %v349
        %v354 = vmul.f32 %v350, %v350
        %v355 = vmul.f32 %v351, %v351
        %v356 = vmul.f32 %v352, %v352
        %v357 = vmul.f32 %v353, %v353
        %358 = vadd.xlane.f32.xlu0 %v354
        %v359 = vpop.xlane.xlu0 %358
        %360 = vadd.xlane.f32.xlu0 %v355
        %v361 = vpop.xlane.xlu0 %360
        %362 = vadd.xlane.f32.xlu0 %v356
        %v363 = vpop.xlane.xlu0 %362
        %364 = vadd.xlane.f32.xlu0 %v357
        %v365 = vpop.xlane.xlu0 %364
        %v366 = vmul.f32 %v359, %v345
        %v367 = vmul.f32 %v361, %v345
        %v368 = vmul.f32 %v363, %v345
        %v369 = vmul.f32 %v365, %v345
        %v370 = vadd.f32 %v366, 1e-05
        %v371 = vadd.f32 %v367, 1e-05
        %v372 = vadd.f32 %v368, 1e-05
        %v373 = vadd.f32 %v369, 1e-05
        %v374 = vrsqrt.pop %v370
        %v375 = vrsqrt.pop %v371
        %v376 = vrsqrt.pop %v372
        %v377 = vrsqrt.pop %v373
        %v378 = vmul.f32 %v350, %v374
        %v379 = vmul.f32 %v351, %v375
        %v380 = vmul.f32 %v352, %v376
        %v381 = vmul.f32 %v353, %v377
        %v383 = vlaneseq
        %v384 = vshrl.u32 %v383, 7
        %v385 = vsub.s32 0, %v384
        %v386 = vrot.slane %v335, %v385
        %v388 = vmul.f32 %v378, %v386
        %v389 = vmul.f32 %v379, %v386
        %v390 = vmul.f32 %v380, %v386
        %v391 = vmul.f32 %v381, %v386
        %v393 = vlaneseq
        %v394 = vshrl.u32 %v393, 7
        %v395 = vsub.s32 0, %v394
        %v396 = vrot.slane %v336, %v395
        %v398 = vadd.f32 %v388, %v396
        %v399 = vadd.f32 %v389, %v396
        %v400 = vadd.f32 %v390, %v396
        %v401 = vadd.f32 %v391, %v396
        %402 = vst [vmem:[#allocation2] sm:$0xff] %v398
        %403 = vst [vmem:[#allocation2 + $0x8] sm:$0xff] %v399
        %404 = vst [vmem:[#allocation2 + $0x10] sm:$0xff] %v400
        %405 = vst [vmem:[#allocation2 + $0x18] sm:$0xff] %v401
      $region48: #{transformer_decoder_forward.7} parent=43 // pred_fallthru
        _
      %v406 = vld [vmem:[#allocation2] sm:$0xff]
      %v407 = vld [vmem:[#allocation2 + $0x8] sm:$0xff]
      %v408 = vld [vmem:[#allocation2 + $0x10] sm:$0xff]
      %v409 = vld [vmem:[#allocation2 + $0x18] sm:$0xff]
      %v410 = vld [vmem:[%s299] sm:$0xff]
      %v411 = vld [vmem:[%s299 + $0x8] sm:$0xff]
      %v412 = vld [vmem:[%s299 + $0x10] sm:$0xff]
      %v413 = vld [vmem:[%s299 + $0x18] sm:$0xff]
      %v414 = vld [vmem:[%s299 + $0x20] sm:$0xff]
      %v415 = vld [vmem:[%s299 + $0x28] sm:$0xff]
      %v416 = vld [vmem:[%s299 + $0x30] sm:$0xff]
      %v417 = vld [vmem:[%s299 + $0x38] sm:$0xff]
      %v418 = vld [vmem:[%s299 + $0x40] sm:$0xff]
      %v419 = vld [vmem:[%s299 + $0x48] sm:$0xff]
      %v420 = vld [vmem:[%s299 + $0x50] sm:$0xff]
      %v421 = vld [vmem:[%s299 + $0x58] sm:$0xff]
      %v422 = vld [vmem:[%s299 + $0x60] sm:$0xff]
      %v423 = vld [vmem:[%s299 + $0x68] sm:$0xff]
      %v424 = vld [vmem:[%s299 + $0x70] sm:$0xff]
      %v425 = vld [vmem:[%s299 + $0x78] sm:$0xff]
      %v426 = vld [vmem:[%s299 + $0x80] sm:$0xff]
      %v427 = vld [vmem:[%s299 + $0x88] sm:$0xff]
      %v428 = vld [vmem:[%s299 + $0x90] sm:$0xff]
      %v429 = vld [vmem:[%s299 + $0x98] sm:$0xff]
      %v430 = vld [vmem:[%s299 + $0xa0] sm:$0xff]
      %v431 = vld [vmem:[%s299 + $0xa8] sm:$0xff]
      %v432 = vld [vmem:[%s299 + $0xb0] sm:$0xff]
      %v433 = vld [vmem:[%s299 + $0xb8] sm:$0xff]
      %v434 = vld [vmem:[%s299 + $0xc0] sm:$0xff]
      %v435 = vld [vmem:[%s299 + $0xc8] sm:$0xff]
      %v436 = vld [vmem:[%s299 + $0xd0] sm:$0xff]
      %v437 = vld [vmem:[%s299 + $0xd8] sm:$0xff]
      %v438 = vld [vmem:[%s299 + $0xe0] sm:$0xff]
      %v439 = vld [vmem:[%s299 + $0xe8] sm:$0xff]
      %v440 = vld [vmem:[%s299 + $0xf0] sm:$0xff]
      %v441 = vld [vmem:[%s299 + $0xf8] sm:$0xff]
      %v442 = vld [vmem:[%s299 + $0x100] sm:$0xff]
      %v443 = vld [vmem:[%s299 + $0x108] sm:$0xff]
      %v444 = vld [vmem:[%s299 + $0x110] sm:$0xff]
      %v445 = vld [vmem:[%s299 + $0x118] sm:$0xff]
      %v446 = vld [vmem:[%s299 + $0x120] sm:$0xff]
      %v447 = vld [vmem:[%s299 + $0x128] sm:$0xff]
      %v448 = vld [vmem:[%s299 + $0x130] sm:$0xff]
      %v449 = vld [vmem:[%s299 + $0x138] sm:$0xff]
      %v450 = vld [vmem:[%s299 + $0x140] sm:$0xff]
      %v451 = vld [vmem:[%s299 + $0x148] sm:$0xff]
      %v452 = vld [vmem:[%s299 + $0x150] sm:$0xff]
      %v453 = vld [vmem:[%s299 + $0x158] sm:$0xff]
      %v454 = vld [vmem:[%s299 + $0x160] sm:$0xff]
      %v455 = vld [vmem:[%s299 + $0x168] sm:$0xff]
      %v456 = vld [vmem:[%s299 + $0x170] sm:$0xff]
      %v457 = vld [vmem:[%s299 + $0x178] sm:$0xff]
      %458 = vmatprep.subr.mxu0 %v411
      %459 = vmatpush1.msra.mxu0 %v410
      %460 = vmatprep.subr.mxu0 %v414
      %461 = vmatpush1.msra.mxu0 %v413
      %462 = vmatprep.subr.mxu0 %v417
      %463 = vmatpush1.msra.mxu0 %v416
      %464 = vmatprep.subr.mxu0 %v420
      %465 = vmatpush1.msra.mxu0 %v419
      %466 = vmatprep.subr.mxu0 %v423
      %467 = vmatpush1.msra.mxu0 %v422
      %468 = vmatprep.subr.mxu0 %v426
      %469 = vmatpush1.msra.mxu0 %v425
      %470 = vmatprep.subr.mxu0 %v429
      %471 = vmatpush1.msra.mxu0 %v428
      %472 = vmatprep.subr.mxu0 %v432
      %473 = vmatpush1.msra.mxu0 %v431
      %474 = vmatprep.subr.mxu0 %v435
      %475 = vmatpush1.msra.mxu0 %v434
      %476 = vmatprep.subr.mxu0 %v438
      %477 = vmatpush1.msra.mxu0 %v437
      %478 = vmatprep.subr.mxu0 %v441
      %479 = vmatpush1.msra.mxu0 %v440
      %480 = vmatprep.subr.mxu0 %v444
      %481 = vmatpush1.msra.mxu0 %v443
      %482 = vmatprep.subr.mxu0 %v447
      %483 = vmatpush1.msra.mxu0 %v446
      %484 = vmatprep.subr.mxu0 %v450
      %485 = vmatpush1.msra.mxu0 %v449
      %486 = vmatprep.subr.mxu0 %v453
      %487 = vmatpush1.msra.mxu0 %v452
      %488 = vmatprep.subr.mxu0 %v456
      %489 = vmatpush1.msra.mxu0 %v455
      %490 = vmatprep.subr.mxu0 0.0
      %491 = vmatpush1.msra.mxu0 0.0
      %492 = vmatprep.subr.mxu0 0.0
      %493 = vmatpush1.msra.mxu0 0.0
      %494 = vmatprep.subr.mxu0 0.0
      %495 = vmatpush1.msra.mxu0 0.0
      %496 = vmatprep.subr.mxu0 0.0
      %497 = vmatpush1.msra.mxu0 0.0
      %498 = vmatprep.subr.mxu0 0.0
      %499 = vmatpush1.msra.mxu0 0.0
      %500 = vmatprep.subr.mxu0 0.0
      %501 = vmatpush1.msra.mxu0 0.0
      %502 = vmatprep.subr.mxu0 0.0
      %503 = vmatpush1.msra.mxu0 0.0
      %504 = vmatprep.subr.mxu0 0.0
      %505 = vmatpush1.msra.mxu0 0.0
      %506 = vmatprep.subr.mxu0 0.0
      %507 = vmatpush1.msra.mxu0 0.0
      %508 = vmatprep.subr.mxu0 0.0
      %509 = vmatpush1.msra.mxu0 0.0
      %510 = vmatprep.subr.mxu0 0.0
      %511 = vmatpush1.msra.mxu0 0.0
      %512 = vmatprep.subr.mxu0 0.0
      %513 = vmatpush1.msra.mxu0 0.0
      %514 = vmatprep.subr.mxu0 0.0
      %515 = vmatpush1.msra.mxu0 0.0
      %516 = vmatprep.subr.mxu0 0.0
      %517 = vmatpush1.msra.mxu0 0.0
      %518 = vmatprep.subr.mxu0 0.0
      %519 = vmatpush1.msra.mxu0 0.0
      %520 = vmatprep.subr.mxu0 0.0
      %521 = vmatpush1.msra.mxu0 0.0
      %522 = vmatprep.mubr.f32.mxu0 0.0
      %523 = vmatmul.mubr.f32.gmra.mrb[0].mxu0 %v406
      %v524 = vpop.f32.mrb[0].mxu0
      %v525 = vadd.f32 0.0, %v524
      %v526 = vpop.f32.mrb[0].mxu0
      %v527 = vadd.f32 0.0, %v526
      %528 = vmatprep.mubr.f32.mxu0 0.0
      %529 = vmatmul.mubr.f32.gmra.mrb[0].mxu0 %v407
      %v530 = vpop.f32.mrb[0].mxu0
      %v531 = vadd.f32 0.0, %v530
      %v532 = vpop.f32.mrb[0].mxu0
      %v533 = vadd.f32 0.0, %v532
      %534 = vmatprep.mubr.f32.mxu0 0.0
      %535 = vmatmul.mubr.f32.gmra.mrb[0].mxu0 %v408
      %v536 = vpop.f32.mrb[0].mxu0
      %v537 = vadd.f32 0.0, %v536
      %v538 = vpop.f32.mrb[0].mxu0
      %v539 = vadd.f32 0.0, %v538
      %540 = vmatprep.mubr.f32.mxu0 0.0
      %541 = vmatmul.mubr.f32.gmra.mrb[0].mxu0 %v409
      %v542 = vpop.f32.mrb[0].mxu0
      %v543 = vadd.f32 0.0, %v542
      %v544 = vpop.f32.mrb[0].mxu0
      %v545 = vadd.f32 0.0, %v544
      %546 = vdwg.mxu0
      %547 = vmatprep.subr.mxu0 0.0
      %548 = vmatpush1.msra.mxu0 %v412
      %549 = vmatprep.subr.mxu0 0.0
      %550 = vmatpush1.msra.mxu0 %v415
      %551 = vmatprep.subr.mxu0 0.0
      %552 = vmatpush1.msra.mxu0 %v418
      %553 = vmatprep.subr.mxu0 0.0
      %554 = vmatpush1.msra.mxu0 %v421
      %555 = vmatprep.subr.mxu0 0.0
      %556 = vmatpush1.msra.mxu0 %v424
      %557 = vmatprep.subr.mxu0 0.0
      %558 = vmatpush1.msra.mxu0 %v427
      %559 = vmatprep.subr.mxu0 0.0
      %560 = vmatpush1.msra.mxu0 %v430
      %561 = vmatprep.subr.mxu0 0.0
      %562 = vmatpush1.msra.mxu0 %v433
      %563 = vmatprep.subr.mxu0 0.0
      %564 = vmatpush1.msra.mxu0 %v436
      %565 = vmatprep.subr.mxu0 0.0
      %566 = vmatpush1.msra.mxu0 %v439
      %567 = vmatprep.subr.mxu0 0.0
      %568 = vmatpush1.msra.mxu0 %v442
      %569 = vmatprep.subr.mxu0 0.0
      %570 = vmatpush1.msra.mxu0 %v445
      %571 = vmatprep.subr.mxu0 0.0
      %572 = vmatpush1.msra.mxu0 %v448
      %573 = vmatprep.subr.mxu0 0.0
      %574 = vmatpush1.msra.mxu0 %v451
      %575 = vmatprep.subr.mxu0 0.0
      %576 = vmatpush1.msra.mxu0 %v454
      %577 = vmatprep.subr.mxu0 0.0
      %578 = vmatpush1.msra.mxu0 %v457
      %579 = vmatprep.subr.mxu0 0.0
      %580 = vmatpush1.msra.mxu0 0.0
      %581 = vmatprep.subr.mxu0 0.0
      %582 = vmatpush1.msra.mxu0 0.0
      %583 = vmatprep.subr.mxu0 0.0
      %584 = vmatpush1.msra.mxu0 0.0
      %585 = vmatprep.subr.mxu0 0.0
      %586 = vmatpush1.msra.mxu0 0.0
      %587 = vmatprep.subr.mxu0 0.0
      %588 = vmatpush1.msra.mxu0 0.0
      %589 = vmatprep.subr.mxu0 0.0
      %590 = vmatpush1.msra.mxu0 0.0
      %591 = vmatprep.subr.mxu0 0.0
      %592 = vmatpush1.msra.mxu0 0.0
      %593 = vmatprep.subr.mxu0 0.0
      %594 = vmatpush1.msra.mxu0 0.0
      %595 = vmatprep.subr.mxu0 0.0
      %596 = vmatpush1.msra.mxu0 0.0
      %597 = vmatprep.subr.mxu0 0.0
      %598 = vmatpush1.msra.mxu0 0.0
      %599 = vmatprep.subr.mxu0 0.0
      %600 = vmatpush1.msra.mxu0 0.0
      %601 = vmatprep.subr.mxu0 0.0
      %602 = vmatpush1.msra.mxu0 0.0
      %603 = vmatprep.subr.mxu0 0.0
      %604 = vmatpush1.msra.mxu0 0.0
      %605 = vmatprep.subr.mxu0 0.0
      %606 = vmatpush1.msra.mxu0 0.0
      %607 = vmatprep.subr.mxu0 0.0
      %608 = vmatpush1.msra.mxu0 0.0
      %609 = vmatprep.subr.mxu0 0.0
      %610 = vmatpush1.msra.mxu0 0.0
      %611 = vmatprep.mubr.f32.mxu0 0.0
      %612 = vmatmul.mubr.f32.gmra.mrb[0].mxu0 %v406
      %v613 = vpop.f32.mrb[0].mxu0
      %v614 = vadd.f32 0.0, %v613
      %v615 = vpop.f32.mrb[0].mxu0
      %616 = vmatprep.mubr.f32.mxu0 0.0
      %617 = vmatmul.mubr.f32.gmra.mrb[0].mxu0 %v407
      %v618 = vpop.f32.mrb[0].mxu0
      %v619 = vadd.f32 0.0, %v618
      %v620 = vpop.f32.mrb[0].mxu0
      %621 = vmatprep.mubr.f32.mxu0 0.0
      %622 = vmatmul.mubr.f32.gmra.mrb[0].mxu0 %v408
      %v623 = vpop.f32.mrb[0].mxu0
      %v624 = vadd.f32 0.0, %v623
      %v625 = vpop.f32.mrb[0].mxu0
      %626 = vmatprep.mubr.f32.mxu0 0.0
      %627 = vmatmul.mubr.f32.gmra.mrb[0].mxu0 %v409
      %v628 = vpop.f32.mrb[0].mxu0
      %v629 = vadd.f32 0.0, %v628
      %v630 = vpop.f32.mrb[0].mxu0
      %631 = vdwg.mxu0
      %v632 = vmul.f32 %v525, 0.088388346
      %v633 = vmul.f32 %v531, 0.088388346
      %v634 = vmul.f32 %v537, 0.088388346
      %v635 = vmul.f32 %v543, 0.088388346
      %636 = vmatprep.subr.mxu0 0.0
      %637 = vmatpush1.xpose.msra.mxu0 %v527
      %638 = vmatprep.subr.mxu0 0.0
      %639 = vmatpush1.xpose.msra.mxu0 %v533
      %640 = vmatprep.subr.mxu0 0.0
      %641 = vmatpush1.xpose.msra.mxu0 0.0
      %642 = vmatprep.subr.mxu0 0.0
      %643 = vmatpush1.xpose.msra.mxu0 0.0
      %644 = vmatprep.subr.mxu0 0.0
      %645 = vmatpush1.xpose.msra.mxu0 0.0
      %646 = vmatprep.subr.mxu0 0.0
      %647 = vmatpush1.xpose.msra.mxu0 0.0
      %648 = vmatprep.subr.mxu0 0.0
      %649 = vmatpush1.xpose.msra.mxu0 0.0
      %650 = vmatprep.subr.mxu0 0.0
      %651 = vmatpush1.xpose.msra.mxu0 0.0
      %652 = vmatprep.subr.mxu0 0.0
      %653 = vmatpush1.xpose.msra.mxu0 0.0
      %654 = vmatprep.subr.mxu0 0.0
      %655 = vmatpush1.xpose.msra.mxu0 0.0
      %656 = vmatprep.subr.mxu0 0.0
      %657 = vmatpush1.xpose.msra.mxu0 0.0
      %658 = vmatprep.subr.mxu0 0.0
      %659 = vmatpush1.xpose.msra.mxu0 0.0
      %660 = vmatprep.subr.mxu0 0.0
      %661 = vmatpush1.xpose.msra.mxu0 0.0
      %662 = vmatprep.subr.mxu0 0.0
      %663 = vmatpush1.xpose.msra.mxu0 0.0
      %664 = vmatprep.subr.mxu0 0.0
      %665 = vmatpush1.xpose.msra.mxu0 0.0
      %666 = vmatprep.subr.mxu0 0.0
      %667 = vmatpush1.xpose.msra.mxu0 0.0
      %668 = vmatprep.subr.mxu0 0.0
      %669 = vmatpush1.xpose.msra.mxu0 0.0
      %670 = vmatprep.subr.mxu0 0.0
      %671 = vmatpush1.xpose.msra.mxu0 0.0
      %672 = vmatprep.subr.mxu0 0.0
      %673 = vmatpush1.xpose.msra.mxu0 0.0
      %674 = vmatprep.subr.mxu0 0.0
      %675 = vmatpush1.xpose.msra.mxu0 0.0
      %676 = vmatprep.subr.mxu0 0.0
      %677 = vmatpush1.xpose.msra.mxu0 0.0
      %678 = vmatprep.subr.mxu0 0.0
      %679 = vmatpush1.xpose.msra.mxu0 0.0
      %680 = vmatprep.subr.mxu0 0.0
      %681 = vmatpush1.xpose.msra.mxu0 0.0
      %682 = vmatprep.subr.mxu0 0.0
      %683 = vmatpush1.xpose.msra.mxu0 0.0
      %684 = vmatprep.subr.mxu0 0.0
      %685 = vmatpush1.xpose.msra.mxu0 0.0
      %686 = vmatprep.subr.mxu0 0.0
      %687 = vmatpush1.xpose.msra.mxu0 0.0
      %688 = vmatprep.subr.mxu0 0.0
      %689 = vmatpush1.xpose.msra.mxu0 0.0
      %690 = vmatprep.subr.mxu0 0.0
      %691 = vmatpush1.xpose.msra.mxu0 0.0
      %692 = vmatprep.subr.mxu0 0.0
      %693 = vmatpush1.xpose.msra.mxu0 0.0
      %694 = vmatprep.subr.mxu0 0.0
      %695 = vmatpush1.xpose.msra.mxu0 0.0
      %696 = vmatprep.subr.mxu0 0.0
      %697 = vmatpush1.xpose.msra.mxu0 0.0
      %698 = vmatprep.subr.mxu0 0.0
      %699 = vmatpush1.xpose.msra.mxu0 0.0
      %700 = vmatprep.mubr.f32.mxu0 0.0
      %701 = vmatmul.mubr.f32.gmra.mrb[0].mxu0 %v632
      %v702 = vpop.f32.mrb[0].mxu0
      %v703 = vadd.f32 0.0, %v702
      %v704 = vpop.f32.mrb[0].mxu0
      %705 = vmatprep.mubr.f32.mxu0 0.0
      %706 = vmatmul.mubr.f32.gmra.mrb[0].mxu0 %v633
      %v707 = vpop.f32.mrb[0].mxu0
      %v708 = vadd.f32 0.0, %v707
      %v709 = vpop.f32.mrb[0].mxu0
      %710 = vdwg.mxu0
      %711 = vmatprep.subr.mxu0 0.0
      %712 = vmatpush1.xpose.msra.mxu0 %v539
      %713 = vmatprep.subr.mxu0 0.0
      %714 = vmatpush1.xpose.msra.mxu0 %v545
      %715 = vmatprep.subr.mxu0 0.0
      %716 = vmatpush1.xpose.msra.mxu0 0.0
      %717 = vmatprep.subr.mxu0 0.0
      %718 = vmatpush1.xpose.msra.mxu0 0.0
      %719 = vmatprep.subr.mxu0 0.0
      %720 = vmatpush1.xpose.msra.mxu0 0.0
      %721 = vmatprep.subr.mxu0 0.0
      %722 = vmatpush1.xpose.msra.mxu0 0.0
      %723 = vmatprep.subr.mxu0 0.0
      %724 = vmatpush1.xpose.msra.mxu0 0.0
      %725 = vmatprep.subr.mxu0 0.0
      %726 = vmatpush1.xpose.msra.mxu0 0.0
      %727 = vmatprep.subr.mxu0 0.0
      %728 = vmatpush1.xpose.msra.mxu0 0.0
      %729 = vmatprep.subr.mxu0 0.0
      %730 = vmatpush1.xpose.msra.mxu0 0.0
      %731 = vmatprep.subr.mxu0 0.0
      %732 = vmatpush1.xpose.msra.mxu0 0.0
      %733 = vmatprep.subr.mxu0 0.0
      %734 = vmatpush1.xpose.msra.mxu0 0.0
      %735 = vmatprep.subr.mxu0 0.0
      %736 = vmatpush1.xpose.msra.mxu0 0.0
      %737 = vmatprep.subr.mxu0 0.0
      %738 = vmatpush1.xpose.msra.mxu0 0.0
      %739 = vmatprep.subr.mxu0 0.0
      %740 = vmatpush1.xpose.msra.mxu0 0.0
      %741 = vmatprep.subr.mxu0 0.0
      %742 = vmatpush1.xpose.msra.mxu0 0.0
      %743 = vmatprep.subr.mxu0 0.0
      %744 = vmatpush1.xpose.msra.mxu0 0.0
      %745 = vmatprep.subr.mxu0 0.0
      %746 = vmatpush1.xpose.msra.mxu0 0.0
      %747 = vmatprep.subr.mxu0 0.0
      %748 = vmatpush1.xpose.msra.mxu0 0.0
      %749 = vmatprep.subr.mxu0 0.0
      %750 = vmatpush1.xpose.msra.mxu0 0.0
      %751 = vmatprep.subr.mxu0 0.0
      %752 = vmatpush1.xpose.msra.mxu0 0.0
      %753 = vmatprep.subr.mxu0 0.0
      %754 = vmatpush1.xpose.msra.mxu0 0.0
      %755 = vmatprep.subr.mxu0 0.0
      %756 = vmatpush1.xpose.msra.mxu0 0.0
      %757 = vmatprep.subr.mxu0 0.0
      %758 = vmatpush1.xpose.msra.mxu0 0.0
      %759 = vmatprep.subr.mxu0 0.0
      %760 = vmatpush1.xpose.msra.mxu0 0.0
      %761 = vmatprep.subr.mxu0 0.0
      %762 = vmatpush1.xpose.msra.mxu0 0.0
      %763 = vmatprep.subr.mxu0 0.0
      %764 = vmatpush1.xpose.msra.mxu0 0.0
      %765 = vmatprep.subr.mxu0 0.0
      %766 = vmatpush1.xpose.msra.mxu0 0.0
      %767 = vmatprep.subr.mxu0 0.0
      %768 = vmatpush1.xpose.msra.mxu0 0.0
      %769 = vmatprep.subr.mxu0 0.0
      %770 = vmatpush1.xpose.msra.mxu0 0.0
      %771 = vmatprep.subr.mxu0 0.0
      %772 = vmatpush1.xpose.msra.mxu0 0.0
      %773 = vmatprep.subr.mxu0 0.0
      %774 = vmatpush1.xpose.msra.mxu0 0.0
      %775 = vmatprep.mubr.f32.mxu0 0.0
      %776 = vmatmul.mubr.f32.gmra.mrb[0].mxu0 %v634
      %v777 = vpop.f32.mrb[0].mxu0
      %v778 = vadd.f32 0.0, %v777
      %v779 = vpop.f32.mrb[0].mxu0
      %780 = vmatprep.mubr.f32.mxu0 0.0
      %781 = vmatmul.mubr.f32.gmra.mrb[0].mxu0 %v635
      %v782 = vpop.f32.mrb[0].mxu0
      %v783 = vadd.f32 0.0, %v782
      %v784 = vpop.f32.mrb[0].mxu0
      %785 = vdwg.mxu0
      %vm786 = vcmask 130048
      %v787 = vsel %vm786, %v703, -inf
      %788 = vmax.xlane.f32.xlu0 %v787
      %v789 = vpop.xlane.xlu0 %788
      %v790 = vsel %vm786, %v708, -inf
      %791 = vmax.xlane.f32.xlu0 %v790
      %v792 = vpop.xlane.xlu0 %791
      %v793 = vsel %vm786, %v778, -inf
      %794 = vmax.xlane.f32.xlu0 %v793
      %v795 = vpop.xlane.xlu0 %794
      %v796 = vsel %vm786, %v783, -inf
      %797 = vmax.xlane.f32.xlu0 %v796
      %v798 = vpop.xlane.xlu0 %797
      %v799 = vsub.f32 %v703, %v789
      %v800 = vsub.f32 %v708, %v792
      %v801 = vsub.f32 %v778, %v795
      %v802 = vsub.f32 %v783, %v798
      %v803 = vmul.f32 %v799, 1.442695
      %v804 = vpow.pop %v803
      %v805 = vmul.f32 %v800, 1.442695
      %v806 = vpow.pop %v805
      %v807 = vmul.f32 %v801, 1.442695
      %v808 = vpow.pop %v807
      %v809 = vmul.f32 %v802, 1.442695
      %v810 = vpow.pop %v809
      %v811 = vsel %vm786, %v804, 0.0
      %812 = vadd.xlane.f32.xlu0 %v811
      %v813 = vpop.xlane.xlu0 %812
      %v814 = vsel %vm786, %v806, 0.0
      %815 = vadd.xlane.f32.xlu0 %v814
      %v816 = vpop.xlane.xlu0 %815
      %v817 = vsel %vm786, %v808, 0.0
      %818 = vadd.xlane.f32.xlu0 %v817
      %v819 = vpop.xlane.xlu0 %818
      %v820 = vsel %vm786, %v810, 0.0
      %821 = vadd.xlane.f32.xlu0 %v820
      %v822 = vpop.xlane.xlu0 %821
      %v823 = vrcp.pop %v813
      %v824 = vrcp.pop %v816
      %v825 = vrcp.pop %v819
      %v826 = vrcp.pop %v822
      %v827 = vmul.f32 %v804, %v823
      %v828 = vmul.f32 %v806, %v824
      %v829 = vmul.f32 %v808, %v825
      %v830 = vmul.f32 %v810, %v826
      %v832 = vsel %vm786, %v827, 0
      %v835 = vsel %vm786, %v828, 0
      %837 = vmatprep.subr.mxu0 0.0
      %838 = vmatpush1.msra.mxu0 %v614
      %839 = vmatprep.subr.mxu0 0.0
      %840 = vmatpush1.msra.mxu0 %v619
      %841 = vmatprep.subr.mxu0 0.0
      %842 = vmatpush1.msra.mxu0 0.0
      %843 = vmatprep.subr.mxu0 0.0
      %844 = vmatpush1.msra.mxu0 0.0
      %845 = vmatprep.subr.mxu0 0.0
      %846 = vmatpush1.msra.mxu0 0.0
      %847 = vmatprep.subr.mxu0 0.0
      %848 = vmatpush1.msra.mxu0 0.0
      %849 = vmatprep.subr.mxu0 0.0
      %850 = vmatpush1.msra.mxu0 0.0
      %851 = vmatprep.subr.mxu0 0.0
      %852 = vmatpush1.msra.mxu0 0.0
      %853 = vmatprep.subr.mxu0 0.0
      %854 = vmatpush1.msra.mxu0 0.0
      %855 = vmatprep.subr.mxu0 0.0
      %856 = vmatpush1.msra.mxu0 0.0
      %857 = vmatprep.subr.mxu0 0.0
      %858 = vmatpush1.msra.mxu0 0.0
      %859 = vmatprep.subr.mxu0 0.0
      %860 = vmatpush1.msra.mxu0 0.0
      %861 = vmatprep.subr.mxu0 0.0
      %862 = vmatpush1.msra.mxu0 0.0
      %863 = vmatprep.subr.mxu0 0.0
      %864 = vmatpush1.msra.mxu0 0.0
      %865 = vmatprep.subr.mxu0 0.0
      %866 = vmatpush1.msra.mxu0 0.0
      %867 = vmatprep.subr.mxu0 0.0
      %868 = vmatpush1.msra.mxu0 0.0
      %869 = vmatprep.subr.mxu0 0.0
      %870 = vmatpush1.msra.mxu0 0.0
      %871 = vmatprep.subr.mxu0 0.0
      %872 = vmatpush1.msra.mxu0 0.0
      %873 = vmatprep.subr.mxu0 0.0
      %874 = vmatpush1.msra.mxu0 0.0
      %875 = vmatprep.subr.mxu0 0.0
      %876 = vmatpush1.msra.mxu0 0.0
      %877 = vmatprep.subr.mxu0 0.0
      %878 = vmatpush1.msra.mxu0 0.0
      %879 = vmatprep.subr.mxu0 0.0
      %880 = vmatpush1.msra.mxu0 0.0
      %881 = vmatprep.subr.mxu0 0.0
      %882 = vmatpush1.msra.mxu0 0.0
      %883 = vmatprep.subr.mxu0 0.0
      %884 = vmatpush1.msra.mxu0 0.0
      %885 = vmatprep.subr.mxu0 0.0
      %886 = vmatpush1.msra.mxu0 0.0
      %887 = vmatprep.subr.mxu0 0.0
      %888 = vmatpush1.msra.mxu0 0.0
      %889 = vmatprep.subr.mxu0 0.0
      %890 = vmatpush1.msra.mxu0 0.0
      %891 = vmatprep.subr.mxu0 0.0
      %892 = vmatpush1.msra.mxu0 0.0
      %893 = vmatprep.subr.mxu0 0.0
      %894 = vmatpush1.msra.mxu0 0.0
      %895 = vmatprep.subr.mxu0 0.0
      %896 = vmatpush1.msra.mxu0 0.0
      %897 = vmatprep.subr.mxu0 0.0
      %898 = vmatpush1.msra.mxu0 0.0
      %899 = vmatprep.subr.mxu0 0.0
      %900 = vmatpush1.msra.mxu0 0.0
      %901 = vmatprep.mubr.f32.mxu0 0.0
      %902 = vmatmul.mubr.f32.gmra.mrb[0].mxu0 %v832
      %v903 = vpop.f32.mrb[0].mxu0
      %v904 = vadd.f32 0.0, %v903
      %v905 = vpop.f32.mrb[0].mxu0
      %906 = vmatprep.mubr.f32.mxu0 0.0
      %907 = vmatmul.mubr.f32.gmra.mrb[0].mxu0 %v835
      %v908 = vpop.f32.mrb[0].mxu0
      %v909 = vadd.f32 0.0, %v908
      %v910 = vpop.f32.mrb[0].mxu0
      %911 = vdwg.mxu0
      %v913 = vsel %vm786, %v829, 0
      %v916 = vsel %vm786, %v830, 0
      %918 = vmatprep.subr.mxu0 0.0
      %919 = vmatpush1.msra.mxu0 %v624
      %920 = vmatprep.subr.mxu0 0.0
      %921 = vmatpush1.msra.mxu0 %v629
      %922 = vmatprep.subr.mxu0 0.0
      %923 = vmatpush1.msra.mxu0 0.0
      %924 = vmatprep.subr.mxu0 0.0
      %925 = vmatpush1.msra.mxu0 0.0
      %926 = vmatprep.subr.mxu0 0.0
      %927 = vmatpush1.msra.mxu0 0.0
      %928 = vmatprep.subr.mxu0 0.0
      %929 = vmatpush1.msra.mxu0 0.0
      %930 = vmatprep.subr.mxu0 0.0
      %931 = vmatpush1.msra.mxu0 0.0
      %932 = vmatprep.subr.mxu0 0.0
      %933 = vmatpush1.msra.mxu0 0.0
      %934 = vmatprep.subr.mxu0 0.0
      %935 = vmatpush1.msra.mxu0 0.0
      %936 = vmatprep.subr.mxu0 0.0
      %937 = vmatpush1.msra.mxu0 0.0
      %938 = vmatprep.subr.mxu0 0.0
      %939 = vmatpush1.msra.mxu0 0.0
      %940 = vmatprep.subr.mxu0 0.0
      %941 = vmatpush1.msra.mxu0 0.0
      %942 = vmatprep.subr.mxu0 0.0
      %943 = vmatpush1.msra.mxu0 0.0
      %944 = vmatprep.subr.mxu0 0.0
      %945 = vmatpush1.msra.mxu0 0.0
      %946 = vmatprep.subr.mxu0 0.0
      %947 = vmatpush1.msra.mxu0 0.0
      %948 = vmatprep.subr.mxu0 0.0
      %949 = vmatpush1.msra.mxu0 0.0
      %950 = vmatprep.subr.mxu0 0.0
      %951 = vmatpush1.msra.mxu0 0.0
      %952 = vmatprep.subr.mxu0 0.0
      %953 = vmatpush1.msra.mxu0 0.0
      %954 = vmatprep.subr.mxu0 0.0
      %955 = vmatpush1.msra.mxu0 0.0
      %956 = vmatprep.subr.mxu0 0.0
      %957 = vmatpush1.msra.mxu0 0.0
      %958 = vmatprep.subr.mxu0 0.0
      %959 = vmatpush1.msra.mxu0 0.0
      %960 = vmatprep.subr.mxu0 0.0
      %961 = vmatpush1.msra.mxu0 0.0
      %962 = vmatprep.subr.mxu0 0.0
      %963 = vmatpush1.msra.mxu0 0.0
      %964 = vmatprep.subr.mxu0 0.0
      %965 = vmatpush1.msra.mxu0 0.0
      %966 = vmatprep.subr.mxu0 0.0
      %967 = vmatpush1.msra.mxu0 0.0
      %968 = vmatprep.subr.mxu0 0.0
      %969 = vmatpush1.msra.mxu0 0.0
      %970 = vmatprep.subr.mxu0 0.0
      %971 = vmatpush1.msra.mxu0 0.0
      %972 = vmatprep.subr.mxu0 0.0
      %973 = vmatpush1.msra.mxu0 0.0
      %974 = vmatprep.subr.mxu0 0.0
      %975 = vmatpush1.msra.mxu0 0.0
      %976 = vmatprep.subr.mxu0 0.0
      %977 = vmatpush1.msra.mxu0 0.0
      %978 = vmatprep.subr.mxu0 0.0
      %979 = vmatpush1.msra.mxu0 0.0
      %980 = vmatprep.subr.mxu0 0.0
      %981 = vmatpush1.msra.mxu0 0.0
      %982 = vmatprep.mubr.f32.mxu0 0.0
      %983 = vmatmul.mubr.f32.gmra.mrb[0].mxu0 %v913
      %v984 = vpop.f32.mrb[0].mxu0
      %v985 = vadd.f32 0.0, %v984
      %v986 = vpop.f32.mrb[0].mxu0
      %987 = vmatprep.mubr.f32.mxu0 0.0
      %988 = vmatmul.mubr.f32.gmra.mrb[0].mxu0 %v916
      %v989 = vpop.f32.mrb[0].mxu0
      %v990 = vadd.f32 0.0, %v989
      %v991 = vpop.f32.mrb[0].mxu0
      %992 = vdwg.mxu0
      %v993 = vld [vmem:[%s304] sm:$0xff]
      %v994 = vld [vmem:[%s304 + $0x8] sm:$0xff]
      %v995 = vld [vmem:[%s304 + $0x10] sm:$0xff]
      %v996 = vld [vmem:[%s304 + $0x18] sm:$0xff]
      %v997 = vld [vmem:[%s304 + $0x20] sm:$0xff]
      %v998 = vld [vmem:[%s304 + $0x28] sm:$0xff]
      %v999 = vld [vmem:[%s304 + $0x30] sm:$0xff]
      %v1000 = vld [vmem:[%s304 + $0x38] sm:$0xff]
      %v1001 = vld [vmem:[%s304 + $0x40] sm:$0xff]
      %v1002 = vld [vmem:[%s304 + $0x48] sm:$0xff]
      %v1003 = vld [vmem:[%s304 + $0x50] sm:$0xff]
      %v1004 = vld [vmem:[%s304 + $0x58] sm:$0xff]
      %v1005 = vld [vmem:[%s304 + $0x60] sm:$0xff]
      %v1006 = vld [vmem:[%s304 + $0x68] sm:$0xff]
      %v1007 = vld [vmem:[%s304 + $0x70] sm:$0xff]
      %v1008 = vld [vmem:[%s304 + $0x78] sm:$0xff]
      %1009 = vmatprep.subr.mxu0 0.0
      %1010 = vmatpush1.msra.mxu0 %v993
      %1011 = vmatprep.subr.mxu0 0.0
      %1012 = vmatpush1.msra.mxu0 %v994
      %1013 = vmatprep.subr.mxu0 0.0
      %1014 = vmatpush1.msra.mxu0 %v995
      %1015 = vmatprep.subr.mxu0 0.0
      %1016 = vmatpush1.msra.mxu0 %v996
      %1017 = vmatprep.subr.mxu0 0.0
      %1018 = vmatpush1.msra.mxu0 %v997
      %1019 = vmatprep.subr.mxu0 0.0
      %1020 = vmatpush1.msra.mxu0 %v998
      %1021 = vmatprep.subr.mxu0 0.0
      %1022 = vmatpush1.msra.mxu0 %v999
      %1023 = vmatprep.subr.mxu0 0.0
      %1024 = vmatpush1.msra.mxu0 %v1000
      %1025 = vmatprep.subr.mxu0 0.0
      %1026 = vmatpush1.msra.mxu0 %v1001
      %1027 = vmatprep.subr.mxu0 0.0
      %1028 = vmatpush1.msra.mxu0 %v1002
      %1029 = vmatprep.subr.mxu0 0.0
      %1030 = vmatpush1.msra.mxu0 %v1003
      %1031 = vmatprep.subr.mxu0 0.0
      %1032 = vmatpush1.msra.mxu0 %v1004
      %1033 = vmatprep.subr.mxu0 0.0
      %1034 = vmatpush1.msra.mxu0 %v1005
      %1035 = vmatprep.subr.mxu0 0.0
      %1036 = vmatpush1.msra.mxu0 %v1006
      %1037 = vmatprep.subr.mxu0 0.0
      %1038 = vmatpush1.msra.mxu0 %v1007
      %1039 = vmatprep.subr.mxu0 0.0
      %1040 = vmatpush1.msra.mxu0 %v1008
      %1041 = vmatprep.subr.mxu0 0.0
      %1042 = vmatpush1.msra.mxu0 0.0
      %1043 = vmatprep.subr.mxu0 0.0
      %1044 = vmatpush1.msra.mxu0 0.0
      %1045 = vmatprep.subr.mxu0 0.0
      %1046 = vmatpush1.msra.mxu0 0.0
      %1047 = vmatprep.subr.mxu0 0.0
      %1048 = vmatpush1.msra.mxu0 0.0
      %1049 = vmatprep.subr.mxu0 0.0
      %1050 = vmatpush1.msra.mxu0 0.0
      %1051 = vmatprep.subr.mxu0 0.0
      %1052 = vmatpush1.msra.mxu0 0.0
      %1053 = vmatprep.subr.mxu0 0.0
      %1054 = vmatpush1.msra.mxu0 0.0
      %1055 = vmatprep.subr.mxu0 0.0
      %1056 = vmatpush1.msra.mxu0 0.0
      %1057 = vmatprep.subr.mxu0 0.0
      %1058 = vmatpush1.msra.mxu0 0.0
      %1059 = vmatprep.subr.mxu0 0.0
      %1060 = vmatpush1.msra.mxu0 0.0
      %1061 = vmatprep.subr.mxu0 0.0
      %1062 = vmatpush1.msra.mxu0 0.0
      %1063 = vmatprep.subr.mxu0 0.0
      %1064 = vmatpush1.msra.mxu0 0.0
      %1065 = vmatprep.subr.mxu0 0.0
      %1066 = vmatpush1.msra.mxu0 0.0
      %1067 = vmatprep.subr.mxu0 0.0
      %1068 = vmatpush1.msra.mxu0 0.0
      %1069 = vmatprep.subr.mxu0 0.0
      %1070 = vmatpush1.msra.mxu0 0.0
      %1071 = vmatprep.subr.mxu0 0.0
      %1072 = vmatpush1.msra.mxu0 0.0
      %1073 = vmatprep.mubr.f32.mxu0 0.0
      %1074 = vmatmul.mubr.f32.gmra.mrb[0].mxu0 %v904
      %v1075 = vpop.f32.mrb[0].mxu0
      %v1076 = vadd.f32 0.0, %v1075
      %v1077 = vpop.f32.mrb[0].mxu0
      %1078 = vmatprep.mubr.f32.mxu0 0.0
      %1079 = vmatmul.mubr.f32.gmra.mrb[0].mxu0 %v909
      %v1080 = vpop.f32.mrb[0].mxu0
      %v1081 = vadd.f32 0.0, %v1080
      %v1082 = vpop.f32.mrb[0].mxu0
      %1083 = vmatprep.mubr.f32.mxu0 0.0
      %1084 = vmatmul.mubr.f32.gmra.mrb[0].mxu0 %v985
      %v1085 = vpop.f32.mrb[0].mxu0
      %v1086 = vadd.f32 0.0, %v1085
      %v1087 = vpop.f32.mrb[0].mxu0
      %1088 = vmatprep.mubr.f32.mxu0 0.0
      %1089 = vmatmul.mubr.f32.gmra.mrb[0].mxu0 %v990
      %v1090 = vpop.f32.mrb[0].mxu0
      %v1091 = vadd.f32 0.0, %v1090
      %v1092 = vpop.f32.mrb[0].mxu0
      %1093 = vdwg.mxu0
      %v1094 = vld [vmem:[%s310] sm:$0xff]
      %v1095 = vld [vmem:[%s310 + $0x8] sm:$0xff]
      %v1096 = vld [vmem:[%s310 + $0x10] sm:$0xff]
      %v1097 = vld [vmem:[%s310 + $0x18] sm:$0xff]
      %v1098 = vadd.f32 %v1094, %v1076
      %v1099 = vadd.f32 %v1095, %v1081
      %v1100 = vadd.f32 %v1096, %v1086
      %v1101 = vadd.f32 %v1097, %v1091
      %1102 = vst [vmem:[%s310] sm:$0xff] %v1098
      %1103 = vst [vmem:[%s310 + $0x8] sm:$0xff] %v1099
      %1104 = vst [vmem:[%s310 + $0x10] sm:$0xff] %v1100
      %1105 = vst [vmem:[%s310 + $0x18] sm:$0xff] %v1101
      %s1106 = smul.u32 2, %s21
      %p1107 = scmp.lt.s32.totalorder %s1106, 1
      %s1108 = scalar_select %p1107, %s1106, 1
      %s1109 = smul.addr %s1108, 2
      %s1110 = smul.addr %s1109, 8
      %s1111 = scalar_lea.vmem %s6, %s1110
      // Predicated region
      $region49: #{transformer_decoder_forward.7} parent=43 // pred_check
        %p1112 = pneg %p188
      $region50: #{transformer_decoder_forward.7} parent=43 // pred_check_branch
        %1114 = sbr.rel (%p1112) target = $region52
      $region51: #{transformer_decoder_forward.7} parent=43 // pred_region
        %s1115 = smul.u32 2, %s21
      $region52: #{transformer_decoder_forward.7} parent=43 // pred_fallthru
        _
      // Predicated region
      $region53: #{transformer_decoder_forward.7} parent=43 // pred_check
        %p1116 = pneg %p188
      $region54: #{transformer_decoder_forward.7} parent=43 // pred_check_branch
        %1118 = sbr.rel (%p1116) target = $region56
      $region55: #{transformer_decoder_forward.7} parent=43 // pred_region
        %s1119 = smul.u32 2, %s21
        %p1120 = scmp.lt.s32.totalorder %s1119, 1
        %s1121 = scalar_select %p1120, %s1119, 1
        %s1122 = smul.addr %s1121, 2
        %s1123 = smul.addr %s1122, 8
        %s1124 = scalar_lea.vmem %s6, %s1123
      $region56: #{transformer_decoder_forward.7} parent=43 // pred_fallthru
        _
    $region44: #{transformer_decoder_forward.7} parent=5 // pred_fallthru
      _
    %p1125 = scmp.le.s32.totalorder 2, %s12
    // Predicated region
    $region57: #{transformer_decoder_forward.7} parent=5 // pred_check
      %p1126 = pneg %p1125
    $region58: #{transformer_decoder_forward.7} parent=5 // pred_check_branch
      %1128 = sbr.rel (%p1126) target = $region60
    $region59: #{transformer_decoder_forward.7} parent=5 // pred_region
      %s1129 = ssub.s32 %s12, 2
    $region60: #{transformer_decoder_forward.7} parent=5 // pred_fallthru
      _
  $region6: #{transformer_decoder_forward.7} parent=0 // loop_footer
    %s16 = sadd.s32 1, %s12
  $region7: #{transformer_decoder_forward.7} parent=0 // loop_footer_branch
    %11 = sbr.rel target = $region3
  $region8: #{transformer_decoder_forward.7} parent=0 // loop_exit
    _

</llo_original>
